<compile_context>
chip_gen: v5e
topology: v5e:2x2
jax: 0.10.0
libtpu: 0.0.40
codegen_flags: <defaults>
</compile_context>

<pallas_src>
import functools

import jax
import jax.numpy as jnp
import numpy as np
from jax import lax
from jax.experimental import pallas as pl
from jax.experimental.pallas import tpu as pltpu

EPS = 1e-5
LANES = 128


def _round_up(x, m):
    return ((x + m - 1) // m) * m


def _vmem_limit_bytes():
    """Per-generation VMEM request: ~85% of capacity, capped at 112 MiB.
    v7x (64 MiB) -> ~54 MiB; v5e/v6e (128 MiB) -> ~108 MiB."""
    cap = 128 * 1024 * 1024
    try:
        cap = int(pltpu.get_tpu_info().vmem_capacity_bytes)
    except Exception:
        pass
    return int(min(cap * 0.85, 112 * 1024 * 1024))


def _pick_row_tile(H, W, cpi, cpo, w_itemsize, vmem_limit):
    """Largest even divisor of H whose working set fits ~half the VMEM budget."""
    budget = 0.5 * vmem_limit
    for th in range(H, 1, -2):
        if H % th:
            continue
        need = (2 * (th + 6) * (W + 2) * cpi * w_itemsize      # double-buffered input band
                + (2 * th + 6) * (W + 2) * cpo * w_itemsize    # p2 + p3 scratch
                + 2 * (th // 2) * (W // 2) * cpo * 8           # double-buffered outputs
                + (9 * cpi + 18 * cpo) * cpo * w_itemsize      # weights
                + 3 * (th + 4) * W * cpo * 4)                  # live f32 values
        if need <= budget:
            return th
    return 2


# ---------------------------------------------------------------------------
# Fused kernel builder
# ---------------------------------------------------------------------------
def segnet_down3_fused(x_nhwc, w1, w2, w3, scales, shifts, *, row_tile=None):
    N, H, W, Cin = x_nhwc.shape
    assert H % 2 == 0 and W % 2 == 0, "2x2 pool requires even H and W"
    cpo = w1.shape[-1]               # padded out-channels (multiple of 128)
    cpi = w1.shape[0] // 9           # padded in-channels of layer 1
    assert cpi >= Cin
    wdtype = w1.dtype
    wbytes = jnp.dtype(wdtype).itemsize
    vmem_limit = _vmem_limit_bytes()
    TH = row_tile if row_tile is not None else _pick_row_tile(H, W, cpi, cpo, wbytes, vmem_limit)
    assert TH % 2 == 0 and H % TH == 0, "row tile must be even and divide H"
    T = H // TH
    Ho, Wo = H // 2, W // 2

    # Wrapper-side zero pad: 3 rows top/bottom (cumulative 3-conv halo), 1 col each side,
    # channels to 128 lanes; overlapping row bands let a plain Blocked BlockSpec deliver and
    # double-buffer each halo'd tile automatically.
    xp = jnp.pad(x_nhwc, ((0, 0), (3, 3), (1, 1), (0, cpi - Cin))).astype(wdtype)
    bands = jnp.stack([xp[:, i * TH: i * TH + TH + 6] for i in range(T)], axis=1)
    # bands: (N, T, TH+6, W+2, cpi)

    def conv_taps(src_ref, w_ref, sc, sh, rows, cin_p):
        """3x3 'same' conv over a zero-bordered padded ref: 9 tap matmuls, f32 accumulate,
        then folded BN + bias + ReLU (f32)."""
        acc = None
        t = 0
        for ky in range(3):
            for kx in range(3):
                tap = src_ref[ky:ky + rows, kx:kx + W, :]           # static ref-slice load
                tap = tap.reshape(rows * W, cin_p).astype(wdtype)
                d = jnp.dot(tap, w_ref[t * cin_p:(t + 1) * cin_p, :],
                            preferred_element_type=jnp.float32)
                acc = d if acc is None else acc + d
                t += 1
        y = jnp.maximum(acc * sc + sh, 0.0)                         # f32 epilogue
        return y.reshape(rows, W, cpo)

    def mask_rows(y, first_img_row):
        rows = y.shape[0]
        g = first_img_row + lax.broadcasted_iota(jnp.int32, (rows, 1, 1), 0)
        return jnp.where((g >= 0) & (g < H), y, 0.0)

    def store_padded(p_ref, y):
        rows = y.shape[0]
        z = jnp.zeros((rows, 1, cpo), p_ref.dtype)
        p_ref[:, 0:1, :] = z                                        # left zero border
        p_ref[:, W + 1:W + 2, :] = z                                # right zero border
        p_ref[:, 1:W + 1, :] = y.astype(p_ref.dtype)

    def maxpool2x2_argmax(y, row0):
        # TODO(synk): optionally stage y in a VMEM scratch and use stride-2 ref reads.
        rows = y.shape[0]
        ho, wo = rows // 2, W // 2
        z = y.reshape(rows, wo, 2, cpo)
        left, right = z[:, :, 0, :], z[:, :, 1, :]
        gx = right > left                                           # strict '>' keeps first max
        vx = jnp.where(gx, right, left)
        dx = gx.astype(jnp.int32)
        vx = vx.reshape(ho, 2, wo, cpo)
        dx = dx.reshape(ho, 2, wo, cpo)
        top, bot = vx[:, 0], vx[:, 1]
        gy = bot > top
        vals = jnp.where(gy, bot, top)
        dyv = gy.astype(jnp.int32)
        dxv = jnp.where(gy, dx[:, 1], dx[:, 0])
        ii = lax.broadcasted_iota(jnp.int32, (ho, wo, cpo), 0)
        jj = lax.broadcasted_iota(jnp.int32, (ho, wo, cpo), 1)
        idx = (row0 + 2 * ii + dyv) * W + (2 * jj + dxv)
        return vals, idx

    def kernel(x_ref, w1_ref, w2_ref, w3_ref, sc_ref, sh_ref,
               o_ref, idx_ref, p2_ref, p3_ref):
        row0 = pl.program_id(1) * TH                                # first conv3 row of this tile
        # conv1 over the halo'd band -> image rows [row0-2, row0+TH+2)
        y1 = conv_taps(x_ref, w1_ref, sc_ref[0:1, :], sh_ref[0:1, :], TH + 4, cpi)
        store_padded(p2_ref, mask_rows(y1, row0 - 2))
        # conv2 -> image rows [row0-1, row0+TH+1)
        y2 = conv_taps(p2_ref, w2_ref, sc_ref[1:2, :], sh_ref[1:2, :], TH + 2, cpo)
        store_padded(p3_ref, mask_rows(y2, row0 - 1))
        # conv3 -> image rows [row0, row0+TH)
        y3 = conv_taps(p3_ref, w3_ref, sc_ref[2:3, :], sh_ref[2:3, :], TH, cpo)
        vals, idx = maxpool2x2_argmax(y3, row0)
        o_ref[...] = vals
        idx_ref[...] = idx

    flops = 2 * N * H * W * 9 * (cpi * cpo + 2 * cpo * cpo)
    bytes_accessed = int(bands.size * wbytes
                         + (9 * cpi + 18 * cpo) * cpo * wbytes
                         + 6 * cpo * 4
                         + N * Ho * Wo * cpo * 8)

    return pl.pallas_call(
        kernel,
        out_shape=(jax.ShapeDtypeStruct((N, Ho, Wo, cpo), jnp.float32),
                   jax.ShapeDtypeStruct((N, Ho, Wo, cpo), jnp.int32)),
        grid=(N, T),
        in_specs=[
            pl.BlockSpec((None, None, TH + 6, W + 2, cpi), lambda n, i: (n, i, 0, 0, 0)),
            pl.BlockSpec((9 * cpi, cpo), lambda n, i: (0, 0)),
            pl.BlockSpec((9 * cpo, cpo), lambda n, i: (0, 0)),
            pl.BlockSpec((9 * cpo, cpo), lambda n, i: (0, 0)),
            pl.BlockSpec((3, cpo), lambda n, i: (0, 0)),
            pl.BlockSpec((3, cpo), lambda n, i: (0, 0)),
        ],
        out_specs=(pl.BlockSpec((None, TH // 2, Wo, cpo), lambda n, i: (n, i, 0, 0)),
                   pl.BlockSpec((None, TH // 2, Wo, cpo), lambda n, i: (n, i, 0, 0))),
        scratch_shapes=[pltpu.VMEM((TH + 4, W + 2, cpo), wdtype),
                        pltpu.VMEM((TH + 2, W + 2, cpo), wdtype)],
        compiler_params=pltpu.CompilerParams(
            dimension_semantics=("parallel", "parallel"),
            vmem_limit_bytes=vmem_limit),
        cost_estimate=pl.CostEstimate(flops=int(flops), transcendentals=0,
                                      bytes_accessed=bytes_accessed),
    )(bands, w1, w2, w3, scales, shifts)


# ---------------------------------------------------------------------------
# Parameter setup (deterministic, synthetic) and BN folding (with lane padding)
# ---------------------------------------------------------------------------
def make_layer_params(key, cin, cout):
    kw, kb, kg, kbeta = jax.random.split(key, 4)
    w = 0.1 * jax.random.normal(kw, (cout, cin, 3, 3), jnp.float32)   # OIHW
    b = 0.1 * jax.random.normal(kb, (cout,), jnp.float32)
    gamma = 1.0 + 0.1 * jax.random.normal(kg, (cout,), jnp.float32)
    beta = 0.1 * jax.random.normal(kbeta, (cout,), jnp.float32)
    return w, b, gamma, beta


def fold_params(raw_params, compute_dtype=jnp.bfloat16):
    """Fold eval-mode BN (mean=0, var=1) + conv bias into per-channel scale/shift, build
    tap-major matmul weights, and zero-pad every channel dim to a multiple of 128 lanes."""
    w_cols, scales, shifts = [], [], []
    for (w, b, gamma, beta) in raw_params:
        cout, cin = w.shape[0], w.shape[1]
        cpo = _round_up(cout, LANES)
        cpi = _round_up(cin, LANES)
        scale = gamma / jnp.sqrt(1.0 + EPS)
        shift = scale * b + beta
        wp = jnp.zeros((cpo, cpi, 3, 3), jnp.float32).at[:cout, :cin].set(w)
        # rows ordered (ky, kx) major, input-channel minor -> matches the in-kernel tap loop
        w_cols.append(jnp.transpose(wp, (2, 3, 1, 0)).reshape(9 * cpi, cpo).astype(compute_dtype))
        scales.append(jnp.zeros((cpo,), jnp.float32).at[:cout].set(scale))
        shifts.append(jnp.zeros((cpo,), jnp.float32).at[:cout].set(shift))
    return (w_cols[0], w_cols[1], w_cols[2],
            jnp.stack(scales), jnp.stack(shifts))


@functools.partial(jax.jit, static_argnames=("out_channels", "row_tile"))
def _forward_jit(x_nchw, w1, w2, w3, scales, shifts, *, out_channels, row_tile):
    # TODO(synk): keep activations NHWC end-to-end in a real network so these boundary
    # transposes (one full HBM pass each) disappear.
    x = jnp.transpose(x_nchw, (0, 2, 3, 1)).astype(jnp.float32)       # NCHW -> NHWC
    pooled_p, idx_p = segnet_down3_fused(x, w1, w2, w3, scales, shifts, row_tile=row_tile)
    pooled = jnp.transpose(pooled_p[..., :out_channels], (0, 3, 1, 2))
    idx = jnp.transpose(idx_p[..., :out_channels], (0, 3, 1, 2))
    return pooled, idx


def segnet_down3_forward(x_nchw, params, out_channels, row_tile=None):
    w1, w2, w3, scales, shifts = params
    pooled, idx = _forward_jit(x_nchw, w1, w2, w3, scales, shifts,
                               out_channels=out_channels, row_tile=row_tile)
    N, _, H, W = x_nchw.shape
    unpool_shape = (N, out_channels, H, W)                             # pre-pool shape
    return pooled, idx, unpool_shape


# ---------------------------------------------------------------------------
# Pure-JAX / numpy references (for correctness checks)
# ---------------------------------------------------------------------------
def ref_cbr(x_nchw, w, b, gamma, beta):
    y = lax.conv_general_dilated(x_nchw, w, window_strides=(1, 1), padding="SAME",
                                 dimension_numbers=("NCHW", "OIHW", "NCHW"))
    y = y + b[None, :, None, None]
    y = gamma[None, :, None, None] * y / jnp.sqrt(1.0 + EPS) + beta[None, :, None, None]
    return jnp.maximum(y, 0.0)


def ref_forward(x_nchw, raw_params):
    x = x_nchw
    for (w, b, g, be) in raw_params:
        x = ref_cbr(x, w, b, g, be)
    pooled = lax.reduce_window(x, -jnp.inf, lax.max, (1, 1, 2, 2), (1, 1, 2, 2), "VALID")
    return pooled, x


def ref_pool_indices(pre_pool):
    """PyTorch-style first-max argmax indices (numpy), plus the top-2 gap per window."""
    N, C, H, W = pre_pool.shape
    Ho, Wo = H // 2, W // 2
    r = (pre_pool.reshape(N, C, Ho, 2, Wo, 2)
         .transpose(0, 1, 2, 4, 3, 5).reshape(N, C, Ho, Wo, 4))
    order = np.argmax(r, axis=-1)
    srt = np.sort(r, axis=-1)
    gap = srt[..., -1] - srt[..., -2]
    dy, dx = order // 2, order % 2
    ii = np.arange(Ho).reshape(1, 1, Ho, 1)
    jj = np.arange(Wo).reshape(1, 1, 1, Wo)
    idx = (2 * ii + dy) * W + (2 * jj + dx)
    return idx, gap


# ---------------------------------------------------------------------------
if __name__ == "__main__":
    N, Cin, Cout, H, W = 2, 4, 8, 16, 16
    Ho, Wo = H // 2, W // 2

    key = jax.random.PRNGKey(0)
    kx, k1, k2, k3 = jax.random.split(key, 4)
    x = jax.random.normal(kx, (N, Cin, H, W), jnp.float32)

    raw_params = [
        make_layer_params(k1, Cin, Cout),
        make_layer_params(k2, Cout, Cout),
        make_layer_params(k3, Cout, Cout),
    ]

    # ---- f32 compute path, 2 row tiles (strict correctness check) ----
    params_f32 = fold_params(raw_params, compute_dtype=jnp.float32)
    pooled, pool_indices, unpool_shape = segnet_down3_forward(x, params_f32, Cout, row_tile=8)
    pooled = jax.block_until_ready(pooled)
    pool_indices = jax.block_until_ready(pool_indices)

    ref_pooled, ref_pre_pool = ref_forward(x, raw_params)
    ref_pooled = np.asarray(ref_pooled)
    ref_pre_pool = np.asarray(ref_pre_pool)

    assert pooled.shape == (N, Cout, Ho, Wo)
    assert pool_indices.shape == (N, Cout, Ho, Wo)
    assert tuple(unpool_shape) == (N, Cout, H, W)
    np.testing.assert_allclose(np.asarray(pooled), ref_pooled, rtol=1e-4, atol=1e-4)

    # indices: the value at the claimed index must equal the pooled value ...
    idx_np = np.asarray(pool_indices)
    gathered = np.take_along_axis(
        ref_pre_pool.reshape(N, Cout, H * W),
        idx_np.reshape(N, Cout, Ho * Wo), axis=-1).reshape(N, Cout, Ho, Wo)
    np.testing.assert_allclose(gathered, ref_pooled, rtol=1e-4, atol=1e-4)
    # ... and match PyTorch's first-max argmax away from numerical near-ties.
    ref_idx, gap = ref_pool_indices(ref_pre_pool)
    safe = gap > 1e-3
    assert np.array_equal(idx_np[safe], ref_idx[safe])
    assert int(idx_np.min()) >= 0 and int(idx_np.max()) < H * W

    # ---- default bf16 matmul path (MXU-native on v6e/v7x), auto row tile ----
    params_bf16 = fold_params(raw_params)                     # default compute_dtype=bf16
    pooled_bf16, idx_bf16, _ = segnet_down3_forward(x, params_bf16, Cout)
    pooled_bf16 = jax.block_until_ready(pooled_bf16)
    jax.block_until_ready(idx_bf16)
    assert pooled_bf16.shape == pooled.shape
    np.testing.assert_allclose(np.asarray(pooled_bf16), ref_pooled, rtol=0.1, atol=0.1)

    print("KERNEL_OK")
</pallas_src>

<mosaic_0001>
module attributes {stable_mosaic.version = 11 : i64} {
  func.func @kernel(%arg0: i32, %arg1: i32, %arg2: memref<1x1x14x18x128xf32, #tpu.memory_space<vmem>>, %arg3: memref<1152x128xf32, #tpu.memory_space<vmem>>, %arg4: memref<1152x128xf32, #tpu.memory_space<vmem>>, %arg5: memref<1152x128xf32, #tpu.memory_space<vmem>>, %arg6: memref<3x128xf32, #tpu.memory_space<vmem>>, %arg7: memref<3x128xf32, #tpu.memory_space<vmem>>, %arg8: memref<1x4x8x128xf32, #tpu.memory_space<vmem>>, %arg9: memref<1x4x8x128xi32, #tpu.memory_space<vmem>>, %arg10: memref<12x18x128xf32, #tpu.memory_space<vmem>>, %arg11: memref<10x18x128xf32, #tpu.memory_space<vmem>>) attributes {dimension_semantics = [#tpu.dimension_semantics<parallel>, #tpu.dimension_semantics<parallel>], iteration_bounds = array<i64: 2, 2>, scalar_prefetch = 0 : i64, scratch_operands = 2 : i64, tpu.core_type = #tpu.core_type<tc>, window_params = [{transform_indices = @transform_0, window_bounds = array<i64: 1, 1, 14, 18, 128>}, {pipeline_mode = #tpu.pipeline_mode<synchronous>, transform_indices = @transform_1, window_bounds = array<i64: 1152, 128>}, {pipeline_mode = #tpu.pipeline_mode<synchronous>, transform_indices = @transform_2, window_bounds = array<i64: 1152, 128>}, {pipeline_mode = #tpu.pipeline_mode<synchronous>, transform_indices = @transform_3, window_bounds = array<i64: 1152, 128>}, {pipeline_mode = #tpu.pipeline_mode<synchronous>, transform_indices = @transform_4, window_bounds = array<i64: 3, 128>}, {pipeline_mode = #tpu.pipeline_mode<synchronous>, transform_indices = @transform_5, window_bounds = array<i64: 3, 128>}, {transform_indices = @transform_6, window_bounds = array<i64: 1, 4, 8, 128>}, {transform_indices = @transform_7, window_bounds = array<i64: 1, 4, 8, 128>}]} {
    %c8_i32 = arith.constant 8 : i32
    %0 = arith.muli %arg1, %c8_i32 : i32
    %c0 = arith.constant 0 : index
    %c0_0 = arith.constant 0 : index
    %1 = vector.load %arg6[%c0, %c0_0] : memref<3x128xf32, #tpu.memory_space<vmem>>, vector<1x128xf32>
    %c0_1 = arith.constant 0 : index
    %c0_2 = arith.constant 0 : index
    %2 = vector.load %arg7[%c0_1, %c0_2] : memref<3x128xf32, #tpu.memory_space<vmem>>, vector<1x128xf32>
    %c0_3 = arith.constant 0 : index
    %c0_4 = arith.constant 0 : index
    %c0_5 = arith.constant 0 : index
    %c0_6 = arith.constant 0 : index
    %c0_7 = arith.constant 0 : index
    %3 = vector.load %arg2[%c0_3, %c0_4, %c0_5, %c0_6, %c0_7] : memref<1x1x14x18x128xf32, #tpu.memory_space<vmem>>, vector<1x1x12x16x128xf32>
    %4 = vector.shape_cast %3 : vector<1x1x12x16x128xf32> to vector<12x16x128xf32>
    %5 = vector.shape_cast %4 : vector<12x16x128xf32> to vector<192x128xf32>
    %c0_8 = arith.constant 0 : index
    %c0_9 = arith.constant 0 : index
    %6 = vector.load %arg3[%c0_8, %c0_9] : memref<1152x128xf32, #tpu.memory_space<vmem>>, vector<128x128xf32>
    %cst = arith.constant dense<0.000000e+00> : vector<192x128xf32>
    %7 = tpu.matmul %5, %6, %cst {dimension_numbers = #tpu.dot_dimension_numbers<[1], [0], [0], [1], [0, 0, 1, 1], [], []>} : vector<192x128xf32>, vector<128x128xf32>, vector<192x128xf32> -> vector<192x128xf32>
    %c0_10 = arith.constant 0 : index
    %c0_11 = arith.constant 0 : index
    %c0_12 = arith.constant 0 : index
    %c1 = arith.constant 1 : index
    %c0_13 = arith.constant 0 : index
    %8 = vector.load %arg2[%c0_10, %c0_11, %c0_12, %c1, %c0_13] : memref<1x1x14x18x128xf32, #tpu.memory_space<vmem>>, vector<1x1x12x16x128xf32>
    %9 = vector.shape_cast %8 : vector<1x1x12x16x128xf32> to vector<12x16x128xf32>
    %10 = vector.shape_cast %9 : vector<12x16x128xf32> to vector<192x128xf32>
    %c128 = arith.constant 128 : index
    %c0_14 = arith.constant 0 : index
    %11 = vector.load %arg3[%c128, %c0_14] : memref<1152x128xf32, #tpu.memory_space<vmem>>, vector<128x128xf32>
    %cst_15 = arith.constant dense<0.000000e+00> : vector<192x128xf32>
    %12 = tpu.matmul %10, %11, %cst_15 {dimension_numbers = #tpu.dot_dimension_numbers<[1], [0], [0], [1], [0, 0, 1, 1], [], []>} : vector<192x128xf32>, vector<128x128xf32>, vector<192x128xf32> -> vector<192x128xf32>
    %13 = arith.addf %7, %12 : vector<192x128xf32>
    %c0_16 = arith.constant 0 : index
    %c0_17 = arith.constant 0 : index
    %c0_18 = arith.constant 0 : index
    %c2 = arith.constant 2 : index
    %c0_19 = arith.constant 0 : index
    %14 = vector.load %arg2[%c0_16, %c0_17, %c0_18, %c2, %c0_19] : memref<1x1x14x18x128xf32, #tpu.memory_space<vmem>>, vector<1x1x12x16x128xf32>
    %15 = vector.shape_cast %14 : vector<1x1x12x16x128xf32> to vector<12x16x128xf32>
    %16 = vector.shape_cast %15 : vector<12x16x128xf32> to vector<192x128xf32>
    %c256 = arith.constant 256 : index
    %c0_20 = arith.constant 0 : index
    %17 = vector.load %arg3[%c256, %c0_20] : memref<1152x128xf32, #tpu.memory_space<vmem>>, vector<128x128xf32>
    %cst_21 = arith.constant dense<0.000000e+00> : vector<192x128xf32>
    %18 = tpu.matmul %16, %17, %cst_21 {dimension_numbers = #tpu.dot_dimension_numbers<[1], [0], [0], [1], [0, 0, 1, 1], [], []>} : vector<192x128xf32>, vector<128x128xf32>, vector<192x128xf32> -> vector<192x128xf32>
    %19 = arith.addf %13, %18 : vector<192x128xf32>
    %c0_22 = arith.constant 0 : index
    %c0_23 = arith.constant 0 : index
    %c1_24 = arith.constant 1 : index
    %c0_25 = arith.constant 0 : index
    %c0_26 = arith.constant 0 : index
    %20 = vector.load %arg2[%c0_22, %c0_23, %c1_24, %c0_25, %c0_26] : memref<1x1x14x18x128xf32, #tpu.memory_space<vmem>>, vector<1x1x12x16x128xf32>
    %21 = vector.shape_cast %20 : vector<1x1x12x16x128xf32> to vector<12x16x128xf32>
    %22 = vector.shape_cast %21 : vector<12x16x128xf32> to vector<192x128xf32>
    %c384 = arith.constant 384 : index
    %c0_27 = arith.constant 0 : index
    %23 = vector.load %arg3[%c384, %c0_27] : memref<1152x128xf32, #tpu.memory_space<vmem>>, vector<128x128xf32>
    %cst_28 = arith.constant dense<0.000000e+00> : vector<192x128xf32>
    %24 = tpu.matmul %22, %23, %cst_28 {dimension_numbers = #tpu.dot_dimension_numbers<[1], [0], [0], [1], [0, 0, 1, 1], [], []>} : vector<192x128xf32>, vector<128x128xf32>, vector<192x128xf32> -> vector<192x128xf32>
    %25 = arith.addf %19, %24 : vector<192x128xf32>
    %c0_29 = arith.constant 0 : index
    %c0_30 = arith.constant 0 : index
    %c1_31 = arith.constant 1 : index
    %c1_32 = arith.constant 1 : index
    %c0_33 = arith.constant 0 : index
    %26 = vector.load %arg2[%c0_29, %c0_30, %c1_31, %c1_32, %c0_33] : memref<1x1x14x18x128xf32, #tpu.memory_space<vmem>>, vector<1x1x12x16x128xf32>
    %27 = vector.shape_cast %26 : vector<1x1x12x16x128xf32> to vector<12x16x128xf32>
    %28 = vector.shape_cast %27 : vector<12x16x128xf32> to vector<192x128xf32>
    %c512 = arith.constant 512 : index
    %c0_34 = arith.constant 0 : index
    %29 = vector.load %arg3[%c512, %c0_34] : memref<1152x128xf32, #tpu.memory_space<vmem>>, vector<128x128xf32>
    %cst_35 = arith.constant dense<0.000000e+00> : vector<192x128xf32>
    %30 = tpu.matmul %28, %29, %cst_35 {dimension_numbers = #tpu.dot_dimension_numbers<[1], [0], [0], [1], [0, 0, 1, 1], [], []>} : vector<192x128xf32>, vector<128x128xf32>, vector<192x128xf32> -> vector<192x128xf32>
    %31 = arith.addf %25, %30 : vector<192x128xf32>
    %c0_36 = arith.constant 0 : index
    %c0_37 = arith.constant 0 : index
    %c1_38 = arith.constant 1 : index
    %c2_39 = arith.constant 2 : index
    %c0_40 = arith.constant 0 : index
    %32 = vector.load %arg2[%c0_36, %c0_37, %c1_38, %c2_39, %c0_40] : memref<1x1x14x18x128xf32, #tpu.memory_space<vmem>>, vector<1x1x12x16x128xf32>
    %33 = vector.shape_cast %32 : vector<1x1x12x16x128xf32> to vector<12x16x128xf32>
    %34 = vector.shape_cast %33 : vector<12x16x128xf32> to vector<192x128xf32>
    %c640 = arith.constant 640 : index
    %c0_41 = arith.constant 0 : index
    %35 = vector.load %arg3[%c640, %c0_41] : memref<1152x128xf32, #tpu.memory_space<vmem>>, vector<128x128xf32>
    %cst_42 = arith.constant dense<0.000000e+00> : vector<192x128xf32>
    %36 = tpu.matmul %34, %35, %cst_42 {dimension_numbers = #tpu.dot_dimension_numbers<[1], [0], [0], [1], [0, 0, 1, 1], [], []>} : vector<192x128xf32>, vector<128x128xf32>, vector<192x128xf32> -> vector<192x128xf32>
    %37 = arith.addf %31, %36 : vector<192x128xf32>
    %c0_43 = arith.constant 0 : index
    %c0_44 = arith.constant 0 : index
    %c2_45 = arith.constant 2 : index
    %c0_46 = arith.constant 0 : index
    %c0_47 = arith.constant 0 : index
    %38 = vector.load %arg2[%c0_43, %c0_44, %c2_45, %c0_46, %c0_47] : memref<1x1x14x18x128xf32, #tpu.memory_space<vmem>>, vector<1x1x12x16x128xf32>
    %39 = vector.shape_cast %38 : vector<1x1x12x16x128xf32> to vector<12x16x128xf32>
    %40 = vector.shape_cast %39 : vector<12x16x128xf32> to vector<192x128xf32>
    %c768 = arith.constant 768 : index
    %c0_48 = arith.constant 0 : index
    %41 = vector.load %arg3[%c768, %c0_48] : memref<1152x128xf32, #tpu.memory_space<vmem>>, vector<128x128xf32>
    %cst_49 = arith.constant dense<0.000000e+00> : vector<192x128xf32>
    %42 = tpu.matmul %40, %41, %cst_49 {dimension_numbers = #tpu.dot_dimension_numbers<[1], [0], [0], [1], [0, 0, 1, 1], [], []>} : vector<192x128xf32>, vector<128x128xf32>, vector<192x128xf32> -> vector<192x128xf32>
    %43 = arith.addf %37, %42 : vector<192x128xf32>
    %c0_50 = arith.constant 0 : index
    %c0_51 = arith.constant 0 : index
    %c2_52 = arith.constant 2 : index
    %c1_53 = arith.constant 1 : index
    %c0_54 = arith.constant 0 : index
    %44 = vector.load %arg2[%c0_50, %c0_51, %c2_52, %c1_53, %c0_54] : memref<1x1x14x18x128xf32, #tpu.memory_space<vmem>>, vector<1x1x12x16x128xf32>
    %45 = vector.shape_cast %44 : vector<1x1x12x16x128xf32> to vector<12x16x128xf32>
    %46 = vector.shape_cast %45 : vector<12x16x128xf32> to vector<192x128xf32>
    %c896 = arith.constant 896 : index
    %c0_55 = arith.constant 0 : index
    %47 = vector.load %arg3[%c896, %c0_55] : memref<1152x128xf32, #tpu.memory_space<vmem>>, vector<128x128xf32>
    %cst_56 = arith.constant dense<0.000000e+00> : vector<192x128xf32>
    %48 = tpu.matmul %46, %47, %cst_56 {dimension_numbers = #tpu.dot_dimension_numbers<[1], [0], [0], [1], [0, 0, 1, 1], [], []>} : vector<192x128xf32>, vector<128x128xf32>, vector<192x128xf32> -> vector<192x128xf32>
    %49 = arith.addf %43, %48 : vector<192x128xf32>
    %c0_57 = arith.constant 0 : index
    %c0_58 = arith.constant 0 : index
    %c2_59 = arith.constant 2 : index
    %c2_60 = arith.constant 2 : index
    %c0_61 = arith.constant 0 : index
    %50 = vector.load %arg2[%c0_57, %c0_58, %c2_59, %c2_60, %c0_61] : memref<1x1x14x18x128xf32, #tpu.memory_space<vmem>>, vector<1x1x12x16x128xf32>
    %51 = vector.shape_cast %50 : vector<1x1x12x16x128xf32> to vector<12x16x128xf32>
    %52 = vector.shape_cast %51 : vector<12x16x128xf32> to vector<192x128xf32>
    %c1024 = arith.constant 1024 : index
    %c0_62 = arith.constant 0 : index
    %53 = vector.load %arg3[%c1024, %c0_62] : memref<1152x128xf32, #tpu.memory_space<vmem>>, vector<128x128xf32>
    %cst_63 = arith.constant dense<0.000000e+00> : vector<192x128xf32>
    %54 = tpu.matmul %52, %53, %cst_63 {dimension_numbers = #tpu.dot_dimension_numbers<[1], [0], [0], [1], [0, 0, 1, 1], [], []>} : vector<192x128xf32>, vector<128x128xf32>, vector<192x128xf32> -> vector<192x128xf32>
    %55 = arith.addf %49, %54 : vector<192x128xf32>
    %56 = vector.broadcast %1 : vector<1x128xf32> to vector<192x128xf32>
    %57 = arith.mulf %55, %56 : vector<192x128xf32>
    %58 = vector.broadcast %2 : vector<1x128xf32> to vector<192x128xf32>
    %59 = arith.addf %57, %58 : vector<192x128xf32>
    %cst_64 = arith.constant 0.000000e+00 : f32
    %60 = vector.broadcast %cst_64 : f32 to vector<192x128xf32>
    %61 = arith.maximumf %59, %60 : vector<192x128xf32>
    %62 = vector.shape_cast %61 : vector<192x128xf32> to vector<12x16x128xf32>
    %c2_i32 = arith.constant 2 : i32
    %63 = arith.subi %0, %c2_i32 : i32
    %64 = tpu.iota {dimensions = array<i32: 0>} : vector<12x1x1xi32>
    %65 = vector.broadcast %63 : i32 to vector<12x1x1xi32>
    %66 = arith.addi %65, %64 : vector<12x1x1xi32>
    %c0_i32 = arith.constant 0 : i32
    %67 = vector.broadcast %c0_i32 : i32 to vector<12x1x1xi32>
    %68 = arith.cmpi sge, %66, %67 : vector<12x1x1xi32>
    %c16_i32 = arith.constant 16 : i32
    %69 = vector.broadcast %c16_i32 : i32 to vector<12x1x1xi32>
    %70 = arith.cmpi slt, %66, %69 : vector<12x1x1xi32>
    %71 = arith.andi %68, %70 : vector<12x1x1xi1>
    %cst_65 = arith.constant 0.000000e+00 : f32
    %72 = vector.shape_cast %71 : vector<12x1x1xi1> to vector<12x1x1xi1>
    %73 = vector.broadcast %72 : vector<12x1x1xi1> to vector<12x16x128xi1>
    %74 = vector.broadcast %cst_65 : f32 to vector<12x16x128xf32>
    %75 = arith.select %73, %62, %74 : vector<12x16x128xi1>, vector<12x16x128xf32>
    %cst_66 = arith.constant 0.000000e+00 : f32
    %76 = vector.broadcast %cst_66 : f32 to vector<12x1x128xf32>
    %c0_67 = arith.constant 0 : index
    %c0_68 = arith.constant 0 : index
    %c0_69 = arith.constant 0 : index
    %77 = vector.load %arg10[%c0_67, %c0_68, %c0_69] : memref<12x18x128xf32, #tpu.memory_space<vmem>>, vector<12x1x128xf32>
    tpu.vector_store %arg10[%c0_67, %c0_68, %c0_69], %76 {strides = array<i32>} : memref<12x18x128xf32, #tpu.memory_space<vmem>>, vector<12x1x128xf32>,
    %c0_70 = arith.constant 0 : index
    %c17 = arith.constant 17 : index
    %c0_71 = arith.constant 0 : index
    %78 = vector.load %arg10[%c0_70, %c17, %c0_71] : memref<12x18x128xf32, #tpu.memory_space<vmem>>, vector<12x1x128xf32>
    tpu.vector_store %arg10[%c0_70, %c17, %c0_71], %76 {strides = array<i32>} : memref<12x18x128xf32, #tpu.memory_space<vmem>>, vector<12x1x128xf32>,
    %c0_72 = arith.constant 0 : index
    %c1_73 = arith.constant 1 : index
    %c0_74 = arith.constant 0 : index
    %79 = vector.load %arg10[%c0_72, %c1_73, %c0_74] : memref<12x18x128xf32, #tpu.memory_space<vmem>>, vector<12x16x128xf32>
    tpu.vector_store %arg10[%c0_72, %c1_73, %c0_74], %75 {strides = array<i32>} : memref<12x18x128xf32, #tpu.memory_space<vmem>>, vector<12x16x128xf32>,
    %c1_75 = arith.constant 1 : index
    %c0_76 = arith.constant 0 : index
    %80 = vector.load %arg6[%c1_75, %c0_76] : memref<3x128xf32, #tpu.memory_space<vmem>>, vector<1x128xf32>
    %c1_77 = arith.constant 1 : index
    %c0_78 = arith.constant 0 : index
    %81 = vector.load %arg7[%c1_77, %c0_78] : memref<3x128xf32, #tpu.memory_space<vmem>>, vector<1x128xf32>
    %c0_79 = arith.constant 0 : index
    %c0_80 = arith.constant 0 : index
    %c0_81 = arith.constant 0 : index
    %82 = vector.load %arg10[%c0_79, %c0_80, %c0_81] : memref<12x18x128xf32, #tpu.memory_space<vmem>>, vector<10x16x128xf32>
    %83 = vector.shape_cast %82 : vector<10x16x128xf32> to vector<160x128xf32>
    %c0_82 = arith.constant 0 : index
    %c0_83 = arith.constant 0 : index
    %84 = vector.load %arg4[%c0_82, %c0_83] : memref<1152x128xf32, #tpu.memory_space<vmem>>, vector<128x128xf32>
    %cst_84 = arith.constant dense<0.000000e+00> : vector<160x128xf32>
    %85 = tpu.matmul %83, %84, %cst_84 {dimension_numbers = #tpu.dot_dimension_numbers<[1], [0], [0], [1], [0, 0, 1, 1], [], []>} : vector<160x128xf32>, vector<128x128xf32>, vector<160x128xf32> -> vector<160x128xf32>
    %c0_85 = arith.constant 0 : index
    %c1_86 = arith.constant 1 : index
    %c0_87 = arith.constant 0 : index
    %86 = vector.load %arg10[%c0_85, %c1_86, %c0_87] : memref<12x18x128xf32, #tpu.memory_space<vmem>>, vector<10x16x128xf32>
    %87 = vector.shape_cast %86 : vector<10x16x128xf32> to vector<160x128xf32>
    %c128_88 = arith.constant 128 : index
    %c0_89 = arith.constant 0 : index
    %88 = vector.load %arg4[%c128_88, %c0_89] : memref<1152x128xf32, #tpu.memory_space<vmem>>, vector<128x128xf32>
    %cst_90 = arith.constant dense<0.000000e+00> : vector<160x128xf32>
    %89 = tpu.matmul %87, %88, %cst_90 {dimension_numbers = #tpu.dot_dimension_numbers<[1], [0], [0], [1], [0, 0, 1, 1], [], []>} : vector<160x128xf32>, vector<128x128xf32>, vector<160x128xf32> -> vector<160x128xf32>
    %90 = arith.addf %85, %89 : vector<160x128xf32>
    %c0_91 = arith.constant 0 : index
    %c2_92 = arith.constant 2 : index
    %c0_93 = arith.constant 0 : index
    %91 = vector.load %arg10[%c0_91, %c2_92, %c0_93] : memref<12x18x128xf32, #tpu.memory_space<vmem>>, vector<10x16x128xf32>
    %92 = vector.shape_cast %91 : vector<10x16x128xf32> to vector<160x128xf32>
    %c256_94 = arith.constant 256 : index
    %c0_95 = arith.constant 0 : index
    %93 = vector.load %arg4[%c256_94, %c0_95] : memref<1152x128xf32, #tpu.memory_space<vmem>>, vector<128x128xf32>
    %cst_96 = arith.constant dense<0.000000e+00> : vector<160x128xf32>
    %94 = tpu.matmul %92, %93, %cst_96 {dimension_numbers = #tpu.dot_dimension_numbers<[1], [0], [0], [1], [0, 0, 1, 1], [], []>} : vector<160x128xf32>, vector<128x128xf32>, vector<160x128xf32> -> vector<160x128xf32>
    %95 = arith.addf %90, %94 : vector<160x128xf32>
    %c1_97 = arith.constant 1 : index
    %c0_98 = arith.constant 0 : index
    %c0_99 = arith.constant 0 : index
    %96 = vector.load %arg10[%c1_97, %c0_98, %c0_99] : memref<12x18x128xf32, #tpu.memory_space<vmem>>, vector<10x16x128xf32>
    %97 = vector.shape_cast %96 : vector<10x16x128xf32> to vector<160x128xf32>
    %c384_100 = arith.constant 384 : index
    %c0_101 = arith.constant 0 : index
    %98 = vector.load %arg4[%c384_100, %c0_101] : memref<1152x128xf32, #tpu.memory_space<vmem>>, vector<128x128xf32>
    %cst_102 = arith.constant dense<0.000000e+00> : vector<160x128xf32>
    %99 = tpu.matmul %97, %98, %cst_102 {dimension_numbers = #tpu.dot_dimension_numbers<[1], [0], [0], [1], [0, 0, 1, 1], [], []>} : vector<160x128xf32>, vector<128x128xf32>, vector<160x128xf32> -> vector<160x128xf32>
    %100 = arith.addf %95, %99 : vector<160x128xf32>
    %c1_103 = arith.constant 1 : index
    %c1_104 = arith.constant 1 : index
    %c0_105 = arith.constant 0 : index
    %101 = vector.load %arg10[%c1_103, %c1_104, %c0_105] : memref<12x18x128xf32, #tpu.memory_space<vmem>>, vector<10x16x128xf32>
    %102 = vector.shape_cast %101 : vector<10x16x128xf32> to vector<160x128xf32>
    %c512_106 = arith.constant 512 : index
    %c0_107 = arith.constant 0 : index
    %103 = vector.load %arg4[%c512_106, %c0_107] : memref<1152x128xf32, #tpu.memory_space<vmem>>, vector<128x128xf32>
    %cst_108 = arith.constant dense<0.000000e+00> : vector<160x128xf32>
    %104 = tpu.matmul %102, %103, %cst_108 {dimension_numbers = #tpu.dot_dimension_numbers<[1], [0], [0], [1], [0, 0, 1, 1], [], []>} : vector<160x128xf32>, vector<128x128xf32>, vector<160x128xf32> -> vector<160x128xf32>
    %105 = arith.addf %100, %104 : vector<160x128xf32>
    %c1_109 = arith.constant 1 : index
    %c2_110 = arith.constant 2 : index
    %c0_111 = arith.constant 0 : index
    %106 = vector.load %arg10[%c1_109, %c2_110, %c0_111] : memref<12x18x128xf32, #tpu.memory_space<vmem>>, vector<10x16x128xf32>
    %107 = vector.shape_cast %106 : vector<10x16x128xf32> to vector<160x128xf32>
    %c640_112 = arith.constant 640 : index
    %c0_113 = arith.constant 0 : index
    %108 = vector.load %arg4[%c640_112, %c0_113] : memref<1152x128xf32, #tpu.memory_space<vmem>>, vector<128x128xf32>
    %cst_114 = arith.constant dense<0.000000e+00> : vector<160x128xf32>
    %109 = tpu.matmul %107, %108, %cst_114 {dimension_numbers = #tpu.dot_dimension_numbers<[1], [0], [0], [1], [0, 0, 1, 1], [], []>} : vector<160x128xf32>, vector<128x128xf32>, vector<160x128xf32> -> vector<160x128xf32>
    %110 = arith.addf %105, %109 : vector<160x128xf32>
    %c2_115 = arith.constant 2 : index
    %c0_116 = arith.constant 0 : index
    %c0_117 = arith.constant 0 : index
    %111 = vector.load %arg10[%c2_115, %c0_116, %c0_117] : memref<12x18x128xf32, #tpu.memory_space<vmem>>, vector<10x16x128xf32>
    %112 = vector.shape_cast %111 : vector<10x16x128xf32> to vector<160x128xf32>
    %c768_118 = arith.constant 768 : index
    %c0_119 = arith.constant 0 : index
    %113 = vector.load %arg4[%c768_118, %c0_119] : memref<1152x128xf32, #tpu.memory_space<vmem>>, vector<128x128xf32>
    %cst_120 = arith.constant dense<0.000000e+00> : vector<160x128xf32>
    %114 = tpu.matmul %112, %113, %cst_120 {dimension_numbers = #tpu.dot_dimension_numbers<[1], [0], [0], [1], [0, 0, 1, 1], [], []>} : vector<160x128xf32>, vector<128x128xf32>, vector<160x128xf32> -> vector<160x128xf32>
    %115 = arith.addf %110, %114 : vector<160x128xf32>
    %c2_121 = arith.constant 2 : index
    %c1_122 = arith.constant 1 : index
    %c0_123 = arith.constant 0 : index
    %116 = vector.load %arg10[%c2_121, %c1_122, %c0_123] : memref<12x18x128xf32, #tpu.memory_space<vmem>>, vector<10x16x128xf32>
    %117 = vector.shape_cast %116 : vector<10x16x128xf32> to vector<160x128xf32>
    %c896_124 = arith.constant 896 : index
    %c0_125 = arith.constant 0 : index
    %118 = vector.load %arg4[%c896_124, %c0_125] : memref<1152x128xf32, #tpu.memory_space<vmem>>, vector<128x128xf32>
    %cst_126 = arith.constant dense<0.000000e+00> : vector<160x128xf32>
    %119 = tpu.matmul %117, %118, %cst_126 {dimension_numbers = #tpu.dot_dimension_numbers<[1], [0], [0], [1], [0, 0, 1, 1], [], []>} : vector<160x128xf32>, vector<128x128xf32>, vector<160x128xf32> -> vector<160x128xf32>
    %120 = arith.addf %115, %119 : vector<160x128xf32>
    %c2_127 = arith.constant 2 : index
    %c2_128 = arith.constant 2 : index
    %c0_129 = arith.constant 0 : index
    %121 = vector.load %arg10[%c2_127, %c2_128, %c0_129] : memref<12x18x128xf32, #tpu.memory_space<vmem>>, vector<10x16x128xf32>
    %122 = vector.shape_cast %121 : vector<10x16x128xf32> to vector<160x128xf32>
    %c1024_130 = arith.constant 1024 : index
    %c0_131 = arith.constant 0 : index
    %123 = vector.load %arg4[%c1024_130, %c0_131] : memref<1152x128xf32, #tpu.memory_space<vmem>>, vector<128x128xf32>
    %cst_132 = arith.constant dense<0.000000e+00> : vector<160x128xf32>
    %124 = tpu.matmul %122, %123, %cst_132 {dimension_numbers = #tpu.dot_dimension_numbers<[1], [0], [0], [1], [0, 0, 1, 1], [], []>} : vector<160x128xf32>, vector<128x128xf32>, vector<160x128xf32> -> vector<160x128xf32>
    %125 = arith.addf %120, %124 : vector<160x128xf32>
    %126 = vector.broadcast %80 : vector<1x128xf32> to vector<160x128xf32>
    %127 = arith.mulf %125, %126 : vector<160x128xf32>
    %128 = vector.broadcast %81 : vector<1x128xf32> to vector<160x128xf32>
    %129 = arith.addf %127, %128 : vector<160x128xf32>
    %cst_133 = arith.constant 0.000000e+00 : f32
    %130 = vector.broadcast %cst_133 : f32 to vector<160x128xf32>
    %131 = arith.maximumf %129, %130 : vector<160x128xf32>
    %132 = vector.shape_cast %131 : vector<160x128xf32> to vector<10x16x128xf32>
    %c1_i32 = arith.constant 1 : i32
    %133 = arith.subi %0, %c1_i32 : i32
    %134 = tpu.iota {dimensions = array<i32: 0>} : vector<10x1x1xi32>
    %135 = vector.broadcast %133 : i32 to vector<10x1x1xi32>
    %136 = arith.addi %135, %134 : vector<10x1x1xi32>
    %c0_i32_134 = arith.constant 0 : i32
    %137 = vector.broadcast %c0_i32_134 : i32 to vector<10x1x1xi32>
    %138 = arith.cmpi sge, %136, %137 : vector<10x1x1xi32>
    %c16_i32_135 = arith.constant 16 : i32
    %139 = vector.broadcast %c16_i32_135 : i32 to vector<10x1x1xi32>
    %140 = arith.cmpi slt, %136, %139 : vector<10x1x1xi32>
    %141 = arith.andi %138, %140 : vector<10x1x1xi1>
    %cst_136 = arith.constant 0.000000e+00 : f32
    %142 = vector.shape_cast %141 : vector<10x1x1xi1> to vector<10x1x1xi1>
    %143 = vector.broadcast %142 : vector<10x1x1xi1> to vector<10x16x128xi1>
    %144 = vector.broadcast %cst_136 : f32 to vector<10x16x128xf32>
    %145 = arith.select %143, %132, %144 : vector<10x16x128xi1>, vector<10x16x128xf32>
    %cst_137 = arith.constant 0.000000e+00 : f32
    %146 = vector.broadcast %cst_137 : f32 to vector<10x1x128xf32>
    %c0_138 = arith.constant 0 : index
    %c0_139 = arith.constant 0 : index
    %c0_140 = arith.constant 0 : index
    %147 = vector.load %arg11[%c0_138, %c0_139, %c0_140] : memref<10x18x128xf32, #tpu.memory_space<vmem>>, vector<10x1x128xf32>
    tpu.vector_store %arg11[%c0_138, %c0_139, %c0_140], %146 {strides = array<i32>} : memref<10x18x128xf32, #tpu.memory_space<vmem>>, vector<10x1x128xf32>,
    %c0_141 = arith.constant 0 : index
    %c17_142 = arith.constant 17 : index
    %c0_143 = arith.constant 0 : index
    %148 = vector.load %arg11[%c0_141, %c17_142, %c0_143] : memref<10x18x128xf32, #tpu.memory_space<vmem>>, vector<10x1x128xf32>
    tpu.vector_store %arg11[%c0_141, %c17_142, %c0_143], %146 {strides = array<i32>} : memref<10x18x128xf32, #tpu.memory_space<vmem>>, vector<10x1x128xf32>,
    %c0_144 = arith.constant 0 : index
    %c1_145 = arith.constant 1 : index
    %c0_146 = arith.constant 0 : index
    %149 = vector.load %arg11[%c0_144, %c1_145, %c0_146] : memref<10x18x128xf32, #tpu.memory_space<vmem>>, vector<10x16x128xf32>
    tpu.vector_store %arg11[%c0_144, %c1_145, %c0_146], %145 {strides = array<i32>} : memref<10x18x128xf32, #tpu.memory_space<vmem>>, vector<10x16x128xf32>,
    %c2_147 = arith.constant 2 : index
    %c0_148 = arith.constant 0 : index
    %150 = vector.load %arg6[%c2_147, %c0_148] : memref<3x128xf32, #tpu.memory_space<vmem>>, vector<1x128xf32>
    %c2_149 = arith.constant 2 : index
    %c0_150 = arith.constant 0 : index
    %151 = vector.load %arg7[%c2_149, %c0_150] : memref<3x128xf32, #tpu.memory_space<vmem>>, vector<1x128xf32>
    %c0_151 = arith.constant 0 : index
    %c0_152 = arith.constant 0 : index
    %c0_153 = arith.constant 0 : index
    %152 = vector.load %arg11[%c0_151, %c0_152, %c0_153] : memref<10x18x128xf32, #tpu.memory_space<vmem>>, vector<8x16x128xf32>
    %153 = vector.shape_cast %152 : vector<8x16x128xf32> to vector<128x128xf32>
    %c0_154 = arith.constant 0 : index
    %c0_155 = arith.constant 0 : index
    %154 = vector.load %arg5[%c0_154, %c0_155] : memref<1152x128xf32, #tpu.memory_space<vmem>>, vector<128x128xf32>
    %cst_156 = arith.constant dense<0.000000e+00> : vector<128x128xf32>
    %155 = tpu.matmul %153, %154, %cst_156 {dimension_numbers = #tpu.dot_dimension_numbers<[1], [0], [0], [1], [0, 0, 1, 1], [], []>} : vector<128x128xf32>, vector<128x128xf32>, vector<128x128xf32> -> vector<128x128xf32>
    %c0_157 = arith.constant 0 : index
    %c1_158 = arith.constant 1 : index
    %c0_159 = arith.constant 0 : index
    %156 = vector.load %arg11[%c0_157, %c1_158, %c0_159] : memref<10x18x128xf32, #tpu.memory_space<vmem>>, vector<8x16x128xf32>
    %157 = vector.shape_cast %156 : vector<8x16x128xf32> to vector<128x128xf32>
    %c128_160 = arith.constant 128 : index
    %c0_161 = arith.constant 0 : index
    %158 = vector.load %arg5[%c128_160, %c0_161] : memref<1152x128xf32, #tpu.memory_space<vmem>>, vector<128x128xf32>
    %cst_162 = arith.constant dense<0.000000e+00> : vector<128x128xf32>
    %159 = tpu.matmul %157, %158, %cst_162 {dimension_numbers = #tpu.dot_dimension_numbers<[1], [0], [0], [1], [0, 0, 1, 1], [], []>} : vector<128x128xf32>, vector<128x128xf32>, vector<128x128xf32> -> vector<128x128xf32>
    %160 = arith.addf %155, %159 : vector<128x128xf32>
    %c0_163 = arith.constant 0 : index
    %c2_164 = arith.constant 2 : index
    %c0_165 = arith.constant 0 : index
    %161 = vector.load %arg11[%c0_163, %c2_164, %c0_165] : memref<10x18x128xf32, #tpu.memory_space<vmem>>, vector<8x16x128xf32>
    %162 = vector.shape_cast %161 : vector<8x16x128xf32> to vector<128x128xf32>
    %c256_166 = arith.constant 256 : index
    %c0_167 = arith.constant 0 : index
    %163 = vector.load %arg5[%c256_166, %c0_167] : memref<1152x128xf32, #tpu.memory_space<vmem>>, vector<128x128xf32>
    %cst_168 = arith.constant dense<0.000000e+00> : vector<128x128xf32>
    %164 = tpu.matmul %162, %163, %cst_168 {dimension_numbers = #tpu.dot_dimension_numbers<[1], [0], [0], [1], [0, 0, 1, 1], [], []>} : vector<128x128xf32>, vector<128x128xf32>, vector<128x128xf32> -> vector<128x128xf32>
    %165 = arith.addf %160, %164 : vector<128x128xf32>
    %c1_169 = arith.constant 1 : index
    %c0_170 = arith.constant 0 : index
    %c0_171 = arith.constant 0 : index
    %166 = vector.load %arg11[%c1_169, %c0_170, %c0_171] : memref<10x18x128xf32, #tpu.memory_space<vmem>>, vector<8x16x128xf32>
    %167 = vector.shape_cast %166 : vector<8x16x128xf32> to vector<128x128xf32>
    %c384_172 = arith.constant 384 : index
    %c0_173 = arith.constant 0 : index
    %168 = vector.load %arg5[%c384_172, %c0_173] : memref<1152x128xf32, #tpu.memory_space<vmem>>, vector<128x128xf32>
    %cst_174 = arith.constant dense<0.000000e+00> : vector<128x128xf32>
    %169 = tpu.matmul %167, %168, %cst_174 {dimension_numbers = #tpu.dot_dimension_numbers<[1], [0], [0], [1], [0, 0, 1, 1], [], []>} : vector<128x128xf32>, vector<128x128xf32>, vector<128x128xf32> -> vector<128x128xf32>
    %170 = arith.addf %165, %169 : vector<128x128xf32>
    %c1_175 = arith.constant 1 : index
    %c1_176 = arith.constant 1 : index
    %c0_177 = arith.constant 0 : index
    %171 = vector.load %arg11[%c1_175, %c1_176, %c0_177] : memref<10x18x128xf32, #tpu.memory_space<vmem>>, vector<8x16x128xf32>
    %172 = vector.shape_cast %171 : vector<8x16x128xf32> to vector<128x128xf32>
    %c512_178 = arith.constant 512 : index
    %c0_179 = arith.constant 0 : index
    %173 = vector.load %arg5[%c512_178, %c0_179] : memref<1152x128xf32, #tpu.memory_space<vmem>>, vector<128x128xf32>
    %cst_180 = arith.constant dense<0.000000e+00> : vector<128x128xf32>
    %174 = tpu.matmul %172, %173, %cst_180 {dimension_numbers = #tpu.dot_dimension_numbers<[1], [0], [0], [1], [0, 0, 1, 1], [], []>} : vector<128x128xf32>, vector<128x128xf32>, vector<128x128xf32> -> vector<128x128xf32>
    %175 = arith.addf %170, %174 : vector<128x128xf32>
    %c1_181 = arith.constant 1 : index
    %c2_182 = arith.constant 2 : index
    %c0_183 = arith.constant 0 : index
    %176 = vector.load %arg11[%c1_181, %c2_182, %c0_183] : memref<10x18x128xf32, #tpu.memory_space<vmem>>, vector<8x16x128xf32>
    %177 = vector.shape_cast %176 : vector<8x16x128xf32> to vector<128x128xf32>
    %c640_184 = arith.constant 640 : index
    %c0_185 = arith.constant 0 : index
    %178 = vector.load %arg5[%c640_184, %c0_185] : memref<1152x128xf32, #tpu.memory_space<vmem>>, vector<128x128xf32>
    %cst_186 = arith.constant dense<0.000000e+00> : vector<128x128xf32>
    %179 = tpu.matmul %177, %178, %cst_186 {dimension_numbers = #tpu.dot_dimension_numbers<[1], [0], [0], [1], [0, 0, 1, 1], [], []>} : vector<128x128xf32>, vector<128x128xf32>, vector<128x128xf32> -> vector<128x128xf32>
    %180 = arith.addf %175, %179 : vector<128x128xf32>
    %c2_187 = arith.constant 2 : index
    %c0_188 = arith.constant 0 : index
    %c0_189 = arith.constant 0 : index
    %181 = vector.load %arg11[%c2_187, %c0_188, %c0_189] : memref<10x18x128xf32, #tpu.memory_space<vmem>>, vector<8x16x128xf32>
    %182 = vector.shape_cast %181 : vector<8x16x128xf32> to vector<128x128xf32>
    %c768_190 = arith.constant 768 : index
    %c0_191 = arith.constant 0 : index
    %183 = vector.load %arg5[%c768_190, %c0_191] : memref<1152x128xf32, #tpu.memory_space<vmem>>, vector<128x128xf32>
    %cst_192 = arith.constant dense<0.000000e+00> : vector<128x128xf32>
    %184 = tpu.matmul %182, %183, %cst_192 {dimension_numbers = #tpu.dot_dimension_numbers<[1], [0], [0], [1], [0, 0, 1, 1], [], []>} : vector<128x128xf32>, vector<128x128xf32>, vector<128x128xf32> -> vector<128x128xf32>
    %185 = arith.addf %180, %184 : vector<128x128xf32>
    %c2_193 = arith.constant 2 : index
    %c1_194 = arith.constant 1 : index
    %c0_195 = arith.constant 0 : index
    %186 = vector.load %arg11[%c2_193, %c1_194, %c0_195] : memref<10x18x128xf32, #tpu.memory_space<vmem>>, vector<8x16x128xf32>
    %187 = vector.shape_cast %186 : vector<8x16x128xf32> to vector<128x128xf32>
    %c896_196 = arith.constant 896 : index
    %c0_197 = arith.constant 0 : index
    %188 = vector.load %arg5[%c896_196, %c0_197] : memref<1152x128xf32, #tpu.memory_space<vmem>>, vector<128x128xf32>
    %cst_198 = arith.constant dense<0.000000e+00> : vector<128x128xf32>
    %189 = tpu.matmul %187, %188, %cst_198 {dimension_numbers = #tpu.dot_dimension_numbers<[1], [0], [0], [1], [0, 0, 1, 1], [], []>} : vector<128x128xf32>, vector<128x128xf32>, vector<128x128xf32> -> vector<128x128xf32>
    %190 = arith.addf %185, %189 : vector<128x128xf32>
    %c2_199 = arith.constant 2 : index
    %c2_200 = arith.constant 2 : index
    %c0_201 = arith.constant 0 : index
    %191 = vector.load %arg11[%c2_199, %c2_200, %c0_201] : memref<10x18x128xf32, #tpu.memory_space<vmem>>, vector<8x16x128xf32>
    %192 = vector.shape_cast %191 : vector<8x16x128xf32> to vector<128x128xf32>
    %c1024_202 = arith.constant 1024 : index
    %c0_203 = arith.constant 0 : index
    %193 = vector.load %arg5[%c1024_202, %c0_203] : memref<1152x128xf32, #tpu.memory_space<vmem>>, vector<128x128xf32>
    %cst_204 = arith.constant dense<0.000000e+00> : vector<128x128xf32>
    %194 = tpu.matmul %192, %193, %cst_204 {dimension_numbers = #tpu.dot_dimension_numbers<[1], [0], [0], [1], [0, 0, 1, 1], [], []>} : vector<128x128xf32>, vector<128x128xf32>, vector<128x128xf32> -> vector<128x128xf32>
    %195 = arith.addf %190, %194 : vector<128x128xf32>
    %196 = vector.broadcast %150 : vector<1x128xf32> to vector<128x128xf32>
    %197 = arith.mulf %195, %196 : vector<128x128xf32>
    %198 = vector.broadcast %151 : vector<1x128xf32> to vector<128x128xf32>
    %199 = arith.addf %197, %198 : vector<128x128xf32>
    %cst_205 = arith.constant 0.000000e+00 : f32
    %200 = vector.broadcast %cst_205 : f32 to vector<128x128xf32>
    %201 = arith.maximumf %199, %200 : vector<128x128xf32>
    %202 = vector.shape_cast %201 : vector<128x128xf32> to vector<8x16x128xf32>
    %203 = vector.shape_cast %202 : vector<8x16x128xf32> to vector<8x8x2x128xf32>
    %204 = vector.extract_strided_slice %203 {offsets = [0, 0, 0, 0], sizes = [8, 8, 1, 128], strides = [1, 1, 1, 1]} : vector<8x8x2x128xf32> to vector<8x8x1x128xf32>
    %205 = vector.shape_cast %204 : vector<8x8x1x128xf32> to vector<8x8x128xf32>
    %206 = vector.extract_strided_slice %203 {offsets = [0, 0, 1, 0], sizes = [8, 8, 1, 128], strides = [1, 1, 1, 1]} : vector<8x8x2x128xf32> to vector<8x8x1x128xf32>
    %207 = vector.shape_cast %206 : vector<8x8x1x128xf32> to vector<8x8x128xf32>
    %208 = arith.cmpf ogt, %207, %205 : vector<8x8x128xf32>
    %209 = arith.select %208, %207, %205 : vector<8x8x128xi1>, vector<8x8x128xf32>
    %210 = arith.extui %208 : vector<8x8x128xi1> to vector<8x8x128xi32>
    %211 = vector.shape_cast %209 : vector<8x8x128xf32> to vector<4x2x8x128xf32>
    %212 = vector.shape_cast %210 : vector<8x8x128xi32> to vector<4x2x8x128xi32>
    %213 = vector.extract_strided_slice %211 {offsets = [0, 0, 0, 0], sizes = [4, 1, 8, 128], strides = [1, 1, 1, 1]} : vector<4x2x8x128xf32> to vector<4x1x8x128xf32>
    %214 = vector.shape_cast %213 : vector<4x1x8x128xf32> to vector<4x8x128xf32>
    %215 = vector.extract_strided_slice %211 {offsets = [0, 1, 0, 0], sizes = [4, 1, 8, 128], strides = [1, 1, 1, 1]} : vector<4x2x8x128xf32> to vector<4x1x8x128xf32>
    %216 = vector.shape_cast %215 : vector<4x1x8x128xf32> to vector<4x8x128xf32>
    %217 = arith.cmpf ogt, %216, %214 : vector<4x8x128xf32>
    %218 = arith.select %217, %216, %214 : vector<4x8x128xi1>, vector<4x8x128xf32>
    %219 = arith.extui %217 : vector<4x8x128xi1> to vector<4x8x128xi32>
    %220 = vector.extract_strided_slice %212 {offsets = [0, 1, 0, 0], sizes = [4, 1, 8, 128], strides = [1, 1, 1, 1]} : vector<4x2x8x128xi32> to vector<4x1x8x128xi32>
    %221 = vector.shape_cast %220 : vector<4x1x8x128xi32> to vector<4x8x128xi32>
    %222 = vector.extract_strided_slice %212 {offsets = [0, 0, 0, 0], sizes = [4, 1, 8, 128], strides = [1, 1, 1, 1]} : vector<4x2x8x128xi32> to vector<4x1x8x128xi32>
    %223 = vector.shape_cast %222 : vector<4x1x8x128xi32> to vector<4x8x128xi32>
    %224 = arith.select %217, %221, %223 : vector<4x8x128xi1>, vector<4x8x128xi32>
    %225 = tpu.iota {dimensions = array<i32: 0>} : vector<4x8x128xi32>
    %226 = tpu.iota {dimensions = array<i32: 1>} : vector<4x8x128xi32>
    %c2_i32_206 = arith.constant 2 : i32
    %227 = vector.broadcast %c2_i32_206 : i32 to vector<4x8x128xi32>
    %228 = arith.muli %227, %225 : vector<4x8x128xi32>
    %229 = vector.broadcast %0 : i32 to vector<4x8x128xi32>
    %230 = arith.addi %229, %228 : vector<4x8x128xi32>
    %231 = arith.addi %230, %219 : vector<4x8x128xi32>
    %c16_i32_207 = arith.constant 16 : i32
    %232 = vector.broadcast %c16_i32_207 : i32 to vector<4x8x128xi32>
    %233 = arith.muli %231, %232 : vector<4x8x128xi32>
    %c2_i32_208 = arith.constant 2 : i32
    %234 = vector.broadcast %c2_i32_208 : i32 to vector<4x8x128xi32>
    %235 = arith.muli %234, %226 : vector<4x8x128xi32>
    %236 = arith.addi %235, %224 : vector<4x8x128xi32>
    %237 = arith.addi %233, %236 : vector<4x8x128xi32>
    %c0_209 = arith.constant 0 : index
    %c0_210 = arith.constant 0 : index
    %c0_211 = arith.constant 0 : index
    %c0_212 = arith.constant 0 : index
    %238 = vector.load %arg8[%c0_209, %c0_210, %c0_211, %c0_212] : memref<1x4x8x128xf32, #tpu.memory_space<vmem>>, vector<1x4x8x128xf32>
    %239 = vector.shape_cast %238 : vector<1x4x8x128xf32> to vector<4x8x128xf32>
    %240 = vector.shape_cast %218 : vector<4x8x128xf32> to vector<1x4x8x128xf32>
    tpu.vector_store %arg8[%c0_209, %c0_210, %c0_211, %c0_212], %240 {strides = array<i32>} : memref<1x4x8x128xf32, #tpu.memory_space<vmem>>, vector<1x4x8x128xf32>,
    %c0_213 = arith.constant 0 : index
    %c0_214 = arith.constant 0 : index
    %c0_215 = arith.constant 0 : index
    %c0_216 = arith.constant 0 : index
    %241 = vector.load %arg9[%c0_213, %c0_214, %c0_215, %c0_216] : memref<1x4x8x128xi32, #tpu.memory_space<vmem>>, vector<1x4x8x128xi32>
    %242 = vector.shape_cast %241 : vector<1x4x8x128xi32> to vector<4x8x128xi32>
    %243 = vector.shape_cast %237 : vector<4x8x128xi32> to vector<1x4x8x128xi32>
    tpu.vector_store %arg9[%c0_213, %c0_214, %c0_215, %c0_216], %243 {strides = array<i32>} : memref<1x4x8x128xi32, #tpu.memory_space<vmem>>, vector<1x4x8x128xi32>,
    return
  }
  func.func @transform_0(%arg0: i32, %arg1: i32) -> (i32, i32, i32, i32, i32) {
    %c0_i32 = arith.constant 0 : i32
    %c0_i32_0 = arith.constant 0 : i32
    %c0_i32_1 = arith.constant 0 : i32
    %c0_i32_2 = arith.constant 0 : i32
    return %arg0, %arg1, %c0_i32, %c0_i32_0, %c0_i32_1 : i32, i32, i32, i32, i32
  }
  func.func @transform_1(%arg0: i32, %arg1: i32) -> (i32, i32) {
    %c0_i32 = arith.constant 0 : i32
    %c0_i32_0 = arith.constant 0 : i32
    %c0_i32_1 = arith.constant 0 : i32
    return %c0_i32, %c0_i32_0 : i32, i32
  }
  func.func @transform_2(%arg0: i32, %arg1: i32) -> (i32, i32) {
    %c0_i32 = arith.constant 0 : i32
    %c0_i32_0 = arith.constant 0 : i32
    %c0_i32_1 = arith.constant 0 : i32
    return %c0_i32, %c0_i32_0 : i32, i32
  }
  func.func @transform_3(%arg0: i32, %arg1: i32) -> (i32, i32) {
    %c0_i32 = arith.constant 0 : i32
    %c0_i32_0 = arith.constant 0 : i32
    %c0_i32_1 = arith.constant 0 : i32
    return %c0_i32, %c0_i32_0 : i32, i32
  }
  func.func @transform_4(%arg0: i32, %arg1: i32) -> (i32, i32) {
    %c0_i32 = arith.constant 0 : i32
    %c0_i32_0 = arith.constant 0 : i32
    %c0_i32_1 = arith.constant 0 : i32
    return %c0_i32, %c0_i32_0 : i32, i32
  }
  func.func @transform_5(%arg0: i32, %arg1: i32) -> (i32, i32) {
    %c0_i32 = arith.constant 0 : i32
    %c0_i32_0 = arith.constant 0 : i32
    %c0_i32_1 = arith.constant 0 : i32
    return %c0_i32, %c0_i32_0 : i32, i32
  }
  func.func @transform_6(%arg0: i32, %arg1: i32) -> (i32, i32, i32, i32) {
    %c0_i32 = arith.constant 0 : i32
    %c0_i32_0 = arith.constant 0 : i32
    %c0_i32_1 = arith.constant 0 : i32
    return %arg0, %arg1, %c0_i32, %c0_i32_0 : i32, i32, i32, i32
  }
  func.func @transform_7(%arg0: i32, %arg1: i32) -> (i32, i32, i32, i32) {
    %c0_i32 = arith.constant 0 : i32
    %c0_i32_0 = arith.constant 0 : i32
    %c0_i32_1 = arith.constant 0 : i32
    return %arg0, %arg1, %c0_i32, %c0_i32_0 : i32, i32, i32, i32
  }
}

</mosaic_0001>

<llo_original>
// kernel: _forward_jit.1
$region0: #{_forward_jit.1}
  #allocation0 [shape = 'u32[]', space=smem, size = 0x4, offset = 0x4, fixed_abs, tag = 'smem constant byte address 0x4 - core index']
  #allocation1 [shape = 'u32[72,128]{1,0:T(1,128)}', space=vmem, size = 0x9000, scoped, tag = 'internal scratch']
  #allocation2 [shape = 'f32[12,18,128]{2,1,0:T(8,128)}', space=vmem, size = 0x24000, scoped, tag = 'scratch operand']
  #allocation3 [shape = 'f32[10,18,128]{2,1,0:T(8,128)}', space=vmem, size = 0x1e000, scoped, tag = 'scratch operand']
  %s0 = inlined_call_operand.vmem [shape: f32[2,2,14,18,128], index: 0, kind: input, shape index: {}]
  %s1 = inlined_call_operand.vmem [shape: f32[1152,128], index: 1, kind: input, shape index: {}]
  %s2 = inlined_call_operand.vmem [shape: f32[1152,128], index: 2, kind: input, shape index: {}]
  %s3 = inlined_call_operand.vmem [shape: f32[1152,128], index: 3, kind: input, shape index: {}]
  %s4 = inlined_call_operand.vmem [shape: f32[3,128], index: 4, kind: input, shape index: {}]
  %s5 = inlined_call_operand.vmem [shape: f32[3,128], index: 5, kind: input, shape index: {}]
  %s6 = inlined_call_operand.vmem [shape: f32[2,8,8,128], index: 6, kind: output, shape index: {0}]
  %s7 = inlined_call_operand.vmem [shape: s32[2,8,8,128], index: 7, kind: output, shape index: {1}]
  %8 = xla_tuple %s6, %s7
  %s9 = sld [smem:[#allocation0]]
  $region65: #{_forward_jit.1} parent=0
    _
  %s11 = ssub.s32 1, %s9
  %s12 = scalar_select 0, %s11, %s9
  loop: start=0, step=1, limit=6
  $region2: #{_forward_jit.1} parent=0 // loop_pre_header
    _
  $region3: #{_forward_jit.1} parent=0 // loop_header
    %s14 = sphi 0, %s18
    %p15 = scmp.ge.s32.totalorder %s14, 6
    %s21 = sphi 0, %s33
    %s22 = sphi 0, %s29
    %s23 = sphi 0, %s21
    %s24 = sphi 0, %s22
    %s25 = sphi 0, %s23
    %s26 = sphi 0, %s24
    %s38 = sphi 0, %s40
    %s41 = sphi 0, %s38
    %s42 = sphi 0, %s41
    %s58 = sphi 0, %s42
    %s62 = sphi 0, %s62
    %s64 = sphi 0, %s62
    %s65 = sphi 0, %s64
    %s79 = sphi 0, %s65
    %s83 = sphi 0, %s83
    %s85 = sphi 0, %s83
    %s86 = sphi 0, %s85
    %s100 = sphi 0, %s86
    %s104 = sphi 0, %s104
    %s106 = sphi 0, %s104
    %s107 = sphi 0, %s106
    %s121 = sphi 0, %s107
    %s125 = sphi 0, %s125
    %s127 = sphi 0, %s125
    %s128 = sphi 0, %s127
    %s142 = sphi 0, %s128
    %s146 = sphi 0, %s146
    %s148 = sphi 0, %s146
    %s149 = sphi 0, %s148
    %s163 = sphi 0, %s149
    %s171 = sphi 0, %s173
    %s174 = sphi 0, %s171
    %s175 = sphi 0, %s174
    %s191 = sphi 0, %s175
    %s199 = sphi 0, %s201
    %s202 = sphi 0, %s199
    %s203 = sphi 0, %s202
    %s219 = sphi 0, %s203
  $region4: #{_forward_jit.1} parent=0 // loop_header_branch
    %17 = sbr.rel (%p15) target = $region8
  $region5: #{_forward_jit.1} parent=0 // loop_body
    %s19 = ssub.s32 %s14, 1
    %s20 = ssub.s32 %s14, 2
    %s27 = sadd.s32 1, %s22
    %p28 = scmp.ge.s32.totalorder %s27, 2
    %s29 = scalar_select %p28, 0, %s27
    %s30 = sadd.s32 1, %s21
    %s31 = scalar_select %p28, %s30, %s21
    %p32 = scmp.ge.s32.totalorder %s31, 2
    %s33 = scalar_select %p32, 0, %s31
    %s34 = ssub.s32 %s21, %s33
    %s35 = ssub.s32 %s22, %s29
    %s36 = sor.u32 %s34, %s35
    %p37 = scmp.eq.s32.totalorder %s36, 0
    %s39 = sadd.s32 %s38, 1
    %s40 = scalar_select %p37, %s38, %s39
    %p43 = pneg %p37
    %p44 = scmp.eq.s32.totalorder %s14, 3
    %p45 = por %p43, %p44
    %p46 = scmp.ne.s32.totalorder %s38, %s41
    %p47 = scmp.eq.s32.totalorder %s14, 0
    %p48 = por %p46, %p47
    %p49 = scmp.ne.s32.totalorder %s38, %s41
    %p50 = scmp.eq.s32.totalorder %s19, 3
    %p51 = por %p49, %p50
    %p52 = scmp.ne.s32.totalorder %s41, %s42
    %p53 = scmp.eq.s32.totalorder %s19, 0
    %p54 = por %p52, %p53
    %p55 = scmp.ne.s32.totalorder %s41, %s42
    %p56 = scmp.eq.s32.totalorder %s20, 3
    %p57 = por %p55, %p56
    %p59 = scmp.ne.s32.totalorder %s42, %s58
    %p60 = scmp.eq.s32.totalorder %s20, 0
    %p61 = por %p59, %p60
    %s63 = sadd.s32 %s62, 1
    %p66 = scmp.eq.s32.totalorder %s14, 3
    %p67 = scmp.ne.s32.totalorder %s62, %s64
    %p68 = scmp.eq.s32.totalorder %s14, 0
    %p69 = por %p67, %p68
    %p70 = scmp.ne.s32.totalorder %s62, %s64
    %p71 = scmp.eq.s32.totalorder %s19, 3
    %p72 = por %p70, %p71
    %p73 = scmp.ne.s32.totalorder %s64, %s65
    %p74 = scmp.eq.s32.totalorder %s19, 0
    %p75 = por %p73, %p74
    %p76 = scmp.ne.s32.totalorder %s64, %s65
    %p77 = scmp.eq.s32.totalorder %s20, 3
    %p78 = por %p76, %p77
    %p80 = scmp.ne.s32.totalorder %s65, %s79
    %p81 = scmp.eq.s32.totalorder %s20, 0
    %p82 = por %p80, %p81
    %s84 = sadd.s32 %s83, 1
    %p87 = scmp.eq.s32.totalorder %s14, 3
    %p88 = scmp.ne.s32.totalorder %s83, %s85
    %p89 = scmp.eq.s32.totalorder %s14, 0
    %p90 = por %p88, %p89
    %p91 = scmp.ne.s32.totalorder %s83, %s85
    %p92 = scmp.eq.s32.totalorder %s19, 3
    %p93 = por %p91, %p92
    %p94 = scmp.ne.s32.totalorder %s85, %s86
    %p95 = scmp.eq.s32.totalorder %s19, 0
    %p96 = por %p94, %p95
    %p97 = scmp.ne.s32.totalorder %s85, %s86
    %p98 = scmp.eq.s32.totalorder %s20, 3
    %p99 = por %p97, %p98
    %p101 = scmp.ne.s32.totalorder %s86, %s100
    %p102 = scmp.eq.s32.totalorder %s20, 0
    %p103 = por %p101, %p102
    %s105 = sadd.s32 %s104, 1
    %p108 = scmp.eq.s32.totalorder %s14, 3
    %p109 = scmp.ne.s32.totalorder %s104, %s106
    %p110 = scmp.eq.s32.totalorder %s14, 0
    %p111 = por %p109, %p110
    %p112 = scmp.ne.s32.totalorder %s104, %s106
    %p113 = scmp.eq.s32.totalorder %s19, 3
    %p114 = por %p112, %p113
    %p115 = scmp.ne.s32.totalorder %s106, %s107
    %p116 = scmp.eq.s32.totalorder %s19, 0
    %p117 = por %p115, %p116
    %p118 = scmp.ne.s32.totalorder %s106, %s107
    %p119 = scmp.eq.s32.totalorder %s20, 3
    %p120 = por %p118, %p119
    %p122 = scmp.ne.s32.totalorder %s107, %s121
    %p123 = scmp.eq.s32.totalorder %s20, 0
    %p124 = por %p122, %p123
    %s126 = sadd.s32 %s125, 1
    %p129 = scmp.eq.s32.totalorder %s14, 3
    %p130 = scmp.ne.s32.totalorder %s125, %s127
    %p131 = scmp.eq.s32.totalorder %s14, 0
    %p132 = por %p130, %p131
    %p133 = scmp.ne.s32.totalorder %s125, %s127
    %p134 = scmp.eq.s32.totalorder %s19, 3
    %p135 = por %p133, %p134
    %p136 = scmp.ne.s32.totalorder %s127, %s128
    %p137 = scmp.eq.s32.totalorder %s19, 0
    %p138 = por %p136, %p137
    %p139 = scmp.ne.s32.totalorder %s127, %s128
    %p140 = scmp.eq.s32.totalorder %s20, 3
    %p141 = por %p139, %p140
    %p143 = scmp.ne.s32.totalorder %s128, %s142
    %p144 = scmp.eq.s32.totalorder %s20, 0
    %p145 = por %p143, %p144
    %s147 = sadd.s32 %s146, 1
    %p150 = scmp.eq.s32.totalorder %s14, 3
    %p151 = scmp.ne.s32.totalorder %s146, %s148
    %p152 = scmp.eq.s32.totalorder %s14, 0
    %p153 = por %p151, %p152
    %p154 = scmp.ne.s32.totalorder %s146, %s148
    %p155 = scmp.eq.s32.totalorder %s19, 3
    %p156 = por %p154, %p155
    %p157 = scmp.ne.s32.totalorder %s148, %s149
    %p158 = scmp.eq.s32.totalorder %s19, 0
    %p159 = por %p157, %p158
    %p160 = scmp.ne.s32.totalorder %s148, %s149
    %p161 = scmp.eq.s32.totalorder %s20, 3
    %p162 = por %p160, %p161
    %p164 = scmp.ne.s32.totalorder %s149, %s163
    %p165 = scmp.eq.s32.totalorder %s20, 0
    %p166 = por %p164, %p165
    %s167 = ssub.s32 %s21, %s33
    %s168 = ssub.s32 %s22, %s29
    %s169 = sor.u32 %s167, %s168
    %p170 = scmp.eq.s32.totalorder %s169, 0
    %s172 = sadd.s32 %s171, 1
    %s173 = scalar_select %p170, %s171, %s172
    %p176 = pneg %p170
    %p177 = scmp.eq.s32.totalorder %s14, 3
    %p178 = por %p176, %p177
    %p179 = scmp.ne.s32.totalorder %s171, %s174
    %p180 = scmp.eq.s32.totalorder %s14, 0
    %p181 = por %p179, %p180
    %p182 = scmp.ne.s32.totalorder %s171, %s174
    %p183 = scmp.eq.s32.totalorder %s19, 3
    %p184 = por %p182, %p183
    %p185 = scmp.ne.s32.totalorder %s174, %s175
    %p186 = scmp.eq.s32.totalorder %s19, 0
    %p187 = por %p185, %p186
    %p188 = scmp.ne.s32.totalorder %s174, %s175
    %p189 = scmp.eq.s32.totalorder %s20, 3
    %p190 = por %p188, %p189
    %p192 = scmp.ne.s32.totalorder %s175, %s191
    %p193 = scmp.eq.s32.totalorder %s20, 0
    %p194 = por %p192, %p193
    %s195 = ssub.s32 %s21, %s33
    %s196 = ssub.s32 %s22, %s29
    %s197 = sor.u32 %s195, %s196
    %p198 = scmp.eq.s32.totalorder %s197, 0
    %s200 = sadd.s32 %s199, 1
    %s201 = scalar_select %p198, %s199, %s200
    %p204 = pneg %p198
    %p205 = scmp.eq.s32.totalorder %s14, 3
    %p206 = por %p204, %p205
    %p207 = scmp.ne.s32.totalorder %s199, %s202
    %p208 = scmp.eq.s32.totalorder %s14, 0
    %p209 = por %p207, %p208
    %p210 = scmp.ne.s32.totalorder %s199, %s202
    %p211 = scmp.eq.s32.totalorder %s19, 3
    %p212 = por %p210, %p211
    %p213 = scmp.ne.s32.totalorder %s202, %s203
    %p214 = scmp.eq.s32.totalorder %s19, 0
    %p215 = por %p213, %p214
    %p216 = scmp.ne.s32.totalorder %s202, %s203
    %p217 = scmp.eq.s32.totalorder %s20, 3
    %p218 = por %p216, %p217
    %p220 = scmp.ne.s32.totalorder %s203, %s219
    %p221 = scmp.eq.s32.totalorder %s20, 0
    %p222 = por %p220, %p221
    %p223 = scmp.le.s32.totalorder 1, %s14
    %p224 = scmp.lt.s32.totalorder %s14, 5
    %p225 = pnand %p223, %p224
    %p226 = pneg %p225
    // Predicated region
    $region9: #{_forward_jit.1} parent=5 // pred_check
      _
    $region10: #{_forward_jit.1} parent=5 // pred_check_branch
      %228 = sbr.rel (%p225) target = $region12
    $region11: #{_forward_jit.1} parent=5 // pred_region
      %s229 = ssub.s32 %s14, 1
      // Predicated region
      $region13: #{_forward_jit.1} parent=11 // pred_check
        %p230 = pneg %p75
      $region14: #{_forward_jit.1} parent=11 // pred_check_branch
        %232 = sbr.rel (%p230) target = $region16
      $region15: #{_forward_jit.1} parent=11 // pred_region
        _
      $region16: #{_forward_jit.1} parent=11 // pred_fallthru
        _
      // Predicated region
      $region17: #{_forward_jit.1} parent=11 // pred_check
        %p233 = pneg %p96
      $region18: #{_forward_jit.1} parent=11 // pred_check_branch
        %235 = sbr.rel (%p233) target = $region20
      $region19: #{_forward_jit.1} parent=11 // pred_region
        _
      $region20: #{_forward_jit.1} parent=11 // pred_fallthru
        _
      // Predicated region
      $region21: #{_forward_jit.1} parent=11 // pred_check
        %p236 = pneg %p117
      $region22: #{_forward_jit.1} parent=11 // pred_check_branch
        %238 = sbr.rel (%p236) target = $region24
      $region23: #{_forward_jit.1} parent=11 // pred_region
        _
      $region24: #{_forward_jit.1} parent=11 // pred_fallthru
        _
      // Predicated region
      $region25: #{_forward_jit.1} parent=11 // pred_check
        %p239 = pneg %p138
      $region26: #{_forward_jit.1} parent=11 // pred_check_branch
        %241 = sbr.rel (%p239) target = $region28
      $region27: #{_forward_jit.1} parent=11 // pred_region
        _
      $region28: #{_forward_jit.1} parent=11 // pred_fallthru
        _
      // Predicated region
      $region29: #{_forward_jit.1} parent=11 // pred_check
        %p242 = pneg %p159
      $region30: #{_forward_jit.1} parent=11 // pred_check_branch
        %244 = sbr.rel (%p242) target = $region32
      $region31: #{_forward_jit.1} parent=11 // pred_region
        _
      $region32: #{_forward_jit.1} parent=11 // pred_fallthru
        _
    $region12: #{_forward_jit.1} parent=5 // pred_fallthru
      _
    %p245 = scmp.lt.s32.totalorder %s14, 4
    // Predicated region
    $region33: #{_forward_jit.1} parent=5 // pred_check
      %p246 = pneg %p245
    $region34: #{_forward_jit.1} parent=5 // pred_check_branch
      %248 = sbr.rel (%p246) target = $region36
    $region35: #{_forward_jit.1} parent=5 // pred_region
      // Predicated region
      $region37: #{_forward_jit.1} parent=35 // pred_check
        %p249 = pneg %p48
      $region38: #{_forward_jit.1} parent=35 // pred_check_branch
        %251 = sbr.rel (%p249) target = $region40
      $region39: #{_forward_jit.1} parent=35 // pred_region
        %p252 = scmp.lt.s32.totalorder %s21, 1
        %s253 = scalar_select %p252, %s21, 1
        %p254 = scmp.lt.s32.totalorder %s22, 1
        %s255 = scalar_select %p254, %s22, 1
        %s256 = smul.addr %s255, 42
        %s257 = smul.addr %s253, 84
        %s258 = sadd.s32 %s256, %s257
        %s259 = smul.addr %s258, 8
        %s260 = scalar_lea.vmem %s0, %s259
      $region40: #{_forward_jit.1} parent=35 // pred_fallthru
        _
    $region36: #{_forward_jit.1} parent=5 // pred_fallthru
      _
    %p261 = scmp.le.s32.totalorder 1, %s14
    %p262 = scmp.lt.s32.totalorder %s14, 5
    %p263 = pnand %p261, %p262
    %p264 = pneg %p263
    // Predicated region
    $region41: #{_forward_jit.1} parent=5 // pred_check
      _
    $region42: #{_forward_jit.1} parent=5 // pred_check_branch
      %266 = sbr.rel (%p263) target = $region44
    $region43: #{_forward_jit.1} parent=5 // pred_region
      %s267 = ssub.s32 %s14, 1
      %p268 = scmp.lt.s32.totalorder %s23, 1
      %s269 = scalar_select %p268, %s23, 1
      %p270 = scmp.lt.s32.totalorder %s24, 1
      %s271 = scalar_select %p270, %s24, 1
      %s272 = smul.addr %s271, 42
      %s273 = smul.addr %s269, 84
      %s274 = sadd.s32 %s272, %s273
      %s275 = smul.addr %s274, 8
      %s276 = scalar_lea.vmem %s0, %s275
      %p277 = pneg %p54
      %p278 = pneg %p51
      %p279 = pneg %p75
      %p280 = pneg %p72
      %p281 = pneg %p96
      %p282 = pneg %p93
      %p283 = pneg %p117
      %p284 = pneg %p114
      %p285 = pneg %p138
      %p286 = pneg %p135
      %p287 = pneg %p159
      %p288 = pneg %p156
      %p289 = pneg %p187
      %p290 = pneg %p184
      %s291 = smul.u32 4, %s24
      %p292 = scmp.lt.s32.totalorder %s23, 1
      %s293 = scalar_select %p292, %s23, 1
      %p294 = scmp.lt.s32.totalorder %s291, 7
      %s295 = scalar_select %p294, %s291, 7
      %s296 = smul.addr %s293, 8
      %s297 = sadd.s32 %s295, %s296
      %s298 = smul.addr %s297, 8
      %s299 = scalar_lea.vmem %s6, %s298
      %p300 = pneg %p215
      %p301 = pneg %p212
      %s302 = smul.u32 4, %s24
      %p303 = scmp.lt.s32.totalorder %s23, 1
      %s304 = scalar_select %p303, %s23, 1
      %p305 = scmp.lt.s32.totalorder %s302, 7
      %s306 = scalar_select %p305, %s302, 7
      %s307 = smul.addr %s304, 8
      %s308 = sadd.s32 %s306, %s307
      %s309 = smul.addr %s308, 8
      %s310 = scalar_lea.vmem %s7, %s309
      %p311 = scmp.lt.s32.totalorder %s23, 1
      %s312 = scalar_select %p311, %s23, 1
      %p313 = scmp.lt.s32.totalorder %s24, 1
      %s314 = scalar_select %p313, %s24, 1
      %s315 = smul.addr %s314, 42
      %s316 = smul.addr %s312, 84
      %s317 = sadd.s32 %s315, %s316
      %s318 = smul.addr %s317, 8
      %s319 = scalar_lea.vmem %s0, %s318
      %s320 = smul.u32 4, %s24
      %p321 = scmp.lt.s32.totalorder %s23, 1
      %s322 = scalar_select %p321, %s23, 1
      %p323 = scmp.lt.s32.totalorder %s320, 7
      %s324 = scalar_select %p323, %s320, 7
      %s325 = smul.addr %s322, 8
      %s326 = sadd.s32 %s324, %s325
      %s327 = smul.addr %s326, 8
      %s328 = scalar_lea.vmem %s6, %s327
      %s329 = smul.u32 4, %s24
      %s330 = smul.u32 4, %s24
      %p331 = scmp.lt.s32.totalorder %s23, 1
      %s332 = scalar_select %p331, %s23, 1
      %p333 = scmp.lt.s32.totalorder %s330, 7
      %s334 = scalar_select %p333, %s330, 7
      %s335 = smul.addr %s332, 8
      %s336 = sadd.s32 %s334, %s335
      %s337 = smul.addr %s336, 8
      %s338 = scalar_lea.vmem %s7, %s337
      %s339 = smul.u32 4, %s24
      %s340 = smul.u32 %s24, 8
      %v341 = vld [vmem:[%s4] sm:$0x1]
      %v342 = vld [vmem:[%s5] sm:$0x1]
      %v343 = vld [vmem:[%s319] sm:$0xff]
      %v344 = vld [vmem:[%s319 + $0x8] sm:$0xff]
      %v345 = vld [vmem:[%s319 + $0x18] sm:$0xff]
      %v346 = vld [vmem:[%s319 + $0x20] sm:$0xff]
      %v347 = vld [vmem:[%s319 + $0x30] sm:$0xff]
      %v348 = vld [vmem:[%s319 + $0x38] sm:$0xff]
      %v349 = vld [vmem:[%s319 + $0x48] sm:$0xff]
      %v350 = vld [vmem:[%s319 + $0x50] sm:$0xff]
      %v351 = vld [vmem:[%s319 + $0x60] sm:$0xff]
      %v352 = vld [vmem:[%s319 + $0x68] sm:$0xff]
      %v353 = vld [vmem:[%s319 + $0x78] sm:$0xff]
      %v354 = vld [vmem:[%s319 + $0x80] sm:$0xff]
      %v355 = vld [vmem:[%s319 + $0x90] sm:$0xff]
      %v356 = vld [vmem:[%s319 + $0x98] sm:$0xff]
      %v357 = vld [vmem:[%s319 + $0xa8] sm:$0xff]
      %v358 = vld [vmem:[%s319 + $0xb0] sm:$0xff]
      %v359 = vld [vmem:[%s319 + $0xc0] sm:$0xff]
      %v360 = vld [vmem:[%s319 + $0xc8] sm:$0xff]
      %v361 = vld [vmem:[%s319 + $0xd8] sm:$0xff]
      %v362 = vld [vmem:[%s319 + $0xe0] sm:$0xff]
      %v363 = vld [vmem:[%s319 + $0xf0] sm:$0xff]
      %v364 = vld [vmem:[%s319 + $0xf8] sm:$0xff]
      %v365 = vld [vmem:[%s319 + $0x108] sm:$0xff]
      %v366 = vld [vmem:[%s319 + $0x110] sm:$0xff]
      %v367 = vld [vmem:[%s1] sm:$0xff]
      %v368 = vld [vmem:[%s1 + $0x8] sm:$0xff]
      %v369 = vld [vmem:[%s1 + $0x10] sm:$0xff]
      %v370 = vld [vmem:[%s1 + $0x18] sm:$0xff]
      %v371 = vld [vmem:[%s1 + $0x20] sm:$0xff]
      %v372 = vld [vmem:[%s1 + $0x28] sm:$0xff]
      %v373 = vld [vmem:[%s1 + $0x30] sm:$0xff]
      %v374 = vld [vmem:[%s1 + $0x38] sm:$0xff]
      %v375 = vld [vmem:[%s1 + $0x40] sm:$0xff]
      %v376 = vld [vmem:[%s1 + $0x48] sm:$0xff]
      %v377 = vld [vmem:[%s1 + $0x50] sm:$0xff]
      %v378 = vld [vmem:[%s1 + $0x58] sm:$0xff]
      %v379 = vld [vmem:[%s1 + $0x60] sm:$0xff]
      %v380 = vld [vmem:[%s1 + $0x68] sm:$0xff]
      %v381 = vld [vmem:[%s1 + $0x70] sm:$0xff]
      %v382 = vld [vmem:[%s1 + $0x78] sm:$0xff]
      %v383 = vld [vmem:[%s319 + $0x1] sm:$0xff]
      %v384 = vld [vmem:[%s319 + $0x9] sm:$0xff]
      %v385 = vld [vmem:[%s319 + $0x19] sm:$0xff]
      %v386 = vld [vmem:[%s319 + $0x21] sm:$0xff]
      %v387 = vld [vmem:[%s319 + $0x31] sm:$0xff]
      %v388 = vld [vmem:[%s319 + $0x39] sm:$0xff]
      %v389 = vld [vmem:[%s319 + $0x49] sm:$0xff]
      %v390 = vld [vmem:[%s319 + $0x51] sm:$0xff]
      %v391 = vld [vmem:[%s319 + $0x61] sm:$0xff]
      %v392 = vld [vmem:[%s319 + $0x69] sm:$0xff]
      %v393 = vld [vmem:[%s319 + $0x79] sm:$0xff]
      %v394 = vld [vmem:[%s319 + $0x81] sm:$0xff]
      %v395 = vld [vmem:[%s319 + $0x91] sm:$0xff]
      %v396 = vld [vmem:[%s319 + $0x99] sm:$0xff]
      %v397 = vld [vmem:[%s319 + $0xa9] sm:$0xff]
      %v398 = vld [vmem:[%s319 + $0xb1] sm:$0xff]
      %v399 = vld [vmem:[%s319 + $0xc1] sm:$0xff]
      %v400 = vld [vmem:[%s319 + $0xc9] sm:$0xff]
      %v401 = vld [vmem:[%s319 + $0xd9] sm:$0xff]
      %v402 = vld [vmem:[%s319 + $0xe1] sm:$0xff]
      %v403 = vld [vmem:[%s319 + $0xf1] sm:$0xff]
      %v404 = vld [vmem:[%s319 + $0xf9] sm:$0xff]
      %v405 = vld [vmem:[%s319 + $0x109] sm:$0xff]
      %v406 = vld [vmem:[%s319 + $0x111] sm:$0xff]
      %v407 = vld [vmem:[%s1 + $0x80] sm:$0xff]
      %v408 = vld [vmem:[%s1 + $0x88] sm:$0xff]
      %v409 = vld [vmem:[%s1 + $0x90] sm:$0xff]
      %v410 = vld [vmem:[%s1 + $0x98] sm:$0xff]
      %v411 = vld [vmem:[%s1 + $0xa0] sm:$0xff]
      %v412 = vld [vmem:[%s1 + $0xa8] sm:$0xff]
      %v413 = vld [vmem:[%s1 + $0xb0] sm:$0xff]
      %v414 = vld [vmem:[%s1 + $0xb8] sm:$0xff]
      %v415 = vld [vmem:[%s1 + $0xc0] sm:$0xff]
      %v416 = vld [vmem:[%s1 + $0xc8] sm:$0xff]
      %v417 = vld [vmem:[%s1 + $0xd0] sm:$0xff]
      %v418 = vld [vmem:[%s1 + $0xd8] sm:$0xff]
      %v419 = vld [vmem:[%s1 + $0xe0] sm:$0xff]
      %v420 = vld [vmem:[%s1 + $0xe8] sm:$0xff]
      %v421 = vld [vmem:[%s1 + $0xf0] sm:$0xff]
      %v422 = vld [vmem:[%s1 + $0xf8] sm:$0xff]
      %423 = vmatpush.msra.mxu0 %v422
      %424 = vmatpush.msra.mxu0 %v421
      %425 = vmatpush.msra.mxu0 %v420
      %426 = vmatpush.msra.mxu0 %v419
      %427 = vmatpush.msra.mxu0 %v418
      %428 = vmatpush.msra.mxu0 %v417
      %429 = vmatpush.msra.mxu0 %v416
      %430 = vmatpush.msra.mxu0 %v415
      %431 = vmatpush.msra.mxu0 %v414
      %432 = vmatpush.msra.mxu0 %v413
      %433 = vmatpush.msra.mxu0 %v412
      %434 = vmatpush.msra.mxu0 %v411
      %435 = vmatpush.msra.mxu0 %v410
      %436 = vmatpush.msra.mxu0 %v409
      %437 = vmatpush.msra.mxu0 %v408
      %438 = vmatpush.msra.mxu0 %v407
      %439 = vmatmul.f32.gmra.mxu0 %v383
      %v440 = vpop.f32.mrf.mxu0
      %v441 = vadd.f32 0.0, %v440
      %442 = vmatmul.f32.gmra.mxu0 %v384
      %v443 = vpop.f32.mrf.mxu0
      %v444 = vadd.f32 0.0, %v443
      %445 = vmatmul.f32.gmra.mxu0 %v385
      %v446 = vpop.f32.mrf.mxu0
      %v447 = vadd.f32 0.0, %v446
      %448 = vmatmul.f32.gmra.mxu0 %v386
      %v449 = vpop.f32.mrf.mxu0
      %v450 = vadd.f32 0.0, %v449
      %451 = vmatmul.f32.gmra.mxu0 %v387
      %v452 = vpop.f32.mrf.mxu0
      %v453 = vadd.f32 0.0, %v452
      %454 = vmatmul.f32.gmra.mxu0 %v388
      %v455 = vpop.f32.mrf.mxu0
      %v456 = vadd.f32 0.0, %v455
      %457 = vmatmul.f32.gmra.mxu0 %v389
      %v458 = vpop.f32.mrf.mxu0
      %v459 = vadd.f32 0.0, %v458
      %460 = vmatmul.f32.gmra.mxu0 %v390
      %v461 = vpop.f32.mrf.mxu0
      %v462 = vadd.f32 0.0, %v461
      %463 = vmatmul.f32.gmra.mxu0 %v391
      %v464 = vpop.f32.mrf.mxu0
      %v465 = vadd.f32 0.0, %v464
      %466 = vmatmul.f32.gmra.mxu0 %v392
      %v467 = vpop.f32.mrf.mxu0
      %v468 = vadd.f32 0.0, %v467
      %469 = vmatmul.f32.gmra.mxu0 %v393
      %v470 = vpop.f32.mrf.mxu0
      %v471 = vadd.f32 0.0, %v470
      %472 = vmatmul.f32.gmra.mxu0 %v394
      %v473 = vpop.f32.mrf.mxu0
      %v474 = vadd.f32 0.0, %v473
      %475 = vmatmul.f32.gmra.mxu0 %v395
      %v476 = vpop.f32.mrf.mxu0
      %v477 = vadd.f32 0.0, %v476
      %478 = vmatmul.f32.gmra.mxu0 %v396
      %v479 = vpop.f32.mrf.mxu0
      %v480 = vadd.f32 0.0, %v479
      %481 = vmatmul.f32.gmra.mxu0 %v397
      %v482 = vpop.f32.mrf.mxu0
      %v483 = vadd.f32 0.0, %v482
      %484 = vmatmul.f32.gmra.mxu0 %v398
      %v485 = vpop.f32.mrf.mxu0
      %v486 = vadd.f32 0.0, %v485
      %487 = vmatmul.f32.gmra.mxu0 %v399
      %v488 = vpop.f32.mrf.mxu0
      %v489 = vadd.f32 0.0, %v488
      %490 = vmatmul.f32.gmra.mxu0 %v400
      %v491 = vpop.f32.mrf.mxu0
      %v492 = vadd.f32 0.0, %v491
      %493 = vmatmul.f32.gmra.mxu0 %v401
      %v494 = vpop.f32.mrf.mxu0
      %v495 = vadd.f32 0.0, %v494
      %496 = vmatmul.f32.gmra.mxu0 %v402
      %v497 = vpop.f32.mrf.mxu0
      %v498 = vadd.f32 0.0, %v497
      %499 = vmatmul.f32.gmra.mxu0 %v403
      %v500 = vpop.f32.mrf.mxu0
      %v501 = vadd.f32 0.0, %v500
      %502 = vmatmul.f32.gmra.mxu0 %v404
      %v503 = vpop.f32.mrf.mxu0
      %v504 = vadd.f32 0.0, %v503
      %505 = vmatmul.f32.gmra.mxu0 %v405
      %v506 = vpop.f32.mrf.mxu0
      %v507 = vadd.f32 0.0, %v506
      %508 = vmatmul.f32.gmra.mxu0 %v406
      %v509 = vpop.f32.mrf.mxu0
      %v510 = vadd.f32 0.0, %v509
      %511 = vdwg.mxu0
      %512 = vmatpush.msra.mxu0 %v382
      %513 = vmatpush.msra.mxu0 %v381
      %514 = vmatpush.msra.mxu0 %v380
      %515 = vmatpush.msra.mxu0 %v379
      %516 = vmatpush.msra.mxu0 %v378
      %517 = vmatpush.msra.mxu0 %v377
      %518 = vmatpush.msra.mxu0 %v376
      %519 = vmatpush.msra.mxu0 %v375
      %520 = vmatpush.msra.mxu0 %v374
      %521 = vmatpush.msra.mxu0 %v373
      %522 = vmatpush.msra.mxu0 %v372
      %523 = vmatpush.msra.mxu0 %v371
      %524 = vmatpush.msra.mxu0 %v370
      %525 = vmatpush.msra.mxu0 %v369
      %526 = vmatpush.msra.mxu0 %v368
      %527 = vmatpush.msra.mxu0 %v367
      %528 = vmatmul.f32.gmra.mxu0 %v343
      %v529 = vpop.f32.mrf.mxu0
      %v530 = vadd.f32 %v441, %v529
      %531 = vmatmul.f32.gmra.mxu0 %v344
      %v532 = vpop.f32.mrf.mxu0
      %v533 = vadd.f32 %v444, %v532
      %534 = vmatmul.f32.gmra.mxu0 %v345
      %v535 = vpop.f32.mrf.mxu0
      %v536 = vadd.f32 %v447, %v535
      %537 = vmatmul.f32.gmra.mxu0 %v346
      %v538 = vpop.f32.mrf.mxu0
      %v539 = vadd.f32 %v450, %v538
      %540 = vmatmul.f32.gmra.mxu0 %v347
      %v541 = vpop.f32.mrf.mxu0
      %v542 = vadd.f32 %v453, %v541
      %543 = vmatmul.f32.gmra.mxu0 %v348
      %v544 = vpop.f32.mrf.mxu0
      %v545 = vadd.f32 %v456, %v544
      %546 = vmatmul.f32.gmra.mxu0 %v349
      %v547 = vpop.f32.mrf.mxu0
      %v548 = vadd.f32 %v459, %v547
      %549 = vmatmul.f32.gmra.mxu0 %v350
      %v550 = vpop.f32.mrf.mxu0
      %v551 = vadd.f32 %v462, %v550
      %552 = vmatmul.f32.gmra.mxu0 %v351
      %v553 = vpop.f32.mrf.mxu0
      %v554 = vadd.f32 %v465, %v553
      %555 = vmatmul.f32.gmra.mxu0 %v352
      %v556 = vpop.f32.mrf.mxu0
      %v557 = vadd.f32 %v468, %v556
      %558 = vmatmul.f32.gmra.mxu0 %v353
      %v559 = vpop.f32.mrf.mxu0
      %v560 = vadd.f32 %v471, %v559
      %561 = vmatmul.f32.gmra.mxu0 %v354
      %v562 = vpop.f32.mrf.mxu0
      %v563 = vadd.f32 %v474, %v562
      %564 = vmatmul.f32.gmra.mxu0 %v355
      %v565 = vpop.f32.mrf.mxu0
      %v566 = vadd.f32 %v477, %v565
      %567 = vmatmul.f32.gmra.mxu0 %v356
      %v568 = vpop.f32.mrf.mxu0
      %v569 = vadd.f32 %v480, %v568
      %570 = vmatmul.f32.gmra.mxu0 %v357
      %v571 = vpop.f32.mrf.mxu0
      %v572 = vadd.f32 %v483, %v571
      %573 = vmatmul.f32.gmra.mxu0 %v358
      %v574 = vpop.f32.mrf.mxu0
      %v575 = vadd.f32 %v486, %v574
      %576 = vmatmul.f32.gmra.mxu0 %v359
      %v577 = vpop.f32.mrf.mxu0
      %v578 = vadd.f32 %v489, %v577
      %579 = vmatmul.f32.gmra.mxu0 %v360
      %v580 = vpop.f32.mrf.mxu0
      %v581 = vadd.f32 %v492, %v580
      %582 = vmatmul.f32.gmra.mxu0 %v361
      %v583 = vpop.f32.mrf.mxu0
      %v584 = vadd.f32 %v495, %v583
      %585 = vmatmul.f32.gmra.mxu0 %v362
      %v586 = vpop.f32.mrf.mxu0
      %v587 = vadd.f32 %v498, %v586
      %588 = vmatmul.f32.gmra.mxu0 %v363
      %v589 = vpop.f32.mrf.mxu0
      %v590 = vadd.f32 %v501, %v589
      %591 = vmatmul.f32.gmra.mxu0 %v364
      %v592 = vpop.f32.mrf.mxu0
      %v593 = vadd.f32 %v504, %v592
      %594 = vmatmul.f32.gmra.mxu0 %v365
      %v595 = vpop.f32.mrf.mxu0
      %v596 = vadd.f32 %v507, %v595
      %597 = vmatmul.f32.gmra.mxu0 %v366
      %v598 = vpop.f32.mrf.mxu0
      %v599 = vadd.f32 %v510, %v598
      %600 = vdwg.mxu0
      %v601 = vld [vmem:[%s319 + $0x2] sm:$0xff]
      %v602 = vld [vmem:[%s319 + $0xa] sm:$0xff]
      %v603 = vld [vmem:[%s319 + $0x1a] sm:$0xff]
      %v604 = vld [vmem:[%s319 + $0x22] sm:$0xff]
      %v605 = vld [vmem:[%s319 + $0x32] sm:$0xff]
      %v606 = vld [vmem:[%s319 + $0x3a] sm:$0xff]
      %v607 = vld [vmem:[%s319 + $0x4a] sm:$0xff]
      %v608 = vld [vmem:[%s319 + $0x52] sm:$0xff]
      %v609 = vld [vmem:[%s319 + $0x62] sm:$0xff]
      %v610 = vld [vmem:[%s319 + $0x6a] sm:$0xff]
      %v611 = vld [vmem:[%s319 + $0x7a] sm:$0xff]
      %v612 = vld [vmem:[%s319 + $0x82] sm:$0xff]
      %v613 = vld [vmem:[%s319 + $0x92] sm:$0xff]
      %v614 = vld [vmem:[%s319 + $0x9a] sm:$0xff]
      %v615 = vld [vmem:[%s319 + $0xaa] sm:$0xff]
      %v616 = vld [vmem:[%s319 + $0xb2] sm:$0xff]
      %v617 = vld [vmem:[%s319 + $0xc2] sm:$0xff]
      %v618 = vld [vmem:[%s319 + $0xca] sm:$0xff]
      %v619 = vld [vmem:[%s319 + $0xda] sm:$0xff]
      %v620 = vld [vmem:[%s319 + $0xe2] sm:$0xff]
      %v621 = vld [vmem:[%s319 + $0xf2] sm:$0xff]
      %v622 = vld [vmem:[%s319 + $0xfa] sm:$0xff]
      %v623 = vld [vmem:[%s319 + $0x10a] sm:$0xff]
      %v624 = vld [vmem:[%s319 + $0x112] sm:$0xff]
      %v625 = vld [vmem:[%s1 + $0x100] sm:$0xff]
      %v626 = vld [vmem:[%s1 + $0x108] sm:$0xff]
      %v627 = vld [vmem:[%s1 + $0x110] sm:$0xff]
      %v628 = vld [vmem:[%s1 + $0x118] sm:$0xff]
      %v629 = vld [vmem:[%s1 + $0x120] sm:$0xff]
      %v630 = vld [vmem:[%s1 + $0x128] sm:$0xff]
      %v631 = vld [vmem:[%s1 + $0x130] sm:$0xff]
      %v632 = vld [vmem:[%s1 + $0x138] sm:$0xff]
      %v633 = vld [vmem:[%s1 + $0x140] sm:$0xff]
      %v634 = vld [vmem:[%s1 + $0x148] sm:$0xff]
      %v635 = vld [vmem:[%s1 + $0x150] sm:$0xff]
      %v636 = vld [vmem:[%s1 + $0x158] sm:$0xff]
      %v637 = vld [vmem:[%s1 + $0x160] sm:$0xff]
      %v638 = vld [vmem:[%s1 + $0x168] sm:$0xff]
      %v639 = vld [vmem:[%s1 + $0x170] sm:$0xff]
      %v640 = vld [vmem:[%s1 + $0x178] sm:$0xff]
      %641 = vmatpush.msra.mxu0 %v640
      %642 = vmatpush.msra.mxu0 %v639
      %643 = vmatpush.msra.mxu0 %v638
      %644 = vmatpush.msra.mxu0 %v637
      %645 = vmatpush.msra.mxu0 %v636
      %646 = vmatpush.msra.mxu0 %v635
      %647 = vmatpush.msra.mxu0 %v634
      %648 = vmatpush.msra.mxu0 %v633
      %649 = vmatpush.msra.mxu0 %v632
      %650 = vmatpush.msra.mxu0 %v631
      %651 = vmatpush.msra.mxu0 %v630
      %652 = vmatpush.msra.mxu0 %v629
      %653 = vmatpush.msra.mxu0 %v628
      %654 = vmatpush.msra.mxu0 %v627
      %655 = vmatpush.msra.mxu0 %v626
      %656 = vmatpush.msra.mxu0 %v625
      %657 = vmatmul.f32.gmra.mxu0 %v601
      %v658 = vpop.f32.mrf.mxu0
      %v659 = vadd.f32 0.0, %v658
      %660 = vmatmul.f32.gmra.mxu0 %v602
      %v661 = vpop.f32.mrf.mxu0
      %v662 = vadd.f32 0.0, %v661
      %663 = vmatmul.f32.gmra.mxu0 %v603
      %v664 = vpop.f32.mrf.mxu0
      %v665 = vadd.f32 0.0, %v664
      %666 = vmatmul.f32.gmra.mxu0 %v604
      %v667 = vpop.f32.mrf.mxu0
      %v668 = vadd.f32 0.0, %v667
      %669 = vmatmul.f32.gmra.mxu0 %v605
      %v670 = vpop.f32.mrf.mxu0
      %v671 = vadd.f32 0.0, %v670
      %672 = vmatmul.f32.gmra.mxu0 %v606
      %v673 = vpop.f32.mrf.mxu0
      %v674 = vadd.f32 0.0, %v673
      %675 = vmatmul.f32.gmra.mxu0 %v607
      %v676 = vpop.f32.mrf.mxu0
      %v677 = vadd.f32 0.0, %v676
      %678 = vmatmul.f32.gmra.mxu0 %v608
      %v679 = vpop.f32.mrf.mxu0
      %v680 = vadd.f32 0.0, %v679
      %681 = vmatmul.f32.gmra.mxu0 %v609
      %v682 = vpop.f32.mrf.mxu0
      %v683 = vadd.f32 0.0, %v682
      %684 = vmatmul.f32.gmra.mxu0 %v610
      %v685 = vpop.f32.mrf.mxu0
      %v686 = vadd.f32 0.0, %v685
      %687 = vmatmul.f32.gmra.mxu0 %v611
      %v688 = vpop.f32.mrf.mxu0
      %v689 = vadd.f32 0.0, %v688
      %690 = vmatmul.f32.gmra.mxu0 %v612
      %v691 = vpop.f32.mrf.mxu0
      %v692 = vadd.f32 0.0, %v691
      %693 = vmatmul.f32.gmra.mxu0 %v613
      %v694 = vpop.f32.mrf.mxu0
      %v695 = vadd.f32 0.0, %v694
      %696 = vmatmul.f32.gmra.mxu0 %v614
      %v697 = vpop.f32.mrf.mxu0
      %v698 = vadd.f32 0.0, %v697
      %699 = vmatmul.f32.gmra.mxu0 %v615
      %v700 = vpop.f32.mrf.mxu0
      %v701 = vadd.f32 0.0, %v700
      %702 = vmatmul.f32.gmra.mxu0 %v616
      %v703 = vpop.f32.mrf.mxu0
      %v704 = vadd.f32 0.0, %v703
      %705 = vmatmul.f32.gmra.mxu0 %v617
      %v706 = vpop.f32.mrf.mxu0
      %v707 = vadd.f32 0.0, %v706
      %708 = vmatmul.f32.gmra.mxu0 %v618
      %v709 = vpop.f32.mrf.mxu0
      %v710 = vadd.f32 0.0, %v709
      %711 = vmatmul.f32.gmra.mxu0 %v619
      %v712 = vpop.f32.mrf.mxu0
      %v713 = vadd.f32 0.0, %v712
      %714 = vmatmul.f32.gmra.mxu0 %v620
      %v715 = vpop.f32.mrf.mxu0
      %v716 = vadd.f32 0.0, %v715
      %717 = vmatmul.f32.gmra.mxu0 %v621
      %v718 = vpop.f32.mrf.mxu0
      %v719 = vadd.f32 0.0, %v718
      %720 = vmatmul.f32.gmra.mxu0 %v622
      %v721 = vpop.f32.mrf.mxu0
      %v722 = vadd.f32 0.0, %v721
      %723 = vmatmul.f32.gmra.mxu0 %v623
      %v724 = vpop.f32.mrf.mxu0
      %v725 = vadd.f32 0.0, %v724
      %726 = vmatmul.f32.gmra.mxu0 %v624
      %v727 = vpop.f32.mrf.mxu0
      %v728 = vadd.f32 0.0, %v727
      %729 = vdwg.mxu0
      %v730 = vadd.f32 %v530, %v659
      %v731 = vadd.f32 %v533, %v662
      %v732 = vadd.f32 %v536, %v665
      %v733 = vadd.f32 %v539, %v668
      %v734 = vadd.f32 %v542, %v671
      %v735 = vadd.f32 %v545, %v674
      %v736 = vadd.f32 %v548, %v677
      %v737 = vadd.f32 %v551, %v680
      %v738 = vadd.f32 %v554, %v683
      %v739 = vadd.f32 %v557, %v686
      %v740 = vadd.f32 %v560, %v689
      %v741 = vadd.f32 %v563, %v692
      %v742 = vadd.f32 %v566, %v695
      %v743 = vadd.f32 %v569, %v698
      %v744 = vadd.f32 %v572, %v701
      %v745 = vadd.f32 %v575, %v704
      %v746 = vadd.f32 %v578, %v707
      %v747 = vadd.f32 %v581, %v710
      %v748 = vadd.f32 %v584, %v713
      %v749 = vadd.f32 %v587, %v716
      %v750 = vadd.f32 %v590, %v719
      %v751 = vadd.f32 %v593, %v722
      %v752 = vadd.f32 %v596, %v725
      %v753 = vadd.f32 %v599, %v728
      %s754 = scalar_lea.vmem %s319, 24
      %v755 = vld [vmem:[%s754] sm:$0xff]
      %v756 = vld [vmem:[%s754 + $0x8] sm:$0xff]
      %v757 = vld [vmem:[%s754 + $0x18] sm:$0xff]
      %v758 = vld [vmem:[%s754 + $0x20] sm:$0xff]
      %v759 = vld [vmem:[%s754 + $0x30] sm:$0xff]
      %v760 = vld [vmem:[%s754 + $0x38] sm:$0xff]
      %v761 = vld [vmem:[%s754 + $0x48] sm:$0xff]
      %v762 = vld [vmem:[%s754 + $0x50] sm:$0xff]
      %v763 = vld [vmem:[%s754 + $0x60] sm:$0xff]
      %v764 = vld [vmem:[%s754 + $0x68] sm:$0xff]
      %v765 = vld [vmem:[%s754 + $0x78] sm:$0xff]
      %v766 = vld [vmem:[%s754 + $0x80] sm:$0xff]
      %v767 = vld [vmem:[%s754 + $0x90] sm:$0xff]
      %v768 = vld [vmem:[%s754 + $0x98] sm:$0xff]
      %v769 = vld [vmem:[%s754 + $0xa8] sm:$0xff]
      %v770 = vld [vmem:[%s754 + $0xb0] sm:$0xff]
      %v771 = vld [vmem:[%s754 + $0xc0] sm:$0xff]
      %v772 = vld [vmem:[%s754 + $0xc8] sm:$0xff]
      %v773 = vld [vmem:[%s754 + $0xd8] sm:$0xff]
      %v774 = vld [vmem:[%s754 + $0xe0] sm:$0xff]
      %v775 = vld [vmem:[%s754 + $0xf0] sm:$0xff]
      %v776 = vld [vmem:[%s754 + $0xf8] sm:$0xff]
      %v777 = vld [vmem:[%s754 + $0x108] sm:$0xff]
      %v778 = vld [vmem:[%s754 + $0x110] sm:$0xff]
      %v779 = vld [vmem:[%s1 + $0x180] sm:$0xff]
      %v780 = vld [vmem:[%s1 + $0x188] sm:$0xff]
      %v781 = vld [vmem:[%s1 + $0x190] sm:$0xff]
      %v782 = vld [vmem:[%s1 + $0x198] sm:$0xff]
      %v783 = vld [vmem:[%s1 + $0x1a0] sm:$0xff]
      %v784 = vld [vmem:[%s1 + $0x1a8] sm:$0xff]
      %v785 = vld [vmem:[%s1 + $0x1b0] sm:$0xff]
      %v786 = vld [vmem:[%s1 + $0x1b8] sm:$0xff]
      %v787 = vld [vmem:[%s1 + $0x1c0] sm:$0xff]
      %v788 = vld [vmem:[%s1 + $0x1c8] sm:$0xff]
      %v789 = vld [vmem:[%s1 + $0x1d0] sm:$0xff]
      %v790 = vld [vmem:[%s1 + $0x1d8] sm:$0xff]
      %v791 = vld [vmem:[%s1 + $0x1e0] sm:$0xff]
      %v792 = vld [vmem:[%s1 + $0x1e8] sm:$0xff]
      %v793 = vld [vmem:[%s1 + $0x1f0] sm:$0xff]
      %v794 = vld [vmem:[%s1 + $0x1f8] sm:$0xff]
      %795 = vmatpush.msra.mxu0 %v794
      %796 = vmatpush.msra.mxu0 %v793
      %797 = vmatpush.msra.mxu0 %v792
      %798 = vmatpush.msra.mxu0 %v791
      %799 = vmatpush.msra.mxu0 %v790
      %800 = vmatpush.msra.mxu0 %v789
      %801 = vmatpush.msra.mxu0 %v788
      %802 = vmatpush.msra.mxu0 %v787
      %803 = vmatpush.msra.mxu0 %v786
      %804 = vmatpush.msra.mxu0 %v785
      %805 = vmatpush.msra.mxu0 %v784
      %806 = vmatpush.msra.mxu0 %v783
      %807 = vmatpush.msra.mxu0 %v782
      %808 = vmatpush.msra.mxu0 %v781
      %809 = vmatpush.msra.mxu0 %v780
      %810 = vmatpush.msra.mxu0 %v779
      %811 = vmatmul.f32.gmra.mxu0 %v755
      %v812 = vpop.f32.mrf.mxu0
      %v813 = vadd.f32 0.0, %v812
      %814 = vmatmul.f32.gmra.mxu0 %v756
      %v815 = vpop.f32.mrf.mxu0
      %v816 = vadd.f32 0.0, %v815
      %817 = vmatmul.f32.gmra.mxu0 %v757
      %v818 = vpop.f32.mrf.mxu0
      %v819 = vadd.f32 0.0, %v818
      %820 = vmatmul.f32.gmra.mxu0 %v758
      %v821 = vpop.f32.mrf.mxu0
      %v822 = vadd.f32 0.0, %v821
      %823 = vmatmul.f32.gmra.mxu0 %v759
      %v824 = vpop.f32.mrf.mxu0
      %v825 = vadd.f32 0.0, %v824
      %826 = vmatmul.f32.gmra.mxu0 %v760
      %v827 = vpop.f32.mrf.mxu0
      %v828 = vadd.f32 0.0, %v827
      %829 = vmatmul.f32.gmra.mxu0 %v761
      %v830 = vpop.f32.mrf.mxu0
      %v831 = vadd.f32 0.0, %v830
      %832 = vmatmul.f32.gmra.mxu0 %v762
      %v833 = vpop.f32.mrf.mxu0
      %v834 = vadd.f32 0.0, %v833
      %835 = vmatmul.f32.gmra.mxu0 %v763
      %v836 = vpop.f32.mrf.mxu0
      %v837 = vadd.f32 0.0, %v836
      %838 = vmatmul.f32.gmra.mxu0 %v764
      %v839 = vpop.f32.mrf.mxu0
      %v840 = vadd.f32 0.0, %v839
      %841 = vmatmul.f32.gmra.mxu0 %v765
      %v842 = vpop.f32.mrf.mxu0
      %v843 = vadd.f32 0.0, %v842
      %844 = vmatmul.f32.gmra.mxu0 %v766
      %v845 = vpop.f32.mrf.mxu0
      %v846 = vadd.f32 0.0, %v845
      %847 = vmatmul.f32.gmra.mxu0 %v767
      %v848 = vpop.f32.mrf.mxu0
      %v849 = vadd.f32 0.0, %v848
      %850 = vmatmul.f32.gmra.mxu0 %v768
      %v851 = vpop.f32.mrf.mxu0
      %v852 = vadd.f32 0.0, %v851
      %853 = vmatmul.f32.gmra.mxu0 %v769
      %v854 = vpop.f32.mrf.mxu0
      %v855 = vadd.f32 0.0, %v854
      %856 = vmatmul.f32.gmra.mxu0 %v770
      %v857 = vpop.f32.mrf.mxu0
      %v858 = vadd.f32 0.0, %v857
      %859 = vmatmul.f32.gmra.mxu0 %v771
      %v860 = vpop.f32.mrf.mxu0
      %v861 = vadd.f32 0.0, %v860
      %862 = vmatmul.f32.gmra.mxu0 %v772
      %v863 = vpop.f32.mrf.mxu0
      %v864 = vadd.f32 0.0, %v863
      %865 = vmatmul.f32.gmra.mxu0 %v773
      %v866 = vpop.f32.mrf.mxu0
      %v867 = vadd.f32 0.0, %v866
      %868 = vmatmul.f32.gmra.mxu0 %v774
      %v869 = vpop.f32.mrf.mxu0
      %v870 = vadd.f32 0.0, %v869
      %871 = vmatmul.f32.gmra.mxu0 %v775
      %v872 = vpop.f32.mrf.mxu0
      %v873 = vadd.f32 0.0, %v872
      %874 = vmatmul.f32.gmra.mxu0 %v776
      %v875 = vpop.f32.mrf.mxu0
      %v876 = vadd.f32 0.0, %v875
      %877 = vmatmul.f32.gmra.mxu0 %v777
      %v878 = vpop.f32.mrf.mxu0
      %v879 = vadd.f32 0.0, %v878
      %880 = vmatmul.f32.gmra.mxu0 %v778
      %v881 = vpop.f32.mrf.mxu0
      %v882 = vadd.f32 0.0, %v881
      %883 = vdwg.mxu0
      %v884 = vadd.f32 %v730, %v813
      %v885 = vadd.f32 %v731, %v816
      %v886 = vadd.f32 %v732, %v819
      %v887 = vadd.f32 %v733, %v822
      %v888 = vadd.f32 %v734, %v825
      %v889 = vadd.f32 %v735, %v828
      %v890 = vadd.f32 %v736, %v831
      %v891 = vadd.f32 %v737, %v834
      %v892 = vadd.f32 %v738, %v837
      %v893 = vadd.f32 %v739, %v840
      %v894 = vadd.f32 %v740, %v843
      %v895 = vadd.f32 %v741, %v846
      %v896 = vadd.f32 %v742, %v849
      %v897 = vadd.f32 %v743, %v852
      %v898 = vadd.f32 %v744, %v855
      %v899 = vadd.f32 %v745, %v858
      %v900 = vadd.f32 %v746, %v861
      %v901 = vadd.f32 %v747, %v864
      %v902 = vadd.f32 %v748, %v867
      %v903 = vadd.f32 %v749, %v870
      %v904 = vadd.f32 %v750, %v873
      %v905 = vadd.f32 %v751, %v876
      %v906 = vadd.f32 %v752, %v879
      %v907 = vadd.f32 %v753, %v882
      %v908 = vld [vmem:[%s754 + $0x1] sm:$0xff]
      %v909 = vld [vmem:[%s754 + $0x9] sm:$0xff]
      %v910 = vld [vmem:[%s754 + $0x19] sm:$0xff]
      %v911 = vld [vmem:[%s754 + $0x21] sm:$0xff]
      %v912 = vld [vmem:[%s754 + $0x31] sm:$0xff]
      %v913 = vld [vmem:[%s754 + $0x39] sm:$0xff]
      %v914 = vld [vmem:[%s754 + $0x49] sm:$0xff]
      %v915 = vld [vmem:[%s754 + $0x51] sm:$0xff]
      %v916 = vld [vmem:[%s754 + $0x61] sm:$0xff]
      %v917 = vld [vmem:[%s754 + $0x69] sm:$0xff]
      %v918 = vld [vmem:[%s754 + $0x79] sm:$0xff]
      %v919 = vld [vmem:[%s754 + $0x81] sm:$0xff]
      %v920 = vld [vmem:[%s754 + $0x91] sm:$0xff]
      %v921 = vld [vmem:[%s754 + $0x99] sm:$0xff]
      %v922 = vld [vmem:[%s754 + $0xa9] sm:$0xff]
      %v923 = vld [vmem:[%s754 + $0xb1] sm:$0xff]
      %v924 = vld [vmem:[%s754 + $0xc1] sm:$0xff]
      %v925 = vld [vmem:[%s754 + $0xc9] sm:$0xff]
      %v926 = vld [vmem:[%s754 + $0xd9] sm:$0xff]
      %v927 = vld [vmem:[%s754 + $0xe1] sm:$0xff]
      %v928 = vld [vmem:[%s754 + $0xf1] sm:$0xff]
      %v929 = vld [vmem:[%s754 + $0xf9] sm:$0xff]
      %v930 = vld [vmem:[%s754 + $0x109] sm:$0xff]
      %v931 = vld [vmem:[%s754 + $0x111] sm:$0xff]
      %v932 = vld [vmem:[%s1 + $0x200] sm:$0xff]
      %v933 = vld [vmem:[%s1 + $0x208] sm:$0xff]
      %v934 = vld [vmem:[%s1 + $0x210] sm:$0xff]
      %v935 = vld [vmem:[%s1 + $0x218] sm:$0xff]
      %v936 = vld [vmem:[%s1 + $0x220] sm:$0xff]
      %v937 = vld [vmem:[%s1 + $0x228] sm:$0xff]
      %v938 = vld [vmem:[%s1 + $0x230] sm:$0xff]
      %v939 = vld [vmem:[%s1 + $0x238] sm:$0xff]
      %v940 = vld [vmem:[%s1 + $0x240] sm:$0xff]
      %v941 = vld [vmem:[%s1 + $0x248] sm:$0xff]
      %v942 = vld [vmem:[%s1 + $0x250] sm:$0xff]
      %v943 = vld [vmem:[%s1 + $0x258] sm:$0xff]
      %v944 = vld [vmem:[%s1 + $0x260] sm:$0xff]
      %v945 = vld [vmem:[%s1 + $0x268] sm:$0xff]
      %v946 = vld [vmem:[%s1 + $0x270] sm:$0xff]
      %v947 = vld [vmem:[%s1 + $0x278] sm:$0xff]
      %948 = vmatpush.msra.mxu0 %v947
      %949 = vmatpush.msra.mxu0 %v946
      %950 = vmatpush.msra.mxu0 %v945
      %951 = vmatpush.msra.mxu0 %v944
      %952 = vmatpush.msra.mxu0 %v943
      %953 = vmatpush.msra.mxu0 %v942
      %954 = vmatpush.msra.mxu0 %v941
      %955 = vmatpush.msra.mxu0 %v940
      %956 = vmatpush.msra.mxu0 %v939
      %957 = vmatpush.msra.mxu0 %v938
      %958 = vmatpush.msra.mxu0 %v937
      %959 = vmatpush.msra.mxu0 %v936
      %960 = vmatpush.msra.mxu0 %v935
      %961 = vmatpush.msra.mxu0 %v934
      %962 = vmatpush.msra.mxu0 %v933
      %963 = vmatpush.msra.mxu0 %v932
      %964 = vmatmul.f32.gmra.mxu0 %v908
      %v965 = vpop.f32.mrf.mxu0
      %v966 = vadd.f32 0.0, %v965
      %967 = vmatmul.f32.gmra.mxu0 %v909
      %v968 = vpop.f32.mrf.mxu0
      %v969 = vadd.f32 0.0, %v968
      %970 = vmatmul.f32.gmra.mxu0 %v910
      %v971 = vpop.f32.mrf.mxu0
      %v972 = vadd.f32 0.0, %v971
      %973 = vmatmul.f32.gmra.mxu0 %v911
      %v974 = vpop.f32.mrf.mxu0
      %v975 = vadd.f32 0.0, %v974
      %976 = vmatmul.f32.gmra.mxu0 %v912
      %v977 = vpop.f32.mrf.mxu0
      %v978 = vadd.f32 0.0, %v977
      %979 = vmatmul.f32.gmra.mxu0 %v913
      %v980 = vpop.f32.mrf.mxu0
      %v981 = vadd.f32 0.0, %v980
      %982 = vmatmul.f32.gmra.mxu0 %v914
      %v983 = vpop.f32.mrf.mxu0
      %v984 = vadd.f32 0.0, %v983
      %985 = vmatmul.f32.gmra.mxu0 %v915
      %v986 = vpop.f32.mrf.mxu0
      %v987 = vadd.f32 0.0, %v986
      %988 = vmatmul.f32.gmra.mxu0 %v916
      %v989 = vpop.f32.mrf.mxu0
      %v990 = vadd.f32 0.0, %v989
      %991 = vmatmul.f32.gmra.mxu0 %v917
      %v992 = vpop.f32.mrf.mxu0
      %v993 = vadd.f32 0.0, %v992
      %994 = vmatmul.f32.gmra.mxu0 %v918
      %v995 = vpop.f32.mrf.mxu0
      %v996 = vadd.f32 0.0, %v995
      %997 = vmatmul.f32.gmra.mxu0 %v919
      %v998 = vpop.f32.mrf.mxu0
      %v999 = vadd.f32 0.0, %v998
      %1000 = vmatmul.f32.gmra.mxu0 %v920
      %v1001 = vpop.f32.mrf.mxu0
      %v1002 = vadd.f32 0.0, %v1001
      %1003 = vmatmul.f32.gmra.mxu0 %v921
      %v1004 = vpop.f32.mrf.mxu0
      %v1005 = vadd.f32 0.0, %v1004
      %1006 = vmatmul.f32.gmra.mxu0 %v922
      %v1007 = vpop.f32.mrf.mxu0
      %v1008 = vadd.f32 0.0, %v1007
      %1009 = vmatmul.f32.gmra.mxu0 %v923
      %v1010 = vpop.f32.mrf.mxu0
      %v1011 = vadd.f32 0.0, %v1010
      %1012 = vmatmul.f32.gmra.mxu0 %v924
      %v1013 = vpop.f32.mrf.mxu0
      %v1014 = vadd.f32 0.0, %v1013
      %1015 = vmatmul.f32.gmra.mxu0 %v925
      %v1016 = vpop.f32.mrf.mxu0
      %v1017 = vadd.f32 0.0, %v1016
      %1018 = vmatmul.f32.gmra.mxu0 %v926
      %v1019 = vpop.f32.mrf.mxu0
      %v1020 = vadd.f32 0.0, %v1019
      %1021 = vmatmul.f32.gmra.mxu0 %v927
      %v1022 = vpop.f32.mrf.mxu0
      %v1023 = vadd.f32 0.0, %v1022
      %1024 = vmatmul.f32.gmra.mxu0 %v928
      %v1025 = vpop.f32.mrf.mxu0
      %v1026 = vadd.f32 0.0, %v1025
      %1027 = vmatmul.f32.gmra.mxu0 %v929
      %v1028 = vpop.f32.mrf.mxu0
      %v1029 = vadd.f32 0.0, %v1028
      %1030 = vmatmul.f32.gmra.mxu0 %v930
      %v1031 = vpop.f32.mrf.mxu0
      %v1032 = vadd.f32 0.0, %v1031
      %1033 = vmatmul.f32.gmra.mxu0 %v931
      %v1034 = vpop.f32.mrf.mxu0
      %v1035 = vadd.f32 0.0, %v1034
      %1036 = vdwg.mxu0
      %v1037 = vadd.f32 %v884, %v966
      %v1038 = vadd.f32 %v885, %v969
      %v1039 = vadd.f32 %v886, %v972
      %v1040 = vadd.f32 %v887, %v975
      %v1041 = vadd.f32 %v888, %v978
      %v1042 = vadd.f32 %v889, %v981
      %v1043 = vadd.f32 %v890, %v984
      %v1044 = vadd.f32 %v891, %v987
      %v1045 = vadd.f32 %v892, %v990
      %v1046 = vadd.f32 %v893, %v993
      %v1047 = vadd.f32 %v894, %v996
      %v1048 = vadd.f32 %v895, %v999
      %v1049 = vadd.f32 %v896, %v1002
      %v1050 = vadd.f32 %v897, %v1005
      %v1051 = vadd.f32 %v898, %v1008
      %v1052 = vadd.f32 %v899, %v1011
      %v1053 = vadd.f32 %v900, %v1014
      %v1054 = vadd.f32 %v901, %v1017
      %v1055 = vadd.f32 %v902, %v1020
      %v1056 = vadd.f32 %v903, %v1023
      %v1057 = vadd.f32 %v904, %v1026
      %v1058 = vadd.f32 %v905, %v1029
      %v1059 = vadd.f32 %v906, %v1032
      %v1060 = vadd.f32 %v907, %v1035
      %v1061 = vld [vmem:[%s754 + $0x2] sm:$0xff]
      %v1062 = vld [vmem:[%s754 + $0xa] sm:$0xff]
      %v1063 = vld [vmem:[%s754 + $0x1a] sm:$0xff]
      %v1064 = vld [vmem:[%s754 + $0x22] sm:$0xff]
      %v1065 = vld [vmem:[%s754 + $0x32] sm:$0xff]
      %v1066 = vld [vmem:[%s754 + $0x3a] sm:$0xff]
      %v1067 = vld [vmem:[%s754 + $0x4a] sm:$0xff]
      %v1068 = vld [vmem:[%s754 + $0x52] sm:$0xff]
      %v1069 = vld [vmem:[%s754 + $0x62] sm:$0xff]
      %v1070 = vld [vmem:[%s754 + $0x6a] sm:$0xff]
      %v1071 = vld [vmem:[%s754 + $0x7a] sm:$0xff]
      %v1072 = vld [vmem:[%s754 + $0x82] sm:$0xff]
      %v1073 = vld [vmem:[%s754 + $0x92] sm:$0xff]
      %v1074 = vld [vmem:[%s754 + $0x9a] sm:$0xff]
      %v1075 = vld [vmem:[%s754 + $0xaa] sm:$0xff]
      %v1076 = vld [vmem:[%s754 + $0xb2] sm:$0xff]
      %v1077 = vld [vmem:[%s754 + $0xc2] sm:$0xff]
      %v1078 = vld [vmem:[%s754 + $0xca] sm:$0xff]
      %v1079 = vld [vmem:[%s754 + $0xda] sm:$0xff]
      %v1080 = vld [vmem:[%s754 + $0xe2] sm:$0xff]
      %v1081 = vld [vmem:[%s754 + $0xf2] sm:$0xff]
      %v1082 = vld [vmem:[%s754 + $0xfa] sm:$0xff]
      %v1083 = vld [vmem:[%s754 + $0x10a] sm:$0xff]
      %v1084 = vld [vmem:[%s754 + $0x112] sm:$0xff]
      %v1085 = vld [vmem:[%s1 + $0x280] sm:$0xff]
      %v1086 = vld [vmem:[%s1 + $0x288] sm:$0xff]
      %v1087 = vld [vmem:[%s1 + $0x290] sm:$0xff]
      %v1088 = vld [vmem:[%s1 + $0x298] sm:$0xff]
      %v1089 = vld [vmem:[%s1 + $0x2a0] sm:$0xff]
      %v1090 = vld [vmem:[%s1 + $0x2a8] sm:$0xff]
      %v1091 = vld [vmem:[%s1 + $0x2b0] sm:$0xff]
      %v1092 = vld [vmem:[%s1 + $0x2b8] sm:$0xff]
      %v1093 = vld [vmem:[%s1 + $0x2c0] sm:$0xff]
      %v1094 = vld [vmem:[%s1 + $0x2c8] sm:$0xff]
      %v1095 = vld [vmem:[%s1 + $0x2d0] sm:$0xff]
      %v1096 = vld [vmem:[%s1 + $0x2d8] sm:$0xff]
      %v1097 = vld [vmem:[%s1 + $0x2e0] sm:$0xff]
      %v1098 = vld [vmem:[%s1 + $0x2e8] sm:$0xff]
      %v1099 = vld [vmem:[%s1 + $0x2f0] sm:$0xff]
      %v1100 = vld [vmem:[%s1 + $0x2f8] sm:$0xff]
      %1101 = vmatpush.msra.mxu0 %v1100
      %1102 = vmatpush.msra.mxu0 %v1099
      %1103 = vmatpush.msra.mxu0 %v1098
      %1104 = vmatpush.msra.mxu0 %v1097
      %1105 = vmatpush.msra.mxu0 %v1096
      %1106 = vmatpush.msra.mxu0 %v1095
      %1107 = vmatpush.msra.mxu0 %v1094
      %1108 = vmatpush.msra.mxu0 %v1093
      %1109 = vmatpush.msra.mxu0 %v1092
      %1110 = vmatpush.msra.mxu0 %v1091
      %1111 = vmatpush.msra.mxu0 %v1090
      %1112 = vmatpush.msra.mxu0 %v1089
      %1113 = vmatpush.msra.mxu0 %v1088
      %1114 = vmatpush.msra.mxu0 %v1087
      %1115 = vmatpush.msra.mxu0 %v1086
      %1116 = vmatpush.msra.mxu0 %v1085
      %1117 = vmatmul.f32.gmra.mxu0 %v1061
      %v1118 = vpop.f32.mrf.mxu0
      %v1119 = vadd.f32 0.0, %v1118
      %1120 = vmatmul.f32.gmra.mxu0 %v1062
      %v1121 = vpop.f32.mrf.mxu0
      %v1122 = vadd.f32 0.0, %v1121
      %1123 = vmatmul.f32.gmra.mxu0 %v1063
      %v1124 = vpop.f32.mrf.mxu0
      %v1125 = vadd.f32 0.0, %v1124
      %1126 = vmatmul.f32.gmra.mxu0 %v1064
      %v1127 = vpop.f32.mrf.mxu0
      %v1128 = vadd.f32 0.0, %v1127
      %1129 = vmatmul.f32.gmra.mxu0 %v1065
      %v1130 = vpop.f32.mrf.mxu0
      %v1131 = vadd.f32 0.0, %v1130
      %1132 = vmatmul.f32.gmra.mxu0 %v1066
      %v1133 = vpop.f32.mrf.mxu0
      %v1134 = vadd.f32 0.0, %v1133
      %1135 = vmatmul.f32.gmra.mxu0 %v1067
      %v1136 = vpop.f32.mrf.mxu0
      %v1137 = vadd.f32 0.0, %v1136
      %1138 = vmatmul.f32.gmra.mxu0 %v1068
      %v1139 = vpop.f32.mrf.mxu0
      %v1140 = vadd.f32 0.0, %v1139
      %1141 = vmatmul.f32.gmra.mxu0 %v1069
      %v1142 = vpop.f32.mrf.mxu0
      %v1143 = vadd.f32 0.0, %v1142
      %1144 = vmatmul.f32.gmra.mxu0 %v1070
      %v1145 = vpop.f32.mrf.mxu0
      %v1146 = vadd.f32 0.0, %v1145
      %1147 = vmatmul.f32.gmra.mxu0 %v1071
      %v1148 = vpop.f32.mrf.mxu0
      %v1149 = vadd.f32 0.0, %v1148
      %1150 = vmatmul.f32.gmra.mxu0 %v1072
      %v1151 = vpop.f32.mrf.mxu0
      %v1152 = vadd.f32 0.0, %v1151
      %1153 = vmatmul.f32.gmra.mxu0 %v1073
      %v1154 = vpop.f32.mrf.mxu0
      %v1155 = vadd.f32 0.0, %v1154
      %1156 = vmatmul.f32.gmra.mxu0 %v1074
      %v1157 = vpop.f32.mrf.mxu0
      %v1158 = vadd.f32 0.0, %v1157
      %1159 = vmatmul.f32.gmra.mxu0 %v1075
      %v1160 = vpop.f32.mrf.mxu0
      %v1161 = vadd.f32 0.0, %v1160
      %1162 = vmatmul.f32.gmra.mxu0 %v1076
      %v1163 = vpop.f32.mrf.mxu0
      %v1164 = vadd.f32 0.0, %v1163
      %1165 = vmatmul.f32.gmra.mxu0 %v1077
      %v1166 = vpop.f32.mrf.mxu0
      %v1167 = vadd.f32 0.0, %v1166
      %1168 = vmatmul.f32.gmra.mxu0 %v1078
      %v1169 = vpop.f32.mrf.mxu0
      %v1170 = vadd.f32 0.0, %v1169
      %1171 = vmatmul.f32.gmra.mxu0 %v1079
      %v1172 = vpop.f32.mrf.mxu0
      %v1173 = vadd.f32 0.0, %v1172
      %1174 = vmatmul.f32.gmra.mxu0 %v1080
      %v1175 = vpop.f32.mrf.mxu0
      %v1176 = vadd.f32 0.0, %v1175
      %1177 = vmatmul.f32.gmra.mxu0 %v1081
      %v1178 = vpop.f32.mrf.mxu0
      %v1179 = vadd.f32 0.0, %v1178
      %1180 = vmatmul.f32.gmra.mxu0 %v1082
      %v1181 = vpop.f32.mrf.mxu0
      %v1182 = vadd.f32 0.0, %v1181
      %1183 = vmatmul.f32.gmra.mxu0 %v1083
      %v1184 = vpop.f32.mrf.mxu0
      %v1185 = vadd.f32 0.0, %v1184
      %1186 = vmatmul.f32.gmra.mxu0 %v1084
      %v1187 = vpop.f32.mrf.mxu0
      %v1188 = vadd.f32 0.0, %v1187
      %1189 = vdwg.mxu0
      %v1190 = vadd.f32 %v1037, %v1119
      %v1191 = vadd.f32 %v1038, %v1122
      %v1192 = vadd.f32 %v1039, %v1125
      %v1193 = vadd.f32 %v1040, %v1128
      %v1194 = vadd.f32 %v1041, %v1131
      %v1195 = vadd.f32 %v1042, %v1134
      %v1196 = vadd.f32 %v1043, %v1137
      %v1197 = vadd.f32 %v1044, %v1140
      %v1198 = vadd.f32 %v1045, %v1143
      %v1199 = vadd.f32 %v1046, %v1146
      %v1200 = vadd.f32 %v1047, %v1149
      %v1201 = vadd.f32 %v1048, %v1152
      %v1202 = vadd.f32 %v1049, %v1155
      %v1203 = vadd.f32 %v1050, %v1158
      %v1204 = vadd.f32 %v1051, %v1161
      %v1205 = vadd.f32 %v1052, %v1164
      %v1206 = vadd.f32 %v1053, %v1167
      %v1207 = vadd.f32 %v1054, %v1170
      %v1208 = vadd.f32 %v1055, %v1173
      %v1209 = vadd.f32 %v1056, %v1176
      %v1210 = vadd.f32 %v1057, %v1179
      %v1211 = vadd.f32 %v1058, %v1182
      %v1212 = vadd.f32 %v1059, %v1185
      %v1213 = vadd.f32 %v1060, %v1188
      %s1214 = scalar_lea.vmem %s319, 48
      %v1215 = vld [vmem:[%s1214] sm:$0xff]
      %v1216 = vld [vmem:[%s1214 + $0x8] sm:$0xff]
      %v1217 = vld [vmem:[%s1214 + $0x18] sm:$0xff]
      %v1218 = vld [vmem:[%s1214 + $0x20] sm:$0xff]
      %v1219 = vld [vmem:[%s1214 + $0x30] sm:$0xff]
      %v1220 = vld [vmem:[%s1214 + $0x38] sm:$0xff]
      %v1221 = vld [vmem:[%s1214 + $0x48] sm:$0xff]
      %v1222 = vld [vmem:[%s1214 + $0x50] sm:$0xff]
      %v1223 = vld [vmem:[%s1214 + $0x60] sm:$0xff]
      %v1224 = vld [vmem:[%s1214 + $0x68] sm:$0xff]
      %v1225 = vld [vmem:[%s1214 + $0x78] sm:$0xff]
      %v1226 = vld [vmem:[%s1214 + $0x80] sm:$0xff]
      %v1227 = vld [vmem:[%s1214 + $0x90] sm:$0xff]
      %v1228 = vld [vmem:[%s1214 + $0x98] sm:$0xff]
      %v1229 = vld [vmem:[%s1214 + $0xa8] sm:$0xff]
      %v1230 = vld [vmem:[%s1214 + $0xb0] sm:$0xff]
      %v1231 = vld [vmem:[%s1214 + $0xc0] sm:$0xff]
      %v1232 = vld [vmem:[%s1214 + $0xc8] sm:$0xff]
      %v1233 = vld [vmem:[%s1214 + $0xd8] sm:$0xff]
      %v1234 = vld [vmem:[%s1214 + $0xe0] sm:$0xff]
      %v1235 = vld [vmem:[%s1214 + $0xf0] sm:$0xff]
      %v1236 = vld [vmem:[%s1214 + $0xf8] sm:$0xff]
      %v1237 = vld [vmem:[%s1214 + $0x108] sm:$0xff]
      %v1238 = vld [vmem:[%s1214 + $0x110] sm:$0xff]
      %v1239 = vld [vmem:[%s1 + $0x300] sm:$0xff]
      %v1240 = vld [vmem:[%s1 + $0x308] sm:$0xff]
      %v1241 = vld [vmem:[%s1 + $0x310] sm:$0xff]
      %v1242 = vld [vmem:[%s1 + $0x318] sm:$0xff]
      %v1243 = vld [vmem:[%s1 + $0x320] sm:$0xff]
      %v1244 = vld [vmem:[%s1 + $0x328] sm:$0xff]
      %v1245 = vld [vmem:[%s1 + $0x330] sm:$0xff]
      %v1246 = vld [vmem:[%s1 + $0x338] sm:$0xff]
      %v1247 = vld [vmem:[%s1 + $0x340] sm:$0xff]
      %v1248 = vld [vmem:[%s1 + $0x348] sm:$0xff]
      %v1249 = vld [vmem:[%s1 + $0x350] sm:$0xff]
      %v1250 = vld [vmem:[%s1 + $0x358] sm:$0xff]
      %v1251 = vld [vmem:[%s1 + $0x360] sm:$0xff]
      %v1252 = vld [vmem:[%s1 + $0x368] sm:$0xff]
      %v1253 = vld [vmem:[%s1 + $0x370] sm:$0xff]
      %v1254 = vld [vmem:[%s1 + $0x378] sm:$0xff]
      %1255 = vmatpush.msra.mxu0 %v1254
      %1256 = vmatpush.msra.mxu0 %v1253
      %1257 = vmatpush.msra.mxu0 %v1252
      %1258 = vmatpush.msra.mxu0 %v1251
      %1259 = vmatpush.msra.mxu0 %v1250
      %1260 = vmatpush.msra.mxu0 %v1249
      %1261 = vmatpush.msra.mxu0 %v1248
      %1262 = vmatpush.msra.mxu0 %v1247
      %1263 = vmatpush.msra.mxu0 %v1246
      %1264 = vmatpush.msra.mxu0 %v1245
      %1265 = vmatpush.msra.mxu0 %v1244
      %1266 = vmatpush.msra.mxu0 %v1243
      %1267 = vmatpush.msra.mxu0 %v1242
      %1268 = vmatpush.msra.mxu0 %v1241
      %1269 = vmatpush.msra.mxu0 %v1240
      %1270 = vmatpush.msra.mxu0 %v1239
      %1271 = vmatmul.f32.gmra.mxu0 %v1215
      %v1272 = vpop.f32.mrf.mxu0
      %v1273 = vadd.f32 0.0, %v1272
      %1274 = vmatmul.f32.gmra.mxu0 %v1216
      %v1275 = vpop.f32.mrf.mxu0
      %v1276 = vadd.f32 0.0, %v1275
      %1277 = vmatmul.f32.gmra.mxu0 %v1217
      %v1278 = vpop.f32.mrf.mxu0
      %v1279 = vadd.f32 0.0, %v1278
      %1280 = vmatmul.f32.gmra.mxu0 %v1218
      %v1281 = vpop.f32.mrf.mxu0
      %v1282 = vadd.f32 0.0, %v1281
      %1283 = vmatmul.f32.gmra.mxu0 %v1219
      %v1284 = vpop.f32.mrf.mxu0
      %v1285 = vadd.f32 0.0, %v1284
      %1286 = vmatmul.f32.gmra.mxu0 %v1220
      %v1287 = vpop.f32.mrf.mxu0
      %v1288 = vadd.f32 0.0, %v1287
      %1289 = vmatmul.f32.gmra.mxu0 %v1221
      %v1290 = vpop.f32.mrf.mxu0
      %v1291 = vadd.f32 0.0, %v1290
      %1292 = vmatmul.f32.gmra.mxu0 %v1222
      %v1293 = vpop.f32.mrf.mxu0
      %v1294 = vadd.f32 0.0, %v1293
      %1295 = vmatmul.f32.gmra.mxu0 %v1223
      %v1296 = vpop.f32.mrf.mxu0
      %v1297 = vadd.f32 0.0, %v1296
      %1298 = vmatmul.f32.gmra.mxu0 %v1224
      %v1299 = vpop.f32.mrf.mxu0
      %v1300 = vadd.f32 0.0, %v1299
      %1301 = vmatmul.f32.gmra.mxu0 %v1225
      %v1302 = vpop.f32.mrf.mxu0
      %v1303 = vadd.f32 0.0, %v1302
      %1304 = vmatmul.f32.gmra.mxu0 %v1226
      %v1305 = vpop.f32.mrf.mxu0
      %v1306 = vadd.f32 0.0, %v1305
      %1307 = vmatmul.f32.gmra.mxu0 %v1227
      %v1308 = vpop.f32.mrf.mxu0
      %v1309 = vadd.f32 0.0, %v1308
      %1310 = vmatmul.f32.gmra.mxu0 %v1228
      %v1311 = vpop.f32.mrf.mxu0
      %v1312 = vadd.f32 0.0, %v1311
      %1313 = vmatmul.f32.gmra.mxu0 %v1229
      %v1314 = vpop.f32.mrf.mxu0
      %v1315 = vadd.f32 0.0, %v1314
      %1316 = vmatmul.f32.gmra.mxu0 %v1230
      %v1317 = vpop.f32.mrf.mxu0
      %v1318 = vadd.f32 0.0, %v1317
      %1319 = vmatmul.f32.gmra.mxu0 %v1231
      %v1320 = vpop.f32.mrf.mxu0
      %v1321 = vadd.f32 0.0, %v1320
      %1322 = vmatmul.f32.gmra.mxu0 %v1232
      %v1323 = vpop.f32.mrf.mxu0
      %v1324 = vadd.f32 0.0, %v1323
      %1325 = vmatmul.f32.gmra.mxu0 %v1233
      %v1326 = vpop.f32.mrf.mxu0
      %v1327 = vadd.f32 0.0, %v1326
      %1328 = vmatmul.f32.gmra.mxu0 %v1234
      %v1329 = vpop.f32.mrf.mxu0
      %v1330 = vadd.f32 0.0, %v1329
      %1331 = vmatmul.f32.gmra.mxu0 %v1235
      %v1332 = vpop.f32.mrf.mxu0
      %v1333 = vadd.f32 0.0, %v1332
      %1334 = vmatmul.f32.gmra.mxu0 %v1236
      %v1335 = vpop.f32.mrf.mxu0
      %v1336 = vadd.f32 0.0, %v1335
      %1337 = vmatmul.f32.gmra.mxu0 %v1237
      %v1338 = vpop.f32.mrf.mxu0
      %v1339 = vadd.f32 0.0, %v1338
      %1340 = vmatmul.f32.gmra.mxu0 %v1238
      %v1341 = vpop.f32.mrf.mxu0
      %v1342 = vadd.f32 0.0, %v1341
      %1343 = vdwg.mxu0
      %v1344 = vadd.f32 %v1190, %v1273
      %v1345 = vadd.f32 %v1191, %v1276
      %v1346 = vadd.f32 %v1192, %v1279
      %v1347 = vadd.f32 %v1193, %v1282
      %v1348 = vadd.f32 %v1194, %v1285
      %v1349 = vadd.f32 %v1195, %v1288
      %v1350 = vadd.f32 %v1196, %v1291
      %v1351 = vadd.f32 %v1197, %v1294
      %v1352 = vadd.f32 %v1198, %v1297
      %v1353 = vadd.f32 %v1199, %v1300
      %v1354 = vadd.f32 %v1200, %v1303
      %v1355 = vadd.f32 %v1201, %v1306
      %v1356 = vadd.f32 %v1202, %v1309
      %v1357 = vadd.f32 %v1203, %v1312
      %v1358 = vadd.f32 %v1204, %v1315
      %v1359 = vadd.f32 %v1205, %v1318
      %v1360 = vadd.f32 %v1206, %v1321
      %v1361 = vadd.f32 %v1207, %v1324
      %v1362 = vadd.f32 %v1208, %v1327
      %v1363 = vadd.f32 %v1209, %v1330
      %v1364 = vadd.f32 %v1210, %v1333
      %v1365 = vadd.f32 %v1211, %v1336
      %v1366 = vadd.f32 %v1212, %v1339
      %v1367 = vadd.f32 %v1213, %v1342
      %v1368 = vld [vmem:[%s1214 + $0x1] sm:$0xff]
      %v1369 = vld [vmem:[%s1214 + $0x9] sm:$0xff]
      %v1370 = vld [vmem:[%s1214 + $0x19] sm:$0xff]
      %v1371 = vld [vmem:[%s1214 + $0x21] sm:$0xff]
      %v1372 = vld [vmem:[%s1214 + $0x31] sm:$0xff]
      %v1373 = vld [vmem:[%s1214 + $0x39] sm:$0xff]
      %v1374 = vld [vmem:[%s1214 + $0x49] sm:$0xff]
      %v1375 = vld [vmem:[%s1214 + $0x51] sm:$0xff]
      %v1376 = vld [vmem:[%s1214 + $0x61] sm:$0xff]
      %v1377 = vld [vmem:[%s1214 + $0x69] sm:$0xff]
      %v1378 = vld [vmem:[%s1214 + $0x79] sm:$0xff]
      %v1379 = vld [vmem:[%s1214 + $0x81] sm:$0xff]
      %v1380 = vld [vmem:[%s1214 + $0x91] sm:$0xff]
      %v1381 = vld [vmem:[%s1214 + $0x99] sm:$0xff]
      %v1382 = vld [vmem:[%s1214 + $0xa9] sm:$0xff]
      %v1383 = vld [vmem:[%s1214 + $0xb1] sm:$0xff]
      %v1384 = vld [vmem:[%s1214 + $0xc1] sm:$0xff]
      %v1385 = vld [vmem:[%s1214 + $0xc9] sm:$0xff]
      %v1386 = vld [vmem:[%s1214 + $0xd9] sm:$0xff]
      %v1387 = vld [vmem:[%s1214 + $0xe1] sm:$0xff]
      %v1388 = vld [vmem:[%s1214 + $0xf1] sm:$0xff]
      %v1389 = vld [vmem:[%s1214 + $0xf9] sm:$0xff]
      %v1390 = vld [vmem:[%s1214 + $0x109] sm:$0xff]
      %v1391 = vld [vmem:[%s1214 + $0x111] sm:$0xff]
      %v1392 = vld [vmem:[%s1 + $0x380] sm:$0xff]
      %v1393 = vld [vmem:[%s1 + $0x388] sm:$0xff]
      %v1394 = vld [vmem:[%s1 + $0x390] sm:$0xff]
      %v1395 = vld [vmem:[%s1 + $0x398] sm:$0xff]
      %v1396 = vld [vmem:[%s1 + $0x3a0] sm:$0xff]
      %v1397 = vld [vmem:[%s1 + $0x3a8] sm:$0xff]
      %v1398 = vld [vmem:[%s1 + $0x3b0] sm:$0xff]
      %v1399 = vld [vmem:[%s1 + $0x3b8] sm:$0xff]
      %v1400 = vld [vmem:[%s1 + $0x3c0] sm:$0xff]
      %v1401 = vld [vmem:[%s1 + $0x3c8] sm:$0xff]
      %v1402 = vld [vmem:[%s1 + $0x3d0] sm:$0xff]
      %v1403 = vld [vmem:[%s1 + $0x3d8] sm:$0xff]
      %v1404 = vld [vmem:[%s1 + $0x3e0] sm:$0xff]
      %v1405 = vld [vmem:[%s1 + $0x3e8] sm:$0xff]
      %v1406 = vld [vmem:[%s1 + $0x3f0] sm:$0xff]
      %v1407 = vld [vmem:[%s1 + $0x3f8] sm:$0xff]
      %1408 = vmatpush.msra.mxu0 %v1407
      %1409 = vmatpush.msra.mxu0 %v1406
      %1410 = vmatpush.msra.mxu0 %v1405
      %1411 = vmatpush.msra.mxu0 %v1404
      %1412 = vmatpush.msra.mxu0 %v1403
      %1413 = vmatpush.msra.mxu0 %v1402
      %1414 = vmatpush.msra.mxu0 %v1401
      %1415 = vmatpush.msra.mxu0 %v1400
      %1416 = vmatpush.msra.mxu0 %v1399
      %1417 = vmatpush.msra.mxu0 %v1398
      %1418 = vmatpush.msra.mxu0 %v1397
      %1419 = vmatpush.msra.mxu0 %v1396
      %1420 = vmatpush.msra.mxu0 %v1395
      %1421 = vmatpush.msra.mxu0 %v1394
      %1422 = vmatpush.msra.mxu0 %v1393
      %1423 = vmatpush.msra.mxu0 %v1392
      %1424 = vmatmul.f32.gmra.mxu0 %v1368
      %v1425 = vpop.f32.mrf.mxu0
      %v1426 = vadd.f32 0.0, %v1425
      %1427 = vmatmul.f32.gmra.mxu0 %v1369
      %v1428 = vpop.f32.mrf.mxu0
      %v1429 = vadd.f32 0.0, %v1428
      %1430 = vmatmul.f32.gmra.mxu0 %v1370
      %v1431 = vpop.f32.mrf.mxu0
      %v1432 = vadd.f32 0.0, %v1431
      %1433 = vmatmul.f32.gmra.mxu0 %v1371
      %v1434 = vpop.f32.mrf.mxu0
      %v1435 = vadd.f32 0.0, %v1434
      %1436 = vmatmul.f32.gmra.mxu0 %v1372
      %v1437 = vpop.f32.mrf.mxu0
      %v1438 = vadd.f32 0.0, %v1437
      %1439 = vmatmul.f32.gmra.mxu0 %v1373
      %v1440 = vpop.f32.mrf.mxu0
      %v1441 = vadd.f32 0.0, %v1440
      %1442 = vmatmul.f32.gmra.mxu0 %v1374
      %v1443 = vpop.f32.mrf.mxu0
      %v1444 = vadd.f32 0.0, %v1443
      %1445 = vmatmul.f32.gmra.mxu0 %v1375
      %v1446 = vpop.f32.mrf.mxu0
      %v1447 = vadd.f32 0.0, %v1446
      %1448 = vmatmul.f32.gmra.mxu0 %v1376
      %v1449 = vpop.f32.mrf.mxu0
      %v1450 = vadd.f32 0.0, %v1449
      %1451 = vmatmul.f32.gmra.mxu0 %v1377
      %v1452 = vpop.f32.mrf.mxu0
      %v1453 = vadd.f32 0.0, %v1452
      %1454 = vmatmul.f32.gmra.mxu0 %v1378
      %v1455 = vpop.f32.mrf.mxu0
      %v1456 = vadd.f32 0.0, %v1455
      %1457 = vmatmul.f32.gmra.mxu0 %v1379
      %v1458 = vpop.f32.mrf.mxu0
      %v1459 = vadd.f32 0.0, %v1458
      %1460 = vmatmul.f32.gmra.mxu0 %v1380
      %v1461 = vpop.f32.mrf.mxu0
      %v1462 = vadd.f32 0.0, %v1461
      %1463 = vmatmul.f32.gmra.mxu0 %v1381
      %v1464 = vpop.f32.mrf.mxu0
      %v1465 = vadd.f32 0.0, %v1464
      %1466 = vmatmul.f32.gmra.mxu0 %v1382
      %v1467 = vpop.f32.mrf.mxu0
      %v1468 = vadd.f32 0.0, %v1467
      %1469 = vmatmul.f32.gmra.mxu0 %v1383
      %v1470 = vpop.f32.mrf.mxu0
      %v1471 = vadd.f32 0.0, %v1470
      %1472 = vmatmul.f32.gmra.mxu0 %v1384
      %v1473 = vpop.f32.mrf.mxu0
      %v1474 = vadd.f32 0.0, %v1473
      %1475 = vmatmul.f32.gmra.mxu0 %v1385
      %v1476 = vpop.f32.mrf.mxu0
      %v1477 = vadd.f32 0.0, %v1476
      %1478 = vmatmul.f32.gmra.mxu0 %v1386
      %v1479 = vpop.f32.mrf.mxu0
      %v1480 = vadd.f32 0.0, %v1479
      %1481 = vmatmul.f32.gmra.mxu0 %v1387
      %v1482 = vpop.f32.mrf.mxu0
      %v1483 = vadd.f32 0.0, %v1482
      %1484 = vmatmul.f32.gmra.mxu0 %v1388
      %v1485 = vpop.f32.mrf.mxu0
      %v1486 = vadd.f32 0.0, %v1485
      %1487 = vmatmul.f32.gmra.mxu0 %v1389
      %v1488 = vpop.f32.mrf.mxu0
      %v1489 = vadd.f32 0.0, %v1488
      %1490 = vmatmul.f32.gmra.mxu0 %v1390
      %v1491 = vpop.f32.mrf.mxu0
      %v1492 = vadd.f32 0.0, %v1491
      %1493 = vmatmul.f32.gmra.mxu0 %v1391
      %v1494 = vpop.f32.mrf.mxu0
      %v1495 = vadd.f32 0.0, %v1494
      %1496 = vdwg.mxu0
      %v1497 = vadd.f32 %v1344, %v1426
      %v1498 = vadd.f32 %v1345, %v1429
      %v1499 = vadd.f32 %v1346, %v1432
      %v1500 = vadd.f32 %v1347, %v1435
      %v1501 = vadd.f32 %v1348, %v1438
      %v1502 = vadd.f32 %v1349, %v1441
      %v1503 = vadd.f32 %v1350, %v1444
      %v1504 = vadd.f32 %v1351, %v1447
      %v1505 = vadd.f32 %v1352, %v1450
      %v1506 = vadd.f32 %v1353, %v1453
      %v1507 = vadd.f32 %v1354, %v1456
      %v1508 = vadd.f32 %v1355, %v1459
      %v1509 = vadd.f32 %v1356, %v1462
      %v1510 = vadd.f32 %v1357, %v1465
      %v1511 = vadd.f32 %v1358, %v1468
      %v1512 = vadd.f32 %v1359, %v1471
      %v1513 = vadd.f32 %v1360, %v1474
      %v1514 = vadd.f32 %v1361, %v1477
      %v1515 = vadd.f32 %v1362, %v1480
      %v1516 = vadd.f32 %v1363, %v1483
      %v1517 = vadd.f32 %v1364, %v1486
      %v1518 = vadd.f32 %v1365, %v1489
      %v1519 = vadd.f32 %v1366, %v1492
      %v1520 = vadd.f32 %v1367, %v1495
      %v1521 = vld [vmem:[%s1214 + $0x2] sm:$0xff]
      %v1522 = vld [vmem:[%s1214 + $0xa] sm:$0xff]
      %v1523 = vld [vmem:[%s1214 + $0x1a] sm:$0xff]
      %v1524 = vld [vmem:[%s1214 + $0x22] sm:$0xff]
      %v1525 = vld [vmem:[%s1214 + $0x32] sm:$0xff]
      %v1526 = vld [vmem:[%s1214 + $0x3a] sm:$0xff]
      %v1527 = vld [vmem:[%s1214 + $0x4a] sm:$0xff]
      %v1528 = vld [vmem:[%s1214 + $0x52] sm:$0xff]
      %v1529 = vld [vmem:[%s1214 + $0x62] sm:$0xff]
      %v1530 = vld [vmem:[%s1214 + $0x6a] sm:$0xff]
      %v1531 = vld [vmem:[%s1214 + $0x7a] sm:$0xff]
      %v1532 = vld [vmem:[%s1214 + $0x82] sm:$0xff]
      %v1533 = vld [vmem:[%s1214 + $0x92] sm:$0xff]
      %v1534 = vld [vmem:[%s1214 + $0x9a] sm:$0xff]
      %v1535 = vld [vmem:[%s1214 + $0xaa] sm:$0xff]
      %v1536 = vld [vmem:[%s1214 + $0xb2] sm:$0xff]
      %v1537 = vld [vmem:[%s1214 + $0xc2] sm:$0xff]
      %v1538 = vld [vmem:[%s1214 + $0xca] sm:$0xff]
      %v1539 = vld [vmem:[%s1214 + $0xda] sm:$0xff]
      %v1540 = vld [vmem:[%s1214 + $0xe2] sm:$0xff]
      %v1541 = vld [vmem:[%s1214 + $0xf2] sm:$0xff]
      %v1542 = vld [vmem:[%s1214 + $0xfa] sm:$0xff]
      %v1543 = vld [vmem:[%s1214 + $0x10a] sm:$0xff]
      %v1544 = vld [vmem:[%s1214 + $0x112] sm:$0xff]
      %v1545 = vld [vmem:[%s1 + $0x400] sm:$0xff]
      %v1546 = vld [vmem:[%s1 + $0x408] sm:$0xff]
      %v1547 = vld [vmem:[%s1 + $0x410] sm:$0xff]
      %v1548 = vld [vmem:[%s1 + $0x418] sm:$0xff]
      %v1549 = vld [vmem:[%s1 + $0x420] sm:$0xff]
      %v1550 = vld [vmem:[%s1 + $0x428] sm:$0xff]
      %v1551 = vld [vmem:[%s1 + $0x430] sm:$0xff]
      %v1552 = vld [vmem:[%s1 + $0x438] sm:$0xff]
      %v1553 = vld [vmem:[%s1 + $0x440] sm:$0xff]
      %v1554 = vld [vmem:[%s1 + $0x448] sm:$0xff]
      %v1555 = vld [vmem:[%s1 + $0x450] sm:$0xff]
      %v1556 = vld [vmem:[%s1 + $0x458] sm:$0xff]
      %v1557 = vld [vmem:[%s1 + $0x460] sm:$0xff]
      %v1558 = vld [vmem:[%s1 + $0x468] sm:$0xff]
      %v1559 = vld [vmem:[%s1 + $0x470] sm:$0xff]
      %v1560 = vld [vmem:[%s1 + $0x478] sm:$0xff]
      %1561 = vmatpush.msra.mxu0 %v1560
      %1562 = vmatpush.msra.mxu0 %v1559
      %1563 = vmatpush.msra.mxu0 %v1558
      %1564 = vmatpush.msra.mxu0 %v1557
      %1565 = vmatpush.msra.mxu0 %v1556
      %1566 = vmatpush.msra.mxu0 %v1555
      %1567 = vmatpush.msra.mxu0 %v1554
      %1568 = vmatpush.msra.mxu0 %v1553
      %1569 = vmatpush.msra.mxu0 %v1552
      %1570 = vmatpush.msra.mxu0 %v1551
      %1571 = vmatpush.msra.mxu0 %v1550
      %1572 = vmatpush.msra.mxu0 %v1549
      %1573 = vmatpush.msra.mxu0 %v1548
      %1574 = vmatpush.msra.mxu0 %v1547
      %1575 = vmatpush.msra.mxu0 %v1546
      %1576 = vmatpush.msra.mxu0 %v1545
      %1577 = vmatmul.f32.gmra.mxu0 %v1521
      %v1578 = vpop.f32.mrf.mxu0
      %v1579 = vadd.f32 0.0, %v1578
      %1580 = vmatmul.f32.gmra.mxu0 %v1522
      %v1581 = vpop.f32.mrf.mxu0
      %v1582 = vadd.f32 0.0, %v1581
      %1583 = vmatmul.f32.gmra.mxu0 %v1523
      %v1584 = vpop.f32.mrf.mxu0
      %v1585 = vadd.f32 0.0, %v1584
      %1586 = vmatmul.f32.gmra.mxu0 %v1524
      %v1587 = vpop.f32.mrf.mxu0
      %v1588 = vadd.f32 0.0, %v1587
      %1589 = vmatmul.f32.gmra.mxu0 %v1525
      %v1590 = vpop.f32.mrf.mxu0
      %v1591 = vadd.f32 0.0, %v1590
      %1592 = vmatmul.f32.gmra.mxu0 %v1526
      %v1593 = vpop.f32.mrf.mxu0
      %v1594 = vadd.f32 0.0, %v1593
      %1595 = vmatmul.f32.gmra.mxu0 %v1527
      %v1596 = vpop.f32.mrf.mxu0
      %v1597 = vadd.f32 0.0, %v1596
      %1598 = vmatmul.f32.gmra.mxu0 %v1528
      %v1599 = vpop.f32.mrf.mxu0
      %v1600 = vadd.f32 0.0, %v1599
      %1601 = vmatmul.f32.gmra.mxu0 %v1529
      %v1602 = vpop.f32.mrf.mxu0
      %v1603 = vadd.f32 0.0, %v1602
      %1604 = vmatmul.f32.gmra.mxu0 %v1530
      %v1605 = vpop.f32.mrf.mxu0
      %v1606 = vadd.f32 0.0, %v1605
      %1607 = vmatmul.f32.gmra.mxu0 %v1531
      %v1608 = vpop.f32.mrf.mxu0
      %v1609 = vadd.f32 0.0, %v1608
      %1610 = vmatmul.f32.gmra.mxu0 %v1532
      %v1611 = vpop.f32.mrf.mxu0
      %v1612 = vadd.f32 0.0, %v1611
      %1613 = vmatmul.f32.gmra.mxu0 %v1533
      %v1614 = vpop.f32.mrf.mxu0
      %v1615 = vadd.f32 0.0, %v1614
      %1616 = vmatmul.f32.gmra.mxu0 %v1534
      %v1617 = vpop.f32.mrf.mxu0
      %v1618 = vadd.f32 0.0, %v1617
      %1619 = vmatmul.f32.gmra.mxu0 %v1535
      %v1620 = vpop.f32.mrf.mxu0
      %v1621 = vadd.f32 0.0, %v1620
      %1622 = vmatmul.f32.gmra.mxu0 %v1536
      %v1623 = vpop.f32.mrf.mxu0
      %v1624 = vadd.f32 0.0, %v1623
      %1625 = vmatmul.f32.gmra.mxu0 %v1537
      %v1626 = vpop.f32.mrf.mxu0
      %v1627 = vadd.f32 0.0, %v1626
      %1628 = vmatmul.f32.gmra.mxu0 %v1538
      %v1629 = vpop.f32.mrf.mxu0
      %v1630 = vadd.f32 0.0, %v1629
      %1631 = vmatmul.f32.gmra.mxu0 %v1539
      %v1632 = vpop.f32.mrf.mxu0
      %v1633 = vadd.f32 0.0, %v1632
      %1634 = vmatmul.f32.gmra.mxu0 %v1540
      %v1635 = vpop.f32.mrf.mxu0
      %v1636 = vadd.f32 0.0, %v1635
      %1637 = vmatmul.f32.gmra.mxu0 %v1541
      %v1638 = vpop.f32.mrf.mxu0
      %v1639 = vadd.f32 0.0, %v1638
      %1640 = vmatmul.f32.gmra.mxu0 %v1542
      %v1641 = vpop.f32.mrf.mxu0
      %v1642 = vadd.f32 0.0, %v1641
      %1643 = vmatmul.f32.gmra.mxu0 %v1543
      %v1644 = vpop.f32.mrf.mxu0
      %v1645 = vadd.f32 0.0, %v1644
      %1646 = vmatmul.f32.gmra.mxu0 %v1544
      %v1647 = vpop.f32.mrf.mxu0
      %v1648 = vadd.f32 0.0, %v1647
      %1649 = vdwg.mxu0
      %v1650 = vadd.f32 %v1497, %v1579
      %v1651 = vadd.f32 %v1498, %v1582
      %v1652 = vadd.f32 %v1499, %v1585
      %v1653 = vadd.f32 %v1500, %v1588
      %v1654 = vadd.f32 %v1501, %v1591
      %v1655 = vadd.f32 %v1502, %v1594
      %v1656 = vadd.f32 %v1503, %v1597
      %v1657 = vadd.f32 %v1504, %v1600
      %v1658 = vadd.f32 %v1505, %v1603
      %v1659 = vadd.f32 %v1506, %v1606
      %v1660 = vadd.f32 %v1507, %v1609
      %v1661 = vadd.f32 %v1508, %v1612
      %v1662 = vadd.f32 %v1509, %v1615
      %v1663 = vadd.f32 %v1510, %v1618
      %v1664 = vadd.f32 %v1511, %v1621
      %v1665 = vadd.f32 %v1512, %v1624
      %v1666 = vadd.f32 %v1513, %v1627
      %v1667 = vadd.f32 %v1514, %v1630
      %v1668 = vadd.f32 %v1515, %v1633
      %v1669 = vadd.f32 %v1516, %v1636
      %v1670 = vadd.f32 %v1517, %v1639
      %v1671 = vadd.f32 %v1518, %v1642
      %v1672 = vadd.f32 %v1519, %v1645
      %v1673 = vadd.f32 %v1520, %v1648
      %v1674 = vperm.slane %v341, 0
      %v1675 = vmul.f32 %v1650, %v1674
      %v1676 = vmul.f32 %v1651, %v1674
      %v1677 = vmul.f32 %v1652, %v1674
      %v1678 = vmul.f32 %v1653, %v1674
      %v1679 = vmul.f32 %v1654, %v1674
      %v1680 = vmul.f32 %v1655, %v1674
      %v1681 = vmul.f32 %v1656, %v1674
      %v1682 = vmul.f32 %v1657, %v1674
      %v1683 = vmul.f32 %v1658, %v1674
      %v1684 = vmul.f32 %v1659, %v1674
      %v1685 = vmul.f32 %v1660, %v1674
      %v1686 = vmul.f32 %v1661, %v1674
      %v1687 = vmul.f32 %v1662, %v1674
      %v1688 = vmul.f32 %v1663, %v1674
      %v1689 = vmul.f32 %v1664, %v1674
      %v1690 = vmul.f32 %v1665, %v1674
      %v1691 = vmul.f32 %v1666, %v1674
      %v1692 = vmul.f32 %v1667, %v1674
      %v1693 = vmul.f32 %v1668, %v1674
      %v1694 = vmul.f32 %v1669, %v1674
      %v1695 = vmul.f32 %v1670, %v1674
      %v1696 = vmul.f32 %v1671, %v1674
      %v1697 = vmul.f32 %v1672, %v1674
      %v1698 = vmul.f32 %v1673, %v1674
      %v1699 = vperm.slane %v342, 0
      %v1700 = vadd.f32 %v1675, %v1699
      %v1701 = vadd.f32 %v1676, %v1699
      %v1702 = vadd.f32 %v1677, %v1699
      %v1703 = vadd.f32 %v1678, %v1699
      %v1704 = vadd.f32 %v1679, %v1699
      %v1705 = vadd.f32 %v1680, %v1699
      %v1706 = vadd.f32 %v1681, %v1699
      %v1707 = vadd.f32 %v1682, %v1699
      %v1708 = vadd.f32 %v1683, %v1699
      %v1709 = vadd.f32 %v1684, %v1699
      %v1710 = vadd.f32 %v1685, %v1699
      %v1711 = vadd.f32 %v1686, %v1699
      %v1712 = vadd.f32 %v1687, %v1699
      %v1713 = vadd.f32 %v1688, %v1699
      %v1714 = vadd.f32 %v1689, %v1699
      %v1715 = vadd.f32 %v1690, %v1699
      %v1716 = vadd.f32 %v1691, %v1699
      %v1717 = vadd.f32 %v1692, %v1699
      %v1718 = vadd.f32 %v1693, %v1699
      %v1719 = vadd.f32 %v1694, %v1699
      %v1720 = vadd.f32 %v1695, %v1699
      %v1721 = vadd.f32 %v1696, %v1699
      %v1722 = vadd.f32 %v1697, %v1699
      %v1723 = vadd.f32 %v1698, %v1699
      %v1724 = vmax.f32 %v1700, 0.0
      %v1725 = vmax.f32 %v1701, 0.0
      %v1726 = vmax.f32 %v1702, 0.0
      %v1727 = vmax.f32 %v1703, 0.0
      %v1728 = vmax.f32 %v1704, 0.0
      %v1729 = vmax.f32 %v1705, 0.0
      %v1730 = vmax.f32 %v1706, 0.0
      %v1731 = vmax.f32 %v1707, 0.0
      %v1732 = vmax.f32 %v1708, 0.0
      %v1733 = vmax.f32 %v1709, 0.0
      %v1734 = vmax.f32 %v1710, 0.0
      %v1735 = vmax.f32 %v1711, 0.0
      %v1736 = vmax.f32 %v1712, 0.0
      %v1737 = vmax.f32 %v1713, 0.0
      %v1738 = vmax.f32 %v1714, 0.0
      %v1739 = vmax.f32 %v1715, 0.0
      %v1740 = vmax.f32 %v1716, 0.0
      %v1741 = vmax.f32 %v1717, 0.0
      %v1742 = vmax.f32 %v1718, 0.0
      %v1743 = vmax.f32 %v1719, 0.0
      %v1744 = vmax.f32 %v1720, 0.0
      %v1745 = vmax.f32 %v1721, 0.0
      %v1746 = vmax.f32 %v1722, 0.0
      %v1747 = vmax.f32 %v1723, 0.0
      %s1748 = ssub.s32 %s340, 2
      %v1749 = vstv %s1748
      %v1750 = vadd.s32 %v1749, 1
      %v1751 = vadd.s32 %v1749, 2
      %v1752 = vadd.s32 %v1749, 3
      %v1753 = vadd.s32 %v1749, 4
      %v1754 = vadd.s32 %v1749, 5
      %v1755 = vadd.s32 %v1749, 6
      %v1756 = vadd.s32 %v1749, 7
      %v1757 = vadd.s32 %v1749, 8
      %v1758 = vadd.s32 %v1749, 9
      %v1759 = vadd.s32 %v1749, 10
      %v1760 = vadd.s32 %v1749, 11
      %vm1761 = vcmp.ge.s32.totalorder %v1749, 0
      %vm1762 = vcmp.ge.s32.totalorder %v1750, 0
      %vm1763 = vcmp.ge.s32.totalorder %v1751, 0
      %vm1764 = vcmp.ge.s32.totalorder %v1752, 0
      %vm1765 = vcmp.ge.s32.totalorder %v1753, 0
      %vm1766 = vcmp.ge.s32.totalorder %v1754, 0
      %vm1767 = vcmp.ge.s32.totalorder %v1755, 0
      %vm1768 = vcmp.ge.s32.totalorder %v1756, 0
      %vm1769 = vcmp.ge.s32.totalorder %v1757, 0
      %vm1770 = vcmp.ge.s32.totalorder %v1758, 0
      %vm1771 = vcmp.ge.s32.totalorder %v1759, 0
      %vm1772 = vcmp.ge.s32.totalorder %v1760, 0
      %vm1773 = vcmp.lt.s32.totalorder %v1749, 16
      %vm1774 = vcmp.lt.s32.totalorder %v1750, 16
      %vm1775 = vcmp.lt.s32.totalorder %v1751, 16
      %vm1776 = vcmp.lt.s32.totalorder %v1752, 16
      %vm1777 = vcmp.lt.s32.totalorder %v1753, 16
      %vm1778 = vcmp.lt.s32.totalorder %v1754, 16
      %vm1779 = vcmp.lt.s32.totalorder %v1755, 16
      %vm1780 = vcmp.lt.s32.totalorder %v1756, 16
      %vm1781 = vcmp.lt.s32.totalorder %v1757, 16
      %vm1782 = vcmp.lt.s32.totalorder %v1758, 16
      %vm1783 = vcmp.lt.s32.totalorder %v1759, 16
      %vm1784 = vcmp.lt.s32.totalorder %v1760, 16
      %vm1785 = vmand %vm1761, %vm1773
      %vm1786 = vmand %vm1762, %vm1774
      %vm1787 = vmand %vm1763, %vm1775
      %vm1788 = vmand %vm1764, %vm1776
      %vm1789 = vmand %vm1765, %vm1777
      %vm1790 = vmand %vm1766, %vm1778
      %vm1791 = vmand %vm1767, %vm1779
      %vm1792 = vmand %vm1768, %vm1780
      %vm1793 = vmand %vm1769, %vm1781
      %vm1794 = vmand %vm1770, %vm1782
      %vm1795 = vmand %vm1771, %vm1783
      %vm1796 = vmand %vm1772, %vm1784
      %v1797 = vsel %vm1785, 1, 0
      %v1798 = vsel %vm1786, 1, 0
      %v1799 = vsel %vm1787, 1, 0
      %v1800 = vsel %vm1788, 1, 0
      %v1801 = vsel %vm1789, 1, 0
      %v1802 = vsel %vm1790, 1, 0
      %v1803 = vsel %vm1791, 1, 0
      %v1804 = vsel %vm1792, 1, 0
      %v1805 = vsel %vm1793, 1, 0
      %v1806 = vsel %vm1794, 1, 0
      %v1807 = vsel %vm1795, 1, 0
      %v1808 = vsel %vm1796, 1, 0
      %vm1809 = vcmp.eq.s32.totalorder %v1797, 1
      %vm1810 = vcmp.eq.s32.totalorder %v1798, 1
      %vm1811 = vcmp.eq.s32.totalorder %v1799, 1
      %vm1812 = vcmp.eq.s32.totalorder %v1800, 1
      %vm1813 = vcmp.eq.s32.totalorder %v1801, 1
      %vm1814 = vcmp.eq.s32.totalorder %v1802, 1
      %vm1815 = vcmp.eq.s32.totalorder %v1803, 1
      %vm1816 = vcmp.eq.s32.totalorder %v1804, 1
      %vm1817 = vcmp.eq.s32.totalorder %v1805, 1
      %vm1818 = vcmp.eq.s32.totalorder %v1806, 1
      %vm1819 = vcmp.eq.s32.totalorder %v1807, 1
      %vm1820 = vcmp.eq.s32.totalorder %v1808, 1
      %v1821 = vsel %vm1809, %v1724, 0.0
      %v1822 = vsel %vm1809, %v1725, 0.0
      %v1823 = vsel %vm1810, %v1726, 0.0
      %v1824 = vsel %vm1810, %v1727, 0.0
      %v1825 = vsel %vm1811, %v1728, 0.0
      %v1826 = vsel %vm1811, %v1729, 0.0
      %v1827 = vsel %vm1812, %v1730, 0.0
      %v1828 = vsel %vm1812, %v1731, 0.0
      %v1829 = vsel %vm1813, %v1732, 0.0
      %v1830 = vsel %vm1813, %v1733, 0.0
      %v1831 = vsel %vm1814, %v1734, 0.0
      %v1832 = vsel %vm1814, %v1735, 0.0
      %v1833 = vsel %vm1815, %v1736, 0.0
      %v1834 = vsel %vm1815, %v1737, 0.0
      %v1835 = vsel %vm1816, %v1738, 0.0
      %v1836 = vsel %vm1816, %v1739, 0.0
      %v1837 = vsel %vm1817, %v1740, 0.0
      %v1838 = vsel %vm1817, %v1741, 0.0
      %v1839 = vsel %vm1818, %v1742, 0.0
      %v1840 = vsel %vm1818, %v1743, 0.0
      %v1841 = vsel %vm1819, %v1744, 0.0
      %v1842 = vsel %vm1819, %v1745, 0.0
      %v1843 = vsel %vm1820, %v1746, 0.0
      %v1844 = vsel %vm1820, %v1747, 0.0
      %1845 = vst [vmem:[#allocation2] sm:$0x1] 0.0
      %1846 = vst [vmem:[#allocation2 + $0x18] sm:$0x1] 0.0
      %1847 = vst [vmem:[#allocation2 + $0x30] sm:$0x1] 0.0
      %1848 = vst [vmem:[#allocation2 + $0x48] sm:$0x1] 0.0
      %1849 = vst [vmem:[#allocation2 + $0x60] sm:$0x1] 0.0
      %1850 = vst [vmem:[#allocation2 + $0x78] sm:$0x1] 0.0
      %1851 = vst [vmem:[#allocation2 + $0x90] sm:$0x1] 0.0
      %1852 = vst [vmem:[#allocation2 + $0xa8] sm:$0x1] 0.0
      %1853 = vst [vmem:[#allocation2 + $0xc0] sm:$0x1] 0.0
      %1854 = vst [vmem:[#allocation2 + $0xd8] sm:$0x1] 0.0
      %1855 = vst [vmem:[#allocation2 + $0xf0] sm:$0x1] 0.0
      %1856 = vst [vmem:[#allocation2 + $0x108] sm:$0x1] 0.0
      %1857 = vst [vmem:[#allocation2 + $0x11] sm:$0x1] 0.0
      %1858 = vst [vmem:[#allocation2 + $0x29] sm:$0x1] 0.0
      %1859 = vst [vmem:[#allocation2 + $0x41] sm:$0x1] 0.0
      %1860 = vst [vmem:[#allocation2 + $0x59] sm:$0x1] 0.0
      %1861 = vst [vmem:[#allocation2 + $0x71] sm:$0x1] 0.0
      %1862 = vst [vmem:[#allocation2 + $0x89] sm:$0x1] 0.0
      %1863 = vst [vmem:[#allocation2 + $0xa1] sm:$0x1] 0.0
      %1864 = vst [vmem:[#allocation2 + $0xb9] sm:$0x1] 0.0
      %1865 = vst [vmem:[#allocation2 + $0xd1] sm:$0x1] 0.0
      %1866 = vst [vmem:[#allocation2 + $0xe9] sm:$0x1] 0.0
      %1867 = vst [vmem:[#allocation2 + $0x101] sm:$0x1] 0.0
      %1868 = vst [vmem:[#allocation2 + $0x119] sm:$0x1] 0.0
      %1869 = vst [vmem:[#allocation2 + $0x1] sm:$0xff] %v1821
      %1870 = vst [vmem:[#allocation2 + $0x9] sm:$0xff] %v1822
      %1871 = vst [vmem:[#allocation2 + $0x19] sm:$0xff] %v1823
      %1872 = vst [vmem:[#allocation2 + $0x21] sm:$0xff] %v1824
      %1873 = vst [vmem:[#allocation2 + $0x31] sm:$0xff] %v1825
      %1874 = vst [vmem:[#allocation2 + $0x39] sm:$0xff] %v1826
      %1875 = vst [vmem:[#allocation2 + $0x49] sm:$0xff] %v1827
      %1876 = vst [vmem:[#allocation2 + $0x51] sm:$0xff] %v1828
      %1877 = vst [vmem:[#allocation2 + $0x61] sm:$0xff] %v1829
      %1878 = vst [vmem:[#allocation2 + $0x69] sm:$0xff] %v1830
      %1879 = vst [vmem:[#allocation2 + $0x79] sm:$0xff] %v1831
      %1880 = vst [vmem:[#allocation2 + $0x81] sm:$0xff] %v1832
      %1881 = vst [vmem:[#allocation2 + $0x91] sm:$0xff] %v1833
      %1882 = vst [vmem:[#allocation2 + $0x99] sm:$0xff] %v1834
      %1883 = vst [vmem:[#allocation2 + $0xa9] sm:$0xff] %v1835
      %1884 = vst [vmem:[#allocation2 + $0xb1] sm:$0xff] %v1836
      %1885 = vst [vmem:[#allocation2 + $0xc1] sm:$0xff] %v1837
      %1886 = vst [vmem:[#allocation2 + $0xc9] sm:$0xff] %v1838
      %1887 = vst [vmem:[#allocation2 + $0xd9] sm:$0xff] %v1839
      %1888 = vst [vmem:[#allocation2 + $0xe1] sm:$0xff] %v1840
      %1889 = vst [vmem:[#allocation2 + $0xf1] sm:$0xff] %v1841
      %1890 = vst [vmem:[#allocation2 + $0xf9] sm:$0xff] %v1842
      %1891 = vst [vmem:[#allocation2 + $0x109] sm:$0xff] %v1843
      %1892 = vst [vmem:[#allocation2 + $0x111] sm:$0xff] %v1844
      %v1893 = vld [vmem:[%s4 + $0x1] sm:$0x1]
      %v1894 = vld [vmem:[%s5 + $0x1] sm:$0x1]
      %v1895 = vld [vmem:[#allocation2] sm:$0xff]
      %v1896 = vld [vmem:[#allocation2 + $0x8] sm:$0xff]
      %v1897 = vld [vmem:[#allocation2 + $0x18] sm:$0xff]
      %v1898 = vld [vmem:[#allocation2 + $0x20] sm:$0xff]
      %v1899 = vld [vmem:[#allocation2 + $0x30] sm:$0xff]
      %v1900 = vld [vmem:[#allocation2 + $0x38] sm:$0xff]
      %v1901 = vld [vmem:[#allocation2 + $0x48] sm:$0xff]
      %v1902 = vld [vmem:[#allocation2 + $0x50] sm:$0xff]
      %v1903 = vld [vmem:[#allocation2 + $0x60] sm:$0xff]
      %v1904 = vld [vmem:[#allocation2 + $0x68] sm:$0xff]
      %v1905 = vld [vmem:[#allocation2 + $0x78] sm:$0xff]
      %v1906 = vld [vmem:[#allocation2 + $0x80] sm:$0xff]
      %v1907 = vld [vmem:[#allocation2 + $0x90] sm:$0xff]
      %v1908 = vld [vmem:[#allocation2 + $0x98] sm:$0xff]
      %v1909 = vld [vmem:[#allocation2 + $0xa8] sm:$0xff]
      %v1910 = vld [vmem:[#allocation2 + $0xb0] sm:$0xff]
      %v1911 = vld [vmem:[#allocation2 + $0xc0] sm:$0xff]
      %v1912 = vld [vmem:[#allocation2 + $0xc8] sm:$0xff]
      %v1913 = vld [vmem:[#allocation2 + $0xd8] sm:$0xff]
      %v1914 = vld [vmem:[#allocation2 + $0xe0] sm:$0xff]
      %v1915 = vld [vmem:[%s2] sm:$0xff]
      %v1916 = vld [vmem:[%s2 + $0x8] sm:$0xff]
      %v1917 = vld [vmem:[%s2 + $0x10] sm:$0xff]
      %v1918 = vld [vmem:[%s2 + $0x18] sm:$0xff]
      %v1919 = vld [vmem:[%s2 + $0x20] sm:$0xff]
      %v1920 = vld [vmem:[%s2 + $0x28] sm:$0xff]
      %v1921 = vld [vmem:[%s2 + $0x30] sm:$0xff]
      %v1922 = vld [vmem:[%s2 + $0x38] sm:$0xff]
      %v1923 = vld [vmem:[%s2 + $0x40] sm:$0xff]
      %v1924 = vld [vmem:[%s2 + $0x48] sm:$0xff]
      %v1925 = vld [vmem:[%s2 + $0x50] sm:$0xff]
      %v1926 = vld [vmem:[%s2 + $0x58] sm:$0xff]
      %v1927 = vld [vmem:[%s2 + $0x60] sm:$0xff]
      %v1928 = vld [vmem:[%s2 + $0x68] sm:$0xff]
      %v1929 = vld [vmem:[%s2 + $0x70] sm:$0xff]
      %v1930 = vld [vmem:[%s2 + $0x78] sm:$0xff]
      %v1931 = vld [vmem:[#allocation2 + $0x1] sm:$0xff]
      %v1932 = vld [vmem:[#allocation2 + $0x9] sm:$0xff]
      %v1933 = vld [vmem:[#allocation2 + $0x19] sm:$0xff]
      %v1934 = vld [vmem:[#allocation2 + $0x21] sm:$0xff]
      %v1935 = vld [vmem:[#allocation2 + $0x31] sm:$0xff]
      %v1936 = vld [vmem:[#allocation2 + $0x39] sm:$0xff]
      %v1937 = vld [vmem:[#allocation2 + $0x49] sm:$0xff]
      %v1938 = vld [vmem:[#allocation2 + $0x51] sm:$0xff]
      %v1939 = vld [vmem:[#allocation2 + $0x61] sm:$0xff]
      %v1940 = vld [vmem:[#allocation2 + $0x69] sm:$0xff]
      %v1941 = vld [vmem:[#allocation2 + $0x79] sm:$0xff]
      %v1942 = vld [vmem:[#allocation2 + $0x81] sm:$0xff]
      %v1943 = vld [vmem:[#allocation2 + $0x91] sm:$0xff]
      %v1944 = vld [vmem:[#allocation2 + $0x99] sm:$0xff]
      %v1945 = vld [vmem:[#allocation2 + $0xa9] sm:$0xff]
      %v1946 = vld [vmem:[#allocation2 + $0xb1] sm:$0xff]
      %v1947 = vld [vmem:[#allocation2 + $0xc1] sm:$0xff]
      %v1948 = vld [vmem:[#allocation2 + $0xc9] sm:$0xff]
      %v1949 = vld [vmem:[#allocation2 + $0xd9] sm:$0xff]
      %v1950 = vld [vmem:[#allocation2 + $0xe1] sm:$0xff]
      %v1951 = vld [vmem:[%s2 + $0x80] sm:$0xff]
      %v1952 = vld [vmem:[%s2 + $0x88] sm:$0xff]
      %v1953 = vld [vmem:[%s2 + $0x90] sm:$0xff]
      %v1954 = vld [vmem:[%s2 + $0x98] sm:$0xff]
      %v1955 = vld [vmem:[%s2 + $0xa0] sm:$0xff]
      %v1956 = vld [vmem:[%s2 + $0xa8] sm:$0xff]
      %v1957 = vld [vmem:[%s2 + $0xb0] sm:$0xff]
      %v1958 = vld [vmem:[%s2 + $0xb8] sm:$0xff]
      %v1959 = vld [vmem:[%s2 + $0xc0] sm:$0xff]
      %v1960 = vld [vmem:[%s2 + $0xc8] sm:$0xff]
      %v1961 = vld [vmem:[%s2 + $0xd0] sm:$0xff]
      %v1962 = vld [vmem:[%s2 + $0xd8] sm:$0xff]
      %v1963 = vld [vmem:[%s2 + $0xe0] sm:$0xff]
      %v1964 = vld [vmem:[%s2 + $0xe8] sm:$0xff]
      %v1965 = vld [vmem:[%s2 + $0xf0] sm:$0xff]
      %v1966 = vld [vmem:[%s2 + $0xf8] sm:$0xff]
      %1967 = vmatpush.msra.mxu0 %v1966
      %1968 = vmatpush.msra.mxu0 %v1965
      %1969 = vmatpush.msra.mxu0 %v1964
      %1970 = vmatpush.msra.mxu0 %v1963
      %1971 = vmatpush.msra.mxu0 %v1962
      %1972 = vmatpush.msra.mxu0 %v1961
      %1973 = vmatpush.msra.mxu0 %v1960
      %1974 = vmatpush.msra.mxu0 %v1959
      %1975 = vmatpush.msra.mxu0 %v1958
      %1976 = vmatpush.msra.mxu0 %v1957
      %1977 = vmatpush.msra.mxu0 %v1956
      %1978 = vmatpush.msra.mxu0 %v1955
      %1979 = vmatpush.msra.mxu0 %v1954
      %1980 = vmatpush.msra.mxu0 %v1953
      %1981 = vmatpush.msra.mxu0 %v1952
      %1982 = vmatpush.msra.mxu0 %v1951
      %1983 = vmatmul.f32.gmra.mxu0 %v1931
      %v1984 = vpop.f32.mrf.mxu0
      %v1985 = vadd.f32 0.0, %v1984
      %1986 = vmatmul.f32.gmra.mxu0 %v1932
      %v1987 = vpop.f32.mrf.mxu0
      %v1988 = vadd.f32 0.0, %v1987
      %1989 = vmatmul.f32.gmra.mxu0 %v1933
      %v1990 = vpop.f32.mrf.mxu0
      %v1991 = vadd.f32 0.0, %v1990
      %1992 = vmatmul.f32.gmra.mxu0 %v1934
      %v1993 = vpop.f32.mrf.mxu0
      %v1994 = vadd.f32 0.0, %v1993
      %1995 = vmatmul.f32.gmra.mxu0 %v1935
      %v1996 = vpop.f32.mrf.mxu0
      %v1997 = vadd.f32 0.0, %v1996
      %1998 = vmatmul.f32.gmra.mxu0 %v1936
      %v1999 = vpop.f32.mrf.mxu0
      %v2000 = vadd.f32 0.0, %v1999
      %2001 = vmatmul.f32.gmra.mxu0 %v1937
      %v2002 = vpop.f32.mrf.mxu0
      %v2003 = vadd.f32 0.0, %v2002
      %2004 = vmatmul.f32.gmra.mxu0 %v1938
      %v2005 = vpop.f32.mrf.mxu0
      %v2006 = vadd.f32 0.0, %v2005
      %2007 = vmatmul.f32.gmra.mxu0 %v1939
      %v2008 = vpop.f32.mrf.mxu0
      %v2009 = vadd.f32 0.0, %v2008
      %2010 = vmatmul.f32.gmra.mxu0 %v1940
      %v2011 = vpop.f32.mrf.mxu0
      %v2012 = vadd.f32 0.0, %v2011
      %2013 = vmatmul.f32.gmra.mxu0 %v1941
      %v2014 = vpop.f32.mrf.mxu0
      %v2015 = vadd.f32 0.0, %v2014
      %2016 = vmatmul.f32.gmra.mxu0 %v1942
      %v2017 = vpop.f32.mrf.mxu0
      %v2018 = vadd.f32 0.0, %v2017
      %2019 = vmatmul.f32.gmra.mxu0 %v1943
      %v2020 = vpop.f32.mrf.mxu0
      %v2021 = vadd.f32 0.0, %v2020
      %2022 = vmatmul.f32.gmra.mxu0 %v1944
      %v2023 = vpop.f32.mrf.mxu0
      %v2024 = vadd.f32 0.0, %v2023
      %2025 = vmatmul.f32.gmra.mxu0 %v1945
      %v2026 = vpop.f32.mrf.mxu0
      %v2027 = vadd.f32 0.0, %v2026
      %2028 = vmatmul.f32.gmra.mxu0 %v1946
      %v2029 = vpop.f32.mrf.mxu0
      %v2030 = vadd.f32 0.0, %v2029
      %2031 = vmatmul.f32.gmra.mxu0 %v1947
      %v2032 = vpop.f32.mrf.mxu0
      %v2033 = vadd.f32 0.0, %v2032
      %2034 = vmatmul.f32.gmra.mxu0 %v1948
      %v2035 = vpop.f32.mrf.mxu0
      %v2036 = vadd.f32 0.0, %v2035
      %2037 = vmatmul.f32.gmra.mxu0 %v1949
      %v2038 = vpop.f32.mrf.mxu0
      %v2039 = vadd.f32 0.0, %v2038
      %2040 = vmatmul.f32.gmra.mxu0 %v1950
      %v2041 = vpop.f32.mrf.mxu0
      %v2042 = vadd.f32 0.0, %v2041
      %2043 = vdwg.mxu0
      %2044 = vmatpush.msra.mxu0 %v1930
      %2045 = vmatpush.msra.mxu0 %v1929
      %2046 = vmatpush.msra.mxu0 %v1928
      %2047 = vmatpush.msra.mxu0 %v1927
      %2048 = vmatpush.msra.mxu0 %v1926
      %2049 = vmatpush.msra.mxu0 %v1925
      %2050 = vmatpush.msra.mxu0 %v1924
      %2051 = vmatpush.msra.mxu0 %v1923
      %2052 = vmatpush.msra.mxu0 %v1922
      %2053 = vmatpush.msra.mxu0 %v1921
      %2054 = vmatpush.msra.mxu0 %v1920
      %2055 = vmatpush.msra.mxu0 %v1919
      %2056 = vmatpush.msra.mxu0 %v1918
      %2057 = vmatpush.msra.mxu0 %v1917
      %2058 = vmatpush.msra.mxu0 %v1916
      %2059 = vmatpush.msra.mxu0 %v1915
      %2060 = vmatmul.f32.gmra.mxu0 %v1895
      %v2061 = vpop.f32.mrf.mxu0
      %v2062 = vadd.f32 %v1985, %v2061
      %2063 = vmatmul.f32.gmra.mxu0 %v1896
      %v2064 = vpop.f32.mrf.mxu0
      %v2065 = vadd.f32 %v1988, %v2064
      %2066 = vmatmul.f32.gmra.mxu0 %v1897
      %v2067 = vpop.f32.mrf.mxu0
      %v2068 = vadd.f32 %v1991, %v2067
      %2069 = vmatmul.f32.gmra.mxu0 %v1898
      %v2070 = vpop.f32.mrf.mxu0
      %v2071 = vadd.f32 %v1994, %v2070
      %2072 = vmatmul.f32.gmra.mxu0 %v1899
      %v2073 = vpop.f32.mrf.mxu0
      %v2074 = vadd.f32 %v1997, %v2073
      %2075 = vmatmul.f32.gmra.mxu0 %v1900
      %v2076 = vpop.f32.mrf.mxu0
      %v2077 = vadd.f32 %v2000, %v2076
      %2078 = vmatmul.f32.gmra.mxu0 %v1901
      %v2079 = vpop.f32.mrf.mxu0
      %v2080 = vadd.f32 %v2003, %v2079
      %2081 = vmatmul.f32.gmra.mxu0 %v1902
      %v2082 = vpop.f32.mrf.mxu0
      %v2083 = vadd.f32 %v2006, %v2082
      %2084 = vmatmul.f32.gmra.mxu0 %v1903
      %v2085 = vpop.f32.mrf.mxu0
      %v2086 = vadd.f32 %v2009, %v2085
      %2087 = vmatmul.f32.gmra.mxu0 %v1904
      %v2088 = vpop.f32.mrf.mxu0
      %v2089 = vadd.f32 %v2012, %v2088
      %2090 = vmatmul.f32.gmra.mxu0 %v1905
      %v2091 = vpop.f32.mrf.mxu0
      %v2092 = vadd.f32 %v2015, %v2091
      %2093 = vmatmul.f32.gmra.mxu0 %v1906
      %v2094 = vpop.f32.mrf.mxu0
      %v2095 = vadd.f32 %v2018, %v2094
      %2096 = vmatmul.f32.gmra.mxu0 %v1907
      %v2097 = vpop.f32.mrf.mxu0
      %v2098 = vadd.f32 %v2021, %v2097
      %2099 = vmatmul.f32.gmra.mxu0 %v1908
      %v2100 = vpop.f32.mrf.mxu0
      %v2101 = vadd.f32 %v2024, %v2100
      %2102 = vmatmul.f32.gmra.mxu0 %v1909
      %v2103 = vpop.f32.mrf.mxu0
      %v2104 = vadd.f32 %v2027, %v2103
      %2105 = vmatmul.f32.gmra.mxu0 %v1910
      %v2106 = vpop.f32.mrf.mxu0
      %v2107 = vadd.f32 %v2030, %v2106
      %2108 = vmatmul.f32.gmra.mxu0 %v1911
      %v2109 = vpop.f32.mrf.mxu0
      %v2110 = vadd.f32 %v2033, %v2109
      %2111 = vmatmul.f32.gmra.mxu0 %v1912
      %v2112 = vpop.f32.mrf.mxu0
      %v2113 = vadd.f32 %v2036, %v2112
      %2114 = vmatmul.f32.gmra.mxu0 %v1913
      %v2115 = vpop.f32.mrf.mxu0
      %v2116 = vadd.f32 %v2039, %v2115
      %2117 = vmatmul.f32.gmra.mxu0 %v1914
      %v2118 = vpop.f32.mrf.mxu0
      %v2119 = vadd.f32 %v2042, %v2118
      %2120 = vdwg.mxu0
      %v2121 = vld [vmem:[#allocation2 + $0x2] sm:$0xff]
      %v2122 = vld [vmem:[#allocation2 + $0xa] sm:$0xff]
      %v2123 = vld [vmem:[#allocation2 + $0x1a] sm:$0xff]
      %v2124 = vld [vmem:[#allocation2 + $0x22] sm:$0xff]
      %v2125 = vld [vmem:[#allocation2 + $0x32] sm:$0xff]
      %v2126 = vld [vmem:[#allocation2 + $0x3a] sm:$0xff]
      %v2127 = vld [vmem:[#allocation2 + $0x4a] sm:$0xff]
      %v2128 = vld [vmem:[#allocation2 + $0x52] sm:$0xff]
      %v2129 = vld [vmem:[#allocation2 + $0x62] sm:$0xff]
      %v2130 = vld [vmem:[#allocation2 + $0x6a] sm:$0xff]
      %v2131 = vld [vmem:[#allocation2 + $0x7a] sm:$0xff]
      %v2132 = vld [vmem:[#allocation2 + $0x82] sm:$0xff]
      %v2133 = vld [vmem:[#allocation2 + $0x92] sm:$0xff]
      %v2134 = vld [vmem:[#allocation2 + $0x9a] sm:$0xff]
      %v2135 = vld [vmem:[#allocation2 + $0xaa] sm:$0xff]
      %v2136 = vld [vmem:[#allocation2 + $0xb2] sm:$0xff]
      %v2137 = vld [vmem:[#allocation2 + $0xc2] sm:$0xff]
      %v2138 = vld [vmem:[#allocation2 + $0xca] sm:$0xff]
      %v2139 = vld [vmem:[#allocation2 + $0xda] sm:$0xff]
      %v2140 = vld [vmem:[#allocation2 + $0xe2] sm:$0xff]
      %v2141 = vld [vmem:[%s2 + $0x100] sm:$0xff]
      %v2142 = vld [vmem:[%s2 + $0x108] sm:$0xff]
      %v2143 = vld [vmem:[%s2 + $0x110] sm:$0xff]
      %v2144 = vld [vmem:[%s2 + $0x118] sm:$0xff]
      %v2145 = vld [vmem:[%s2 + $0x120] sm:$0xff]
      %v2146 = vld [vmem:[%s2 + $0x128] sm:$0xff]
      %v2147 = vld [vmem:[%s2 + $0x130] sm:$0xff]
      %v2148 = vld [vmem:[%s2 + $0x138] sm:$0xff]
      %v2149 = vld [vmem:[%s2 + $0x140] sm:$0xff]
      %v2150 = vld [vmem:[%s2 + $0x148] sm:$0xff]
      %v2151 = vld [vmem:[%s2 + $0x150] sm:$0xff]
      %v2152 = vld [vmem:[%s2 + $0x158] sm:$0xff]
      %v2153 = vld [vmem:[%s2 + $0x160] sm:$0xff]
      %v2154 = vld [vmem:[%s2 + $0x168] sm:$0xff]
      %v2155 = vld [vmem:[%s2 + $0x170] sm:$0xff]
      %v2156 = vld [vmem:[%s2 + $0x178] sm:$0xff]
      %2157 = vmatpush.msra.mxu0 %v2156
      %2158 = vmatpush.msra.mxu0 %v2155
      %2159 = vmatpush.msra.mxu0 %v2154
      %2160 = vmatpush.msra.mxu0 %v2153
      %2161 = vmatpush.msra.mxu0 %v2152
      %2162 = vmatpush.msra.mxu0 %v2151
      %2163 = vmatpush.msra.mxu0 %v2150
      %2164 = vmatpush.msra.mxu0 %v2149
      %2165 = vmatpush.msra.mxu0 %v2148
      %2166 = vmatpush.msra.mxu0 %v2147
      %2167 = vmatpush.msra.mxu0 %v2146
      %2168 = vmatpush.msra.mxu0 %v2145
      %2169 = vmatpush.msra.mxu0 %v2144
      %2170 = vmatpush.msra.mxu0 %v2143
      %2171 = vmatpush.msra.mxu0 %v2142
      %2172 = vmatpush.msra.mxu0 %v2141
      %2173 = vmatmul.f32.gmra.mxu0 %v2121
      %v2174 = vpop.f32.mrf.mxu0
      %v2175 = vadd.f32 0.0, %v2174
      %2176 = vmatmul.f32.gmra.mxu0 %v2122
      %v2177 = vpop.f32.mrf.mxu0
      %v2178 = vadd.f32 0.0, %v2177
      %2179 = vmatmul.f32.gmra.mxu0 %v2123
      %v2180 = vpop.f32.mrf.mxu0
      %v2181 = vadd.f32 0.0, %v2180
      %2182 = vmatmul.f32.gmra.mxu0 %v2124
      %v2183 = vpop.f32.mrf.mxu0
      %v2184 = vadd.f32 0.0, %v2183
      %2185 = vmatmul.f32.gmra.mxu0 %v2125
      %v2186 = vpop.f32.mrf.mxu0
      %v2187 = vadd.f32 0.0, %v2186
      %2188 = vmatmul.f32.gmra.mxu0 %v2126
      %v2189 = vpop.f32.mrf.mxu0
      %v2190 = vadd.f32 0.0, %v2189
      %2191 = vmatmul.f32.gmra.mxu0 %v2127
      %v2192 = vpop.f32.mrf.mxu0
      %v2193 = vadd.f32 0.0, %v2192
      %2194 = vmatmul.f32.gmra.mxu0 %v2128
      %v2195 = vpop.f32.mrf.mxu0
      %v2196 = vadd.f32 0.0, %v2195
      %2197 = vmatmul.f32.gmra.mxu0 %v2129
      %v2198 = vpop.f32.mrf.mxu0
      %v2199 = vadd.f32 0.0, %v2198
      %2200 = vmatmul.f32.gmra.mxu0 %v2130
      %v2201 = vpop.f32.mrf.mxu0
      %v2202 = vadd.f32 0.0, %v2201
      %2203 = vmatmul.f32.gmra.mxu0 %v2131
      %v2204 = vpop.f32.mrf.mxu0
      %v2205 = vadd.f32 0.0, %v2204
      %2206 = vmatmul.f32.gmra.mxu0 %v2132
      %v2207 = vpop.f32.mrf.mxu0
      %v2208 = vadd.f32 0.0, %v2207
      %2209 = vmatmul.f32.gmra.mxu0 %v2133
      %v2210 = vpop.f32.mrf.mxu0
      %v2211 = vadd.f32 0.0, %v2210
      %2212 = vmatmul.f32.gmra.mxu0 %v2134
      %v2213 = vpop.f32.mrf.mxu0
      %v2214 = vadd.f32 0.0, %v2213
      %2215 = vmatmul.f32.gmra.mxu0 %v2135
      %v2216 = vpop.f32.mrf.mxu0
      %v2217 = vadd.f32 0.0, %v2216
      %2218 = vmatmul.f32.gmra.mxu0 %v2136
      %v2219 = vpop.f32.mrf.mxu0
      %v2220 = vadd.f32 0.0, %v2219
      %2221 = vmatmul.f32.gmra.mxu0 %v2137
      %v2222 = vpop.f32.mrf.mxu0
      %v2223 = vadd.f32 0.0, %v2222
      %2224 = vmatmul.f32.gmra.mxu0 %v2138
      %v2225 = vpop.f32.mrf.mxu0
      %v2226 = vadd.f32 0.0, %v2225
      %2227 = vmatmul.f32.gmra.mxu0 %v2139
      %v2228 = vpop.f32.mrf.mxu0
      %v2229 = vadd.f32 0.0, %v2228
      %2230 = vmatmul.f32.gmra.mxu0 %v2140
      %v2231 = vpop.f32.mrf.mxu0
      %v2232 = vadd.f32 0.0, %v2231
      %2233 = vdwg.mxu0
      %v2234 = vadd.f32 %v2062, %v2175
      %v2235 = vadd.f32 %v2065, %v2178
      %v2236 = vadd.f32 %v2068, %v2181
      %v2237 = vadd.f32 %v2071, %v2184
      %v2238 = vadd.f32 %v2074, %v2187
      %v2239 = vadd.f32 %v2077, %v2190
      %v2240 = vadd.f32 %v2080, %v2193
      %v2241 = vadd.f32 %v2083, %v2196
      %v2242 = vadd.f32 %v2086, %v2199
      %v2243 = vadd.f32 %v2089, %v2202
      %v2244 = vadd.f32 %v2092, %v2205
      %v2245 = vadd.f32 %v2095, %v2208
      %v2246 = vadd.f32 %v2098, %v2211
      %v2247 = vadd.f32 %v2101, %v2214
      %v2248 = vadd.f32 %v2104, %v2217
      %v2249 = vadd.f32 %v2107, %v2220
      %v2250 = vadd.f32 %v2110, %v2223
      %v2251 = vadd.f32 %v2113, %v2226
      %v2252 = vadd.f32 %v2116, %v2229
      %v2253 = vadd.f32 %v2119, %v2232
      %s2254 = scalar_lea.vmem [#allocation2], 24
      %v2255 = vld [vmem:[%s2254] sm:$0xff]
      %v2256 = vld [vmem:[%s2254 + $0x8] sm:$0xff]
      %v2257 = vld [vmem:[%s2254 + $0x18] sm:$0xff]
      %v2258 = vld [vmem:[%s2254 + $0x20] sm:$0xff]
      %v2259 = vld [vmem:[%s2254 + $0x30] sm:$0xff]
      %v2260 = vld [vmem:[%s2254 + $0x38] sm:$0xff]
      %v2261 = vld [vmem:[%s2254 + $0x48] sm:$0xff]
      %v2262 = vld [vmem:[%s2254 + $0x50] sm:$0xff]
      %v2263 = vld [vmem:[%s2254 + $0x60] sm:$0xff]
      %v2264 = vld [vmem:[%s2254 + $0x68] sm:$0xff]
      %v2265 = vld [vmem:[%s2254 + $0x78] sm:$0xff]
      %v2266 = vld [vmem:[%s2254 + $0x80] sm:$0xff]
      %v2267 = vld [vmem:[%s2254 + $0x90] sm:$0xff]
      %v2268 = vld [vmem:[%s2254 + $0x98] sm:$0xff]
      %v2269 = vld [vmem:[%s2254 + $0xa8] sm:$0xff]
      %v2270 = vld [vmem:[%s2254 + $0xb0] sm:$0xff]
      %v2271 = vld [vmem:[%s2254 + $0xc0] sm:$0xff]
      %v2272 = vld [vmem:[%s2254 + $0xc8] sm:$0xff]
      %v2273 = vld [vmem:[%s2254 + $0xd8] sm:$0xff]
      %v2274 = vld [vmem:[%s2254 + $0xe0] sm:$0xff]
      %v2275 = vld [vmem:[%s2 + $0x180] sm:$0xff]
      %v2276 = vld [vmem:[%s2 + $0x188] sm:$0xff]
      %v2277 = vld [vmem:[%s2 + $0x190] sm:$0xff]
      %v2278 = vld [vmem:[%s2 + $0x198] sm:$0xff]
      %v2279 = vld [vmem:[%s2 + $0x1a0] sm:$0xff]
      %v2280 = vld [vmem:[%s2 + $0x1a8] sm:$0xff]
      %v2281 = vld [vmem:[%s2 + $0x1b0] sm:$0xff]
      %v2282 = vld [vmem:[%s2 + $0x1b8] sm:$0xff]
      %v2283 = vld [vmem:[%s2 + $0x1c0] sm:$0xff]
      %v2284 = vld [vmem:[%s2 + $0x1c8] sm:$0xff]
      %v2285 = vld [vmem:[%s2 + $0x1d0] sm:$0xff]
      %v2286 = vld [vmem:[%s2 + $0x1d8] sm:$0xff]
      %v2287 = vld [vmem:[%s2 + $0x1e0] sm:$0xff]
      %v2288 = vld [vmem:[%s2 + $0x1e8] sm:$0xff]
      %v2289 = vld [vmem:[%s2 + $0x1f0] sm:$0xff]
      %v2290 = vld [vmem:[%s2 + $0x1f8] sm:$0xff]
      %2291 = vmatpush.msra.mxu0 %v2290
      %2292 = vmatpush.msra.mxu0 %v2289
      %2293 = vmatpush.msra.mxu0 %v2288
      %2294 = vmatpush.msra.mxu0 %v2287
      %2295 = vmatpush.msra.mxu0 %v2286
      %2296 = vmatpush.msra.mxu0 %v2285
      %2297 = vmatpush.msra.mxu0 %v2284
      %2298 = vmatpush.msra.mxu0 %v2283
      %2299 = vmatpush.msra.mxu0 %v2282
      %2300 = vmatpush.msra.mxu0 %v2281
      %2301 = vmatpush.msra.mxu0 %v2280
      %2302 = vmatpush.msra.mxu0 %v2279
      %2303 = vmatpush.msra.mxu0 %v2278
      %2304 = vmatpush.msra.mxu0 %v2277
      %2305 = vmatpush.msra.mxu0 %v2276
      %2306 = vmatpush.msra.mxu0 %v2275
      %2307 = vmatmul.f32.gmra.mxu0 %v2255
      %v2308 = vpop.f32.mrf.mxu0
      %v2309 = vadd.f32 0.0, %v2308
      %2310 = vmatmul.f32.gmra.mxu0 %v2256
      %v2311 = vpop.f32.mrf.mxu0
      %v2312 = vadd.f32 0.0, %v2311
      %2313 = vmatmul.f32.gmra.mxu0 %v2257
      %v2314 = vpop.f32.mrf.mxu0
      %v2315 = vadd.f32 0.0, %v2314
      %2316 = vmatmul.f32.gmra.mxu0 %v2258
      %v2317 = vpop.f32.mrf.mxu0
      %v2318 = vadd.f32 0.0, %v2317
      %2319 = vmatmul.f32.gmra.mxu0 %v2259
      %v2320 = vpop.f32.mrf.mxu0
      %v2321 = vadd.f32 0.0, %v2320
      %2322 = vmatmul.f32.gmra.mxu0 %v2260
      %v2323 = vpop.f32.mrf.mxu0
      %v2324 = vadd.f32 0.0, %v2323
      %2325 = vmatmul.f32.gmra.mxu0 %v2261
      %v2326 = vpop.f32.mrf.mxu0
      %v2327 = vadd.f32 0.0, %v2326
      %2328 = vmatmul.f32.gmra.mxu0 %v2262
      %v2329 = vpop.f32.mrf.mxu0
      %v2330 = vadd.f32 0.0, %v2329
      %2331 = vmatmul.f32.gmra.mxu0 %v2263
      %v2332 = vpop.f32.mrf.mxu0
      %v2333 = vadd.f32 0.0, %v2332
      %2334 = vmatmul.f32.gmra.mxu0 %v2264
      %v2335 = vpop.f32.mrf.mxu0
      %v2336 = vadd.f32 0.0, %v2335
      %2337 = vmatmul.f32.gmra.mxu0 %v2265
      %v2338 = vpop.f32.mrf.mxu0
      %v2339 = vadd.f32 0.0, %v2338
      %2340 = vmatmul.f32.gmra.mxu0 %v2266
      %v2341 = vpop.f32.mrf.mxu0
      %v2342 = vadd.f32 0.0, %v2341
      %2343 = vmatmul.f32.gmra.mxu0 %v2267
      %v2344 = vpop.f32.mrf.mxu0
      %v2345 = vadd.f32 0.0, %v2344
      %2346 = vmatmul.f32.gmra.mxu0 %v2268
      %v2347 = vpop.f32.mrf.mxu0
      %v2348 = vadd.f32 0.0, %v2347
      %2349 = vmatmul.f32.gmra.mxu0 %v2269
      %v2350 = vpop.f32.mrf.mxu0
      %v2351 = vadd.f32 0.0, %v2350
      %2352 = vmatmul.f32.gmra.mxu0 %v2270
      %v2353 = vpop.f32.mrf.mxu0
      %v2354 = vadd.f32 0.0, %v2353
      %2355 = vmatmul.f32.gmra.mxu0 %v2271
      %v2356 = vpop.f32.mrf.mxu0
      %v2357 = vadd.f32 0.0, %v2356
      %2358 = vmatmul.f32.gmra.mxu0 %v2272
      %v2359 = vpop.f32.mrf.mxu0
      %v2360 = vadd.f32 0.0, %v2359
      %2361 = vmatmul.f32.gmra.mxu0 %v2273
      %v2362 = vpop.f32.mrf.mxu0
      %v2363 = vadd.f32 0.0, %v2362
      %2364 = vmatmul.f32.gmra.mxu0 %v2274
      %v2365 = vpop.f32.mrf.mxu0
      %v2366 = vadd.f32 0.0, %v2365
      %2367 = vdwg.mxu0
      %v2368 = vadd.f32 %v2234, %v2309
      %v2369 = vadd.f32 %v2235, %v2312
      %v2370 = vadd.f32 %v2236, %v2315
      %v2371 = vadd.f32 %v2237, %v2318
      %v2372 = vadd.f32 %v2238, %v2321
      %v2373 = vadd.f32 %v2239, %v2324
      %v2374 = vadd.f32 %v2240, %v2327
      %v2375 = vadd.f32 %v2241, %v2330
      %v2376 = vadd.f32 %v2242, %v2333
      %v2377 = vadd.f32 %v2243, %v2336
      %v2378 = vadd.f32 %v2244, %v2339
      %v2379 = vadd.f32 %v2245, %v2342
      %v2380 = vadd.f32 %v2246, %v2345
      %v2381 = vadd.f32 %v2247, %v2348
      %v2382 = vadd.f32 %v2248, %v2351
      %v2383 = vadd.f32 %v2249, %v2354
      %v2384 = vadd.f32 %v2250, %v2357
      %v2385 = vadd.f32 %v2251, %v2360
      %v2386 = vadd.f32 %v2252, %v2363
      %v2387 = vadd.f32 %v2253, %v2366
      %v2388 = vld [vmem:[%s2254 + $0x1] sm:$0xff]
      %v2389 = vld [vmem:[%s2254 + $0x9] sm:$0xff]
      %v2390 = vld [vmem:[%s2254 + $0x19] sm:$0xff]
      %v2391 = vld [vmem:[%s2254 + $0x21] sm:$0xff]
      %v2392 = vld [vmem:[%s2254 + $0x31] sm:$0xff]
      %v2393 = vld [vmem:[%s2254 + $0x39] sm:$0xff]
      %v2394 = vld [vmem:[%s2254 + $0x49] sm:$0xff]
      %v2395 = vld [vmem:[%s2254 + $0x51] sm:$0xff]
      %v2396 = vld [vmem:[%s2254 + $0x61] sm:$0xff]
      %v2397 = vld [vmem:[%s2254 + $0x69] sm:$0xff]
      %v2398 = vld [vmem:[%s2254 + $0x79] sm:$0xff]
      %v2399 = vld [vmem:[%s2254 + $0x81] sm:$0xff]
      %v2400 = vld [vmem:[%s2254 + $0x91] sm:$0xff]
      %v2401 = vld [vmem:[%s2254 + $0x99] sm:$0xff]
      %v2402 = vld [vmem:[%s2254 + $0xa9] sm:$0xff]
      %v2403 = vld [vmem:[%s2254 + $0xb1] sm:$0xff]
      %v2404 = vld [vmem:[%s2254 + $0xc1] sm:$0xff]
      %v2405 = vld [vmem:[%s2254 + $0xc9] sm:$0xff]
      %v2406 = vld [vmem:[%s2254 + $0xd9] sm:$0xff]
      %v2407 = vld [vmem:[%s2254 + $0xe1] sm:$0xff]
      %v2408 = vld [vmem:[%s2 + $0x200] sm:$0xff]
      %v2409 = vld [vmem:[%s2 + $0x208] sm:$0xff]
      %v2410 = vld [vmem:[%s2 + $0x210] sm:$0xff]
      %v2411 = vld [vmem:[%s2 + $0x218] sm:$0xff]
      %v2412 = vld [vmem:[%s2 + $0x220] sm:$0xff]
      %v2413 = vld [vmem:[%s2 + $0x228] sm:$0xff]
      %v2414 = vld [vmem:[%s2 + $0x230] sm:$0xff]
      %v2415 = vld [vmem:[%s2 + $0x238] sm:$0xff]
      %v2416 = vld [vmem:[%s2 + $0x240] sm:$0xff]
      %v2417 = vld [vmem:[%s2 + $0x248] sm:$0xff]
      %v2418 = vld [vmem:[%s2 + $0x250] sm:$0xff]
      %v2419 = vld [vmem:[%s2 + $0x258] sm:$0xff]
      %v2420 = vld [vmem:[%s2 + $0x260] sm:$0xff]
      %v2421 = vld [vmem:[%s2 + $0x268] sm:$0xff]
      %v2422 = vld [vmem:[%s2 + $0x270] sm:$0xff]
      %v2423 = vld [vmem:[%s2 + $0x278] sm:$0xff]
      %2424 = vmatpush.msra.mxu0 %v2423
      %2425 = vmatpush.msra.mxu0 %v2422
      %2426 = vmatpush.msra.mxu0 %v2421
      %2427 = vmatpush.msra.mxu0 %v2420
      %2428 = vmatpush.msra.mxu0 %v2419
      %2429 = vmatpush.msra.mxu0 %v2418
      %2430 = vmatpush.msra.mxu0 %v2417
      %2431 = vmatpush.msra.mxu0 %v2416
      %2432 = vmatpush.msra.mxu0 %v2415
      %2433 = vmatpush.msra.mxu0 %v2414
      %2434 = vmatpush.msra.mxu0 %v2413
      %2435 = vmatpush.msra.mxu0 %v2412
      %2436 = vmatpush.msra.mxu0 %v2411
      %2437 = vmatpush.msra.mxu0 %v2410
      %2438 = vmatpush.msra.mxu0 %v2409
      %2439 = vmatpush.msra.mxu0 %v2408
      %2440 = vmatmul.f32.gmra.mxu0 %v2388
      %v2441 = vpop.f32.mrf.mxu0
      %v2442 = vadd.f32 0.0, %v2441
      %2443 = vmatmul.f32.gmra.mxu0 %v2389
      %v2444 = vpop.f32.mrf.mxu0
      %v2445 = vadd.f32 0.0, %v2444
      %2446 = vmatmul.f32.gmra.mxu0 %v2390
      %v2447 = vpop.f32.mrf.mxu0
      %v2448 = vadd.f32 0.0, %v2447
      %2449 = vmatmul.f32.gmra.mxu0 %v2391
      %v2450 = vpop.f32.mrf.mxu0
      %v2451 = vadd.f32 0.0, %v2450
      %2452 = vmatmul.f32.gmra.mxu0 %v2392
      %v2453 = vpop.f32.mrf.mxu0
      %v2454 = vadd.f32 0.0, %v2453
      %2455 = vmatmul.f32.gmra.mxu0 %v2393
      %v2456 = vpop.f32.mrf.mxu0
      %v2457 = vadd.f32 0.0, %v2456
      %2458 = vmatmul.f32.gmra.mxu0 %v2394
      %v2459 = vpop.f32.mrf.mxu0
      %v2460 = vadd.f32 0.0, %v2459
      %2461 = vmatmul.f32.gmra.mxu0 %v2395
      %v2462 = vpop.f32.mrf.mxu0
      %v2463 = vadd.f32 0.0, %v2462
      %2464 = vmatmul.f32.gmra.mxu0 %v2396
      %v2465 = vpop.f32.mrf.mxu0
      %v2466 = vadd.f32 0.0, %v2465
      %2467 = vmatmul.f32.gmra.mxu0 %v2397
      %v2468 = vpop.f32.mrf.mxu0
      %v2469 = vadd.f32 0.0, %v2468
      %2470 = vmatmul.f32.gmra.mxu0 %v2398
      %v2471 = vpop.f32.mrf.mxu0
      %v2472 = vadd.f32 0.0, %v2471
      %2473 = vmatmul.f32.gmra.mxu0 %v2399
      %v2474 = vpop.f32.mrf.mxu0
      %v2475 = vadd.f32 0.0, %v2474
      %2476 = vmatmul.f32.gmra.mxu0 %v2400
      %v2477 = vpop.f32.mrf.mxu0
      %v2478 = vadd.f32 0.0, %v2477
      %2479 = vmatmul.f32.gmra.mxu0 %v2401
      %v2480 = vpop.f32.mrf.mxu0
      %v2481 = vadd.f32 0.0, %v2480
      %2482 = vmatmul.f32.gmra.mxu0 %v2402
      %v2483 = vpop.f32.mrf.mxu0
      %v2484 = vadd.f32 0.0, %v2483
      %2485 = vmatmul.f32.gmra.mxu0 %v2403
      %v2486 = vpop.f32.mrf.mxu0
      %v2487 = vadd.f32 0.0, %v2486
      %2488 = vmatmul.f32.gmra.mxu0 %v2404
      %v2489 = vpop.f32.mrf.mxu0
      %v2490 = vadd.f32 0.0, %v2489
      %2491 = vmatmul.f32.gmra.mxu0 %v2405
      %v2492 = vpop.f32.mrf.mxu0
      %v2493 = vadd.f32 0.0, %v2492
      %2494 = vmatmul.f32.gmra.mxu0 %v2406
      %v2495 = vpop.f32.mrf.mxu0
      %v2496 = vadd.f32 0.0, %v2495
      %2497 = vmatmul.f32.gmra.mxu0 %v2407
      %v2498 = vpop.f32.mrf.mxu0
      %v2499 = vadd.f32 0.0, %v2498
      %2500 = vdwg.mxu0
      %v2501 = vadd.f32 %v2368, %v2442
      %v2502 = vadd.f32 %v2369, %v2445
      %v2503 = vadd.f32 %v2370, %v2448
      %v2504 = vadd.f32 %v2371, %v2451
      %v2505 = vadd.f32 %v2372, %v2454
      %v2506 = vadd.f32 %v2373, %v2457
      %v2507 = vadd.f32 %v2374, %v2460
      %v2508 = vadd.f32 %v2375, %v2463
      %v2509 = vadd.f32 %v2376, %v2466
      %v2510 = vadd.f32 %v2377, %v2469
      %v2511 = vadd.f32 %v2378, %v2472
      %v2512 = vadd.f32 %v2379, %v2475
      %v2513 = vadd.f32 %v2380, %v2478
      %v2514 = vadd.f32 %v2381, %v2481
      %v2515 = vadd.f32 %v2382, %v2484
      %v2516 = vadd.f32 %v2383, %v2487
      %v2517 = vadd.f32 %v2384, %v2490
      %v2518 = vadd.f32 %v2385, %v2493
      %v2519 = vadd.f32 %v2386, %v2496
      %v2520 = vadd.f32 %v2387, %v2499
      %v2521 = vld [vmem:[%s2254 + $0x2] sm:$0xff]
      %v2522 = vld [vmem:[%s2254 + $0xa] sm:$0xff]
      %v2523 = vld [vmem:[%s2254 + $0x1a] sm:$0xff]
      %v2524 = vld [vmem:[%s2254 + $0x22] sm:$0xff]
      %v2525 = vld [vmem:[%s2254 + $0x32] sm:$0xff]
      %v2526 = vld [vmem:[%s2254 + $0x3a] sm:$0xff]
      %v2527 = vld [vmem:[%s2254 + $0x4a] sm:$0xff]
      %v2528 = vld [vmem:[%s2254 + $0x52] sm:$0xff]
      %v2529 = vld [vmem:[%s2254 + $0x62] sm:$0xff]
      %v2530 = vld [vmem:[%s2254 + $0x6a] sm:$0xff]
      %v2531 = vld [vmem:[%s2254 + $0x7a] sm:$0xff]
      %v2532 = vld [vmem:[%s2254 + $0x82] sm:$0xff]
      %v2533 = vld [vmem:[%s2254 + $0x92] sm:$0xff]
      %v2534 = vld [vmem:[%s2254 + $0x9a] sm:$0xff]
      %v2535 = vld [vmem:[%s2254 + $0xaa] sm:$0xff]
      %v2536 = vld [vmem:[%s2254 + $0xb2] sm:$0xff]
      %v2537 = vld [vmem:[%s2254 + $0xc2] sm:$0xff]
      %v2538 = vld [vmem:[%s2254 + $0xca] sm:$0xff]
      %v2539 = vld [vmem:[%s2254 + $0xda] sm:$0xff]
      %v2540 = vld [vmem:[%s2254 + $0xe2] sm:$0xff]
      %v2541 = vld [vmem:[%s2 + $0x280] sm:$0xff]
      %v2542 = vld [vmem:[%s2 + $0x288] sm:$0xff]
      %v2543 = vld [vmem:[%s2 + $0x290] sm:$0xff]
      %v2544 = vld [vmem:[%s2 + $0x298] sm:$0xff]
      %v2545 = vld [vmem:[%s2 + $0x2a0] sm:$0xff]
      %v2546 = vld [vmem:[%s2 + $0x2a8] sm:$0xff]
      %v2547 = vld [vmem:[%s2 + $0x2b0] sm:$0xff]
      %v2548 = vld [vmem:[%s2 + $0x2b8] sm:$0xff]
      %v2549 = vld [vmem:[%s2 + $0x2c0] sm:$0xff]
      %v2550 = vld [vmem:[%s2 + $0x2c8] sm:$0xff]
      %v2551 = vld [vmem:[%s2 + $0x2d0] sm:$0xff]
      %v2552 = vld [vmem:[%s2 + $0x2d8] sm:$0xff]
      %v2553 = vld [vmem:[%s2 + $0x2e0] sm:$0xff]
      %v2554 = vld [vmem:[%s2 + $0x2e8] sm:$0xff]
      %v2555 = vld [vmem:[%s2 + $0x2f0] sm:$0xff]
      %v2556 = vld [vmem:[%s2 + $0x2f8] sm:$0xff]
      %2557 = vmatpush.msra.mxu0 %v2556
      %2558 = vmatpush.msra.mxu0 %v2555
      %2559 = vmatpush.msra.mxu0 %v2554
      %2560 = vmatpush.msra.mxu0 %v2553
      %2561 = vmatpush.msra.mxu0 %v2552
      %2562 = vmatpush.msra.mxu0 %v2551
      %2563 = vmatpush.msra.mxu0 %v2550
      %2564 = vmatpush.msra.mxu0 %v2549
      %2565 = vmatpush.msra.mxu0 %v2548
      %2566 = vmatpush.msra.mxu0 %v2547
      %2567 = vmatpush.msra.mxu0 %v2546
      %2568 = vmatpush.msra.mxu0 %v2545
      %2569 = vmatpush.msra.mxu0 %v2544
      %2570 = vmatpush.msra.mxu0 %v2543
      %2571 = vmatpush.msra.mxu0 %v2542
      %2572 = vmatpush.msra.mxu0 %v2541
      %2573 = vmatmul.f32.gmra.mxu0 %v2521
      %v2574 = vpop.f32.mrf.mxu0
      %v2575 = vadd.f32 0.0, %v2574
      %2576 = vmatmul.f32.gmra.mxu0 %v2522
      %v2577 = vpop.f32.mrf.mxu0
      %v2578 = vadd.f32 0.0, %v2577
      %2579 = vmatmul.f32.gmra.mxu0 %v2523
      %v2580 = vpop.f32.mrf.mxu0
      %v2581 = vadd.f32 0.0, %v2580
      %2582 = vmatmul.f32.gmra.mxu0 %v2524
      %v2583 = vpop.f32.mrf.mxu0
      %v2584 = vadd.f32 0.0, %v2583
      %2585 = vmatmul.f32.gmra.mxu0 %v2525
      %v2586 = vpop.f32.mrf.mxu0
      %v2587 = vadd.f32 0.0, %v2586
      %2588 = vmatmul.f32.gmra.mxu0 %v2526
      %v2589 = vpop.f32.mrf.mxu0
      %v2590 = vadd.f32 0.0, %v2589
      %2591 = vmatmul.f32.gmra.mxu0 %v2527
      %v2592 = vpop.f32.mrf.mxu0
      %v2593 = vadd.f32 0.0, %v2592
      %2594 = vmatmul.f32.gmra.mxu0 %v2528
      %v2595 = vpop.f32.mrf.mxu0
      %v2596 = vadd.f32 0.0, %v2595
      %2597 = vmatmul.f32.gmra.mxu0 %v2529
      %v2598 = vpop.f32.mrf.mxu0
      %v2599 = vadd.f32 0.0, %v2598
      %2600 = vmatmul.f32.gmra.mxu0 %v2530
      %v2601 = vpop.f32.mrf.mxu0
      %v2602 = vadd.f32 0.0, %v2601
      %2603 = vmatmul.f32.gmra.mxu0 %v2531
      %v2604 = vpop.f32.mrf.mxu0
      %v2605 = vadd.f32 0.0, %v2604
      %2606 = vmatmul.f32.gmra.mxu0 %v2532
      %v2607 = vpop.f32.mrf.mxu0
      %v2608 = vadd.f32 0.0, %v2607
      %2609 = vmatmul.f32.gmra.mxu0 %v2533
      %v2610 = vpop.f32.mrf.mxu0
      %v2611 = vadd.f32 0.0, %v2610
      %2612 = vmatmul.f32.gmra.mxu0 %v2534
      %v2613 = vpop.f32.mrf.mxu0
      %v2614 = vadd.f32 0.0, %v2613
      %2615 = vmatmul.f32.gmra.mxu0 %v2535
      %v2616 = vpop.f32.mrf.mxu0
      %v2617 = vadd.f32 0.0, %v2616
      %2618 = vmatmul.f32.gmra.mxu0 %v2536
      %v2619 = vpop.f32.mrf.mxu0
      %v2620 = vadd.f32 0.0, %v2619
      %2621 = vmatmul.f32.gmra.mxu0 %v2537
      %v2622 = vpop.f32.mrf.mxu0
      %v2623 = vadd.f32 0.0, %v2622
      %2624 = vmatmul.f32.gmra.mxu0 %v2538
      %v2625 = vpop.f32.mrf.mxu0
      %v2626 = vadd.f32 0.0, %v2625
      %2627 = vmatmul.f32.gmra.mxu0 %v2539
      %v2628 = vpop.f32.mrf.mxu0
      %v2629 = vadd.f32 0.0, %v2628
      %2630 = vmatmul.f32.gmra.mxu0 %v2540
      %v2631 = vpop.f32.mrf.mxu0
      %v2632 = vadd.f32 0.0, %v2631
      %2633 = vdwg.mxu0
      %v2634 = vadd.f32 %v2501, %v2575
      %v2635 = vadd.f32 %v2502, %v2578
      %v2636 = vadd.f32 %v2503, %v2581
      %v2637 = vadd.f32 %v2504, %v2584
      %v2638 = vadd.f32 %v2505, %v2587
      %v2639 = vadd.f32 %v2506, %v2590
      %v2640 = vadd.f32 %v2507, %v2593
      %v2641 = vadd.f32 %v2508, %v2596
      %v2642 = vadd.f32 %v2509, %v2599
      %v2643 = vadd.f32 %v2510, %v2602
      %v2644 = vadd.f32 %v2511, %v2605
      %v2645 = vadd.f32 %v2512, %v2608
      %v2646 = vadd.f32 %v2513, %v2611
      %v2647 = vadd.f32 %v2514, %v2614
      %v2648 = vadd.f32 %v2515, %v2617
      %v2649 = vadd.f32 %v2516, %v2620
      %v2650 = vadd.f32 %v2517, %v2623
      %v2651 = vadd.f32 %v2518, %v2626
      %v2652 = vadd.f32 %v2519, %v2629
      %v2653 = vadd.f32 %v2520, %v2632
      %s2654 = scalar_lea.vmem [#allocation2], 48
      %v2655 = vld [vmem:[%s2654] sm:$0xff]
      %v2656 = vld [vmem:[%s2654 + $0x8] sm:$0xff]
      %v2657 = vld [vmem:[%s2654 + $0x18] sm:$0xff]
      %v2658 = vld [vmem:[%s2654 + $0x20] sm:$0xff]
      %v2659 = vld [vmem:[%s2654 + $0x30] sm:$0xff]
      %v2660 = vld [vmem:[%s2654 + $0x38] sm:$0xff]
      %v2661 = vld [vmem:[%s2654 + $0x48] sm:$0xff]
      %v2662 = vld [vmem:[%s2654 + $0x50] sm:$0xff]
      %v2663 = vld [vmem:[%s2654 + $0x60] sm:$0xff]
      %v2664 = vld [vmem:[%s2654 + $0x68] sm:$0xff]
      %v2665 = vld [vmem:[%s2654 + $0x78] sm:$0xff]
      %v2666 = vld [vmem:[%s2654 + $0x80] sm:$0xff]
      %v2667 = vld [vmem:[%s2654 + $0x90] sm:$0xff]
      %v2668 = vld [vmem:[%s2654 + $0x98] sm:$0xff]
      %v2669 = vld [vmem:[%s2654 + $0xa8] sm:$0xff]
      %v2670 = vld [vmem:[%s2654 + $0xb0] sm:$0xff]
      %v2671 = vld [vmem:[%s2654 + $0xc0] sm:$0xff]
      %v2672 = vld [vmem:[%s2654 + $0xc8] sm:$0xff]
      %v2673 = vld [vmem:[%s2654 + $0xd8] sm:$0xff]
      %v2674 = vld [vmem:[%s2654 + $0xe0] sm:$0xff]
      %v2675 = vld [vmem:[%s2 + $0x300] sm:$0xff]
      %v2676 = vld [vmem:[%s2 + $0x308] sm:$0xff]
      %v2677 = vld [vmem:[%s2 + $0x310] sm:$0xff]
      %v2678 = vld [vmem:[%s2 + $0x318] sm:$0xff]
      %v2679 = vld [vmem:[%s2 + $0x320] sm:$0xff]
      %v2680 = vld [vmem:[%s2 + $0x328] sm:$0xff]
      %v2681 = vld [vmem:[%s2 + $0x330] sm:$0xff]
      %v2682 = vld [vmem:[%s2 + $0x338] sm:$0xff]
      %v2683 = vld [vmem:[%s2 + $0x340] sm:$0xff]
      %v2684 = vld [vmem:[%s2 + $0x348] sm:$0xff]
      %v2685 = vld [vmem:[%s2 + $0x350] sm:$0xff]
      %v2686 = vld [vmem:[%s2 + $0x358] sm:$0xff]
      %v2687 = vld [vmem:[%s2 + $0x360] sm:$0xff]
      %v2688 = vld [vmem:[%s2 + $0x368] sm:$0xff]
      %v2689 = vld [vmem:[%s2 + $0x370] sm:$0xff]
      %v2690 = vld [vmem:[%s2 + $0x378] sm:$0xff]
      %2691 = vmatpush.msra.mxu0 %v2690
      %2692 = vmatpush.msra.mxu0 %v2689
      %2693 = vmatpush.msra.mxu0 %v2688
      %2694 = vmatpush.msra.mxu0 %v2687
      %2695 = vmatpush.msra.mxu0 %v2686
      %2696 = vmatpush.msra.mxu0 %v2685
      %2697 = vmatpush.msra.mxu0 %v2684
      %2698 = vmatpush.msra.mxu0 %v2683
      %2699 = vmatpush.msra.mxu0 %v2682
      %2700 = vmatpush.msra.mxu0 %v2681
      %2701 = vmatpush.msra.mxu0 %v2680
      %2702 = vmatpush.msra.mxu0 %v2679
      %2703 = vmatpush.msra.mxu0 %v2678
      %2704 = vmatpush.msra.mxu0 %v2677
      %2705 = vmatpush.msra.mxu0 %v2676
      %2706 = vmatpush.msra.mxu0 %v2675
      %2707 = vmatmul.f32.gmra.mxu0 %v2655
      %v2708 = vpop.f32.mrf.mxu0
      %v2709 = vadd.f32 0.0, %v2708
      %2710 = vmatmul.f32.gmra.mxu0 %v2656
      %v2711 = vpop.f32.mrf.mxu0
      %v2712 = vadd.f32 0.0, %v2711
      %2713 = vmatmul.f32.gmra.mxu0 %v2657
      %v2714 = vpop.f32.mrf.mxu0
      %v2715 = vadd.f32 0.0, %v2714
      %2716 = vmatmul.f32.gmra.mxu0 %v2658
      %v2717 = vpop.f32.mrf.mxu0
      %v2718 = vadd.f32 0.0, %v2717
      %2719 = vmatmul.f32.gmra.mxu0 %v2659
      %v2720 = vpop.f32.mrf.mxu0
      %v2721 = vadd.f32 0.0, %v2720
      %2722 = vmatmul.f32.gmra.mxu0 %v2660
      %v2723 = vpop.f32.mrf.mxu0
      %v2724 = vadd.f32 0.0, %v2723
      %2725 = vmatmul.f32.gmra.mxu0 %v2661
      %v2726 = vpop.f32.mrf.mxu0
      %v2727 = vadd.f32 0.0, %v2726
      %2728 = vmatmul.f32.gmra.mxu0 %v2662
      %v2729 = vpop.f32.mrf.mxu0
      %v2730 = vadd.f32 0.0, %v2729
      %2731 = vmatmul.f32.gmra.mxu0 %v2663
      %v2732 = vpop.f32.mrf.mxu0
      %v2733 = vadd.f32 0.0, %v2732
      %2734 = vmatmul.f32.gmra.mxu0 %v2664
      %v2735 = vpop.f32.mrf.mxu0
      %v2736 = vadd.f32 0.0, %v2735
      %2737 = vmatmul.f32.gmra.mxu0 %v2665
      %v2738 = vpop.f32.mrf.mxu0
      %v2739 = vadd.f32 0.0, %v2738
      %2740 = vmatmul.f32.gmra.mxu0 %v2666
      %v2741 = vpop.f32.mrf.mxu0
      %v2742 = vadd.f32 0.0, %v2741
      %2743 = vmatmul.f32.gmra.mxu0 %v2667
      %v2744 = vpop.f32.mrf.mxu0
      %v2745 = vadd.f32 0.0, %v2744
      %2746 = vmatmul.f32.gmra.mxu0 %v2668
      %v2747 = vpop.f32.mrf.mxu0
      %v2748 = vadd.f32 0.0, %v2747
      %2749 = vmatmul.f32.gmra.mxu0 %v2669
      %v2750 = vpop.f32.mrf.mxu0
      %v2751 = vadd.f32 0.0, %v2750
      %2752 = vmatmul.f32.gmra.mxu0 %v2670
      %v2753 = vpop.f32.mrf.mxu0
      %v2754 = vadd.f32 0.0, %v2753
      %2755 = vmatmul.f32.gmra.mxu0 %v2671
      %v2756 = vpop.f32.mrf.mxu0
      %v2757 = vadd.f32 0.0, %v2756
      %2758 = vmatmul.f32.gmra.mxu0 %v2672
      %v2759 = vpop.f32.mrf.mxu0
      %v2760 = vadd.f32 0.0, %v2759
      %2761 = vmatmul.f32.gmra.mxu0 %v2673
      %v2762 = vpop.f32.mrf.mxu0
      %v2763 = vadd.f32 0.0, %v2762
      %2764 = vmatmul.f32.gmra.mxu0 %v2674
      %v2765 = vpop.f32.mrf.mxu0
      %v2766 = vadd.f32 0.0, %v2765
      %2767 = vdwg.mxu0
      %v2768 = vadd.f32 %v2634, %v2709
      %v2769 = vadd.f32 %v2635, %v2712
      %v2770 = vadd.f32 %v2636, %v2715
      %v2771 = vadd.f32 %v2637, %v2718
      %v2772 = vadd.f32 %v2638, %v2721
      %v2773 = vadd.f32 %v2639, %v2724
      %v2774 = vadd.f32 %v2640, %v2727
      %v2775 = vadd.f32 %v2641, %v2730
      %v2776 = vadd.f32 %v2642, %v2733
      %v2777 = vadd.f32 %v2643, %v2736
      %v2778 = vadd.f32 %v2644, %v2739
      %v2779 = vadd.f32 %v2645, %v2742
      %v2780 = vadd.f32 %v2646, %v2745
      %v2781 = vadd.f32 %v2647, %v2748
      %v2782 = vadd.f32 %v2648, %v2751
      %v2783 = vadd.f32 %v2649, %v2754
      %v2784 = vadd.f32 %v2650, %v2757
      %v2785 = vadd.f32 %v2651, %v2760
      %v2786 = vadd.f32 %v2652, %v2763
      %v2787 = vadd.f32 %v2653, %v2766
      %v2788 = vld [vmem:[%s2654 + $0x1] sm:$0xff]
      %v2789 = vld [vmem:[%s2654 + $0x9] sm:$0xff]
      %v2790 = vld [vmem:[%s2654 + $0x19] sm:$0xff]
      %v2791 = vld [vmem:[%s2654 + $0x21] sm:$0xff]
      %v2792 = vld [vmem:[%s2654 + $0x31] sm:$0xff]
      %v2793 = vld [vmem:[%s2654 + $0x39] sm:$0xff]
      %v2794 = vld [vmem:[%s2654 + $0x49] sm:$0xff]
      %v2795 = vld [vmem:[%s2654 + $0x51] sm:$0xff]
      %v2796 = vld [vmem:[%s2654 + $0x61] sm:$0xff]
      %v2797 = vld [vmem:[%s2654 + $0x69] sm:$0xff]
      %v2798 = vld [vmem:[%s2654 + $0x79] sm:$0xff]
      %v2799 = vld [vmem:[%s2654 + $0x81] sm:$0xff]
      %v2800 = vld [vmem:[%s2654 + $0x91] sm:$0xff]
      %v2801 = vld [vmem:[%s2654 + $0x99] sm:$0xff]
      %v2802 = vld [vmem:[%s2654 + $0xa9] sm:$0xff]
      %v2803 = vld [vmem:[%s2654 + $0xb1] sm:$0xff]
      %v2804 = vld [vmem:[%s2654 + $0xc1] sm:$0xff]
      %v2805 = vld [vmem:[%s2654 + $0xc9] sm:$0xff]
      %v2806 = vld [vmem:[%s2654 + $0xd9] sm:$0xff]
      %v2807 = vld [vmem:[%s2654 + $0xe1] sm:$0xff]
      %v2808 = vld [vmem:[%s2 + $0x380] sm:$0xff]
      %v2809 = vld [vmem:[%s2 + $0x388] sm:$0xff]
      %v2810 = vld [vmem:[%s2 + $0x390] sm:$0xff]
      %v2811 = vld [vmem:[%s2 + $0x398] sm:$0xff]
      %v2812 = vld [vmem:[%s2 + $0x3a0] sm:$0xff]
      %v2813 = vld [vmem:[%s2 + $0x3a8] sm:$0xff]
      %v2814 = vld [vmem:[%s2 + $0x3b0] sm:$0xff]
      %v2815 = vld [vmem:[%s2 + $0x3b8] sm:$0xff]
      %v2816 = vld [vmem:[%s2 + $0x3c0] sm:$0xff]
      %v2817 = vld [vmem:[%s2 + $0x3c8] sm:$0xff]
      %v2818 = vld [vmem:[%s2 + $0x3d0] sm:$0xff]
      %v2819 = vld [vmem:[%s2 + $0x3d8] sm:$0xff]
      %v2820 = vld [vmem:[%s2 + $0x3e0] sm:$0xff]
      %v2821 = vld [vmem:[%s2 + $0x3e8] sm:$0xff]
      %v2822 = vld [vmem:[%s2 + $0x3f0] sm:$0xff]
      %v2823 = vld [vmem:[%s2 + $0x3f8] sm:$0xff]
      %2824 = vmatpush.msra.mxu0 %v2823
      %2825 = vmatpush.msra.mxu0 %v2822
      %2826 = vmatpush.msra.mxu0 %v2821
      %2827 = vmatpush.msra.mxu0 %v2820
      %2828 = vmatpush.msra.mxu0 %v2819
      %2829 = vmatpush.msra.mxu0 %v2818
      %2830 = vmatpush.msra.mxu0 %v2817
      %2831 = vmatpush.msra.mxu0 %v2816
      %2832 = vmatpush.msra.mxu0 %v2815
      %2833 = vmatpush.msra.mxu0 %v2814
      %2834 = vmatpush.msra.mxu0 %v2813
      %2835 = vmatpush.msra.mxu0 %v2812
      %2836 = vmatpush.msra.mxu0 %v2811
      %2837 = vmatpush.msra.mxu0 %v2810
      %2838 = vmatpush.msra.mxu0 %v2809
      %2839 = vmatpush.msra.mxu0 %v2808
      %2840 = vmatmul.f32.gmra.mxu0 %v2788
      %v2841 = vpop.f32.mrf.mxu0
      %v2842 = vadd.f32 0.0, %v2841
      %2843 = vmatmul.f32.gmra.mxu0 %v2789
      %v2844 = vpop.f32.mrf.mxu0
      %v2845 = vadd.f32 0.0, %v2844
      %2846 = vmatmul.f32.gmra.mxu0 %v2790
      %v2847 = vpop.f32.mrf.mxu0
      %v2848 = vadd.f32 0.0, %v2847
      %2849 = vmatmul.f32.gmra.mxu0 %v2791
      %v2850 = vpop.f32.mrf.mxu0
      %v2851 = vadd.f32 0.0, %v2850
      %2852 = vmatmul.f32.gmra.mxu0 %v2792
      %v2853 = vpop.f32.mrf.mxu0
      %v2854 = vadd.f32 0.0, %v2853
      %2855 = vmatmul.f32.gmra.mxu0 %v2793
      %v2856 = vpop.f32.mrf.mxu0
      %v2857 = vadd.f32 0.0, %v2856
      %2858 = vmatmul.f32.gmra.mxu0 %v2794
      %v2859 = vpop.f32.mrf.mxu0
      %v2860 = vadd.f32 0.0, %v2859
      %2861 = vmatmul.f32.gmra.mxu0 %v2795
      %v2862 = vpop.f32.mrf.mxu0
      %v2863 = vadd.f32 0.0, %v2862
      %2864 = vmatmul.f32.gmra.mxu0 %v2796
      %v2865 = vpop.f32.mrf.mxu0
      %v2866 = vadd.f32 0.0, %v2865
      %2867 = vmatmul.f32.gmra.mxu0 %v2797
      %v2868 = vpop.f32.mrf.mxu0
      %v2869 = vadd.f32 0.0, %v2868
      %2870 = vmatmul.f32.gmra.mxu0 %v2798
      %v2871 = vpop.f32.mrf.mxu0
      %v2872 = vadd.f32 0.0, %v2871
      %2873 = vmatmul.f32.gmra.mxu0 %v2799
      %v2874 = vpop.f32.mrf.mxu0
      %v2875 = vadd.f32 0.0, %v2874
      %2876 = vmatmul.f32.gmra.mxu0 %v2800
      %v2877 = vpop.f32.mrf.mxu0
      %v2878 = vadd.f32 0.0, %v2877
      %2879 = vmatmul.f32.gmra.mxu0 %v2801
      %v2880 = vpop.f32.mrf.mxu0
      %v2881 = vadd.f32 0.0, %v2880
      %2882 = vmatmul.f32.gmra.mxu0 %v2802
      %v2883 = vpop.f32.mrf.mxu0
      %v2884 = vadd.f32 0.0, %v2883
      %2885 = vmatmul.f32.gmra.mxu0 %v2803
      %v2886 = vpop.f32.mrf.mxu0
      %v2887 = vadd.f32 0.0, %v2886
      %2888 = vmatmul.f32.gmra.mxu0 %v2804
      %v2889 = vpop.f32.mrf.mxu0
      %v2890 = vadd.f32 0.0, %v2889
      %2891 = vmatmul.f32.gmra.mxu0 %v2805
      %v2892 = vpop.f32.mrf.mxu0
      %v2893 = vadd.f32 0.0, %v2892
      %2894 = vmatmul.f32.gmra.mxu0 %v2806
      %v2895 = vpop.f32.mrf.mxu0
      %v2896 = vadd.f32 0.0, %v2895
      %2897 = vmatmul.f32.gmra.mxu0 %v2807
      %v2898 = vpop.f32.mrf.mxu0
      %v2899 = vadd.f32 0.0, %v2898
      %2900 = vdwg.mxu0
      %v2901 = vadd.f32 %v2768, %v2842
      %v2902 = vadd.f32 %v2769, %v2845
      %v2903 = vadd.f32 %v2770, %v2848
      %v2904 = vadd.f32 %v2771, %v2851
      %v2905 = vadd.f32 %v2772, %v2854
      %v2906 = vadd.f32 %v2773, %v2857
      %v2907 = vadd.f32 %v2774, %v2860
      %v2908 = vadd.f32 %v2775, %v2863
      %v2909 = vadd.f32 %v2776, %v2866
      %v2910 = vadd.f32 %v2777, %v2869
      %v2911 = vadd.f32 %v2778, %v2872
      %v2912 = vadd.f32 %v2779, %v2875
      %v2913 = vadd.f32 %v2780, %v2878
      %v2914 = vadd.f32 %v2781, %v2881
      %v2915 = vadd.f32 %v2782, %v2884
      %v2916 = vadd.f32 %v2783, %v2887
      %v2917 = vadd.f32 %v2784, %v2890
      %v2918 = vadd.f32 %v2785, %v2893
      %v2919 = vadd.f32 %v2786, %v2896
      %v2920 = vadd.f32 %v2787, %v2899
      %v2921 = vld [vmem:[%s2654 + $0x2] sm:$0xff]
      %v2922 = vld [vmem:[%s2654 + $0xa] sm:$0xff]
      %v2923 = vld [vmem:[%s2654 + $0x1a] sm:$0xff]
      %v2924 = vld [vmem:[%s2654 + $0x22] sm:$0xff]
      %v2925 = vld [vmem:[%s2654 + $0x32] sm:$0xff]
      %v2926 = vld [vmem:[%s2654 + $0x3a] sm:$0xff]
      %v2927 = vld [vmem:[%s2654 + $0x4a] sm:$0xff]
      %v2928 = vld [vmem:[%s2654 + $0x52] sm:$0xff]
      %v2929 = vld [vmem:[%s2654 + $0x62] sm:$0xff]
      %v2930 = vld [vmem:[%s2654 + $0x6a] sm:$0xff]
      %v2931 = vld [vmem:[%s2654 + $0x7a] sm:$0xff]
      %v2932 = vld [vmem:[%s2654 + $0x82] sm:$0xff]
      %v2933 = vld [vmem:[%s2654 + $0x92] sm:$0xff]
      %v2934 = vld [vmem:[%s2654 + $0x9a] sm:$0xff]
      %v2935 = vld [vmem:[%s2654 + $0xaa] sm:$0xff]
      %v2936 = vld [vmem:[%s2654 + $0xb2] sm:$0xff]
      %v2937 = vld [vmem:[%s2654 + $0xc2] sm:$0xff]
      %v2938 = vld [vmem:[%s2654 + $0xca] sm:$0xff]
      %v2939 = vld [vmem:[%s2654 + $0xda] sm:$0xff]
      %v2940 = vld [vmem:[%s2654 + $0xe2] sm:$0xff]
      %v2941 = vld [vmem:[%s2 + $0x400] sm:$0xff]
      %v2942 = vld [vmem:[%s2 + $0x408] sm:$0xff]
      %v2943 = vld [vmem:[%s2 + $0x410] sm:$0xff]
      %v2944 = vld [vmem:[%s2 + $0x418] sm:$0xff]
      %v2945 = vld [vmem:[%s2 + $0x420] sm:$0xff]
      %v2946 = vld [vmem:[%s2 + $0x428] sm:$0xff]
      %v2947 = vld [vmem:[%s2 + $0x430] sm:$0xff]
      %v2948 = vld [vmem:[%s2 + $0x438] sm:$0xff]
      %v2949 = vld [vmem:[%s2 + $0x440] sm:$0xff]
      %v2950 = vld [vmem:[%s2 + $0x448] sm:$0xff]
      %v2951 = vld [vmem:[%s2 + $0x450] sm:$0xff]
      %v2952 = vld [vmem:[%s2 + $0x458] sm:$0xff]
      %v2953 = vld [vmem:[%s2 + $0x460] sm:$0xff]
      %v2954 = vld [vmem:[%s2 + $0x468] sm:$0xff]
      %v2955 = vld [vmem:[%s2 + $0x470] sm:$0xff]
      %v2956 = vld [vmem:[%s2 + $0x478] sm:$0xff]
      %2957 = vmatpush.msra.mxu0 %v2956
      %2958 = vmatpush.msra.mxu0 %v2955
      %2959 = vmatpush.msra.mxu0 %v2954
      %2960 = vmatpush.msra.mxu0 %v2953
      %2961 = vmatpush.msra.mxu0 %v2952
      %2962 = vmatpush.msra.mxu0 %v2951
      %2963 = vmatpush.msra.mxu0 %v2950
      %2964 = vmatpush.msra.mxu0 %v2949
      %2965 = vmatpush.msra.mxu0 %v2948
      %2966 = vmatpush.msra.mxu0 %v2947
      %2967 = vmatpush.msra.mxu0 %v2946
      %2968 = vmatpush.msra.mxu0 %v2945
      %2969 = vmatpush.msra.mxu0 %v2944
      %2970 = vmatpush.msra.mxu0 %v2943
      %2971 = vmatpush.msra.mxu0 %v2942
      %2972 = vmatpush.msra.mxu0 %v2941
      %2973 = vmatmul.f32.gmra.mxu0 %v2921
      %v2974 = vpop.f32.mrf.mxu0
      %v2975 = vadd.f32 0.0, %v2974
      %2976 = vmatmul.f32.gmra.mxu0 %v2922
      %v2977 = vpop.f32.mrf.mxu0
      %v2978 = vadd.f32 0.0, %v2977
      %2979 = vmatmul.f32.gmra.mxu0 %v2923
      %v2980 = vpop.f32.mrf.mxu0
      %v2981 = vadd.f32 0.0, %v2980
      %2982 = vmatmul.f32.gmra.mxu0 %v2924
      %v2983 = vpop.f32.mrf.mxu0
      %v2984 = vadd.f32 0.0, %v2983
      %2985 = vmatmul.f32.gmra.mxu0 %v2925
      %v2986 = vpop.f32.mrf.mxu0
      %v2987 = vadd.f32 0.0, %v2986
      %2988 = vmatmul.f32.gmra.mxu0 %v2926
      %v2989 = vpop.f32.mrf.mxu0
      %v2990 = vadd.f32 0.0, %v2989
      %2991 = vmatmul.f32.gmra.mxu0 %v2927
      %v2992 = vpop.f32.mrf.mxu0
      %v2993 = vadd.f32 0.0, %v2992
      %2994 = vmatmul.f32.gmra.mxu0 %v2928
      %v2995 = vpop.f32.mrf.mxu0
      %v2996 = vadd.f32 0.0, %v2995
      %2997 = vmatmul.f32.gmra.mxu0 %v2929
      %v2998 = vpop.f32.mrf.mxu0
      %v2999 = vadd.f32 0.0, %v2998
      %3000 = vmatmul.f32.gmra.mxu0 %v2930
      %v3001 = vpop.f32.mrf.mxu0
      %v3002 = vadd.f32 0.0, %v3001
      %3003 = vmatmul.f32.gmra.mxu0 %v2931
      %v3004 = vpop.f32.mrf.mxu0
      %v3005 = vadd.f32 0.0, %v3004
      %3006 = vmatmul.f32.gmra.mxu0 %v2932
      %v3007 = vpop.f32.mrf.mxu0
      %v3008 = vadd.f32 0.0, %v3007
      %3009 = vmatmul.f32.gmra.mxu0 %v2933
      %v3010 = vpop.f32.mrf.mxu0
      %v3011 = vadd.f32 0.0, %v3010
      %3012 = vmatmul.f32.gmra.mxu0 %v2934
      %v3013 = vpop.f32.mrf.mxu0
      %v3014 = vadd.f32 0.0, %v3013
      %3015 = vmatmul.f32.gmra.mxu0 %v2935
      %v3016 = vpop.f32.mrf.mxu0
      %v3017 = vadd.f32 0.0, %v3016
      %3018 = vmatmul.f32.gmra.mxu0 %v2936
      %v3019 = vpop.f32.mrf.mxu0
      %v3020 = vadd.f32 0.0, %v3019
      %3021 = vmatmul.f32.gmra.mxu0 %v2937
      %v3022 = vpop.f32.mrf.mxu0
      %v3023 = vadd.f32 0.0, %v3022
      %3024 = vmatmul.f32.gmra.mxu0 %v2938
      %v3025 = vpop.f32.mrf.mxu0
      %v3026 = vadd.f32 0.0, %v3025
      %3027 = vmatmul.f32.gmra.mxu0 %v2939
      %v3028 = vpop.f32.mrf.mxu0
      %v3029 = vadd.f32 0.0, %v3028
      %3030 = vmatmul.f32.gmra.mxu0 %v2940
      %v3031 = vpop.f32.mrf.mxu0
      %v3032 = vadd.f32 0.0, %v3031
      %3033 = vdwg.mxu0
      %v3034 = vadd.f32 %v2901, %v2975
      %v3035 = vadd.f32 %v2902, %v2978
      %v3036 = vadd.f32 %v2903, %v2981
      %v3037 = vadd.f32 %v2904, %v2984
      %v3038 = vadd.f32 %v2905, %v2987
      %v3039 = vadd.f32 %v2906, %v2990
      %v3040 = vadd.f32 %v2907, %v2993
      %v3041 = vadd.f32 %v2908, %v2996
      %v3042 = vadd.f32 %v2909, %v2999
      %v3043 = vadd.f32 %v2910, %v3002
      %v3044 = vadd.f32 %v2911, %v3005
      %v3045 = vadd.f32 %v2912, %v3008
      %v3046 = vadd.f32 %v2913, %v3011
      %v3047 = vadd.f32 %v2914, %v3014
      %v3048 = vadd.f32 %v2915, %v3017
      %v3049 = vadd.f32 %v2916, %v3020
      %v3050 = vadd.f32 %v2917, %v3023
      %v3051 = vadd.f32 %v2918, %v3026
      %v3052 = vadd.f32 %v2919, %v3029
      %v3053 = vadd.f32 %v2920, %v3032
      %v3054 = vperm.slane %v1893, 0
      %v3055 = vmul.f32 %v3034, %v3054
      %v3056 = vmul.f32 %v3035, %v3054
      %v3057 = vmul.f32 %v3036, %v3054
      %v3058 = vmul.f32 %v3037, %v3054
      %v3059 = vmul.f32 %v3038, %v3054
      %v3060 = vmul.f32 %v3039, %v3054
      %v3061 = vmul.f32 %v3040, %v3054
      %v3062 = vmul.f32 %v3041, %v3054
      %v3063 = vmul.f32 %v3042, %v3054
      %v3064 = vmul.f32 %v3043, %v3054
      %v3065 = vmul.f32 %v3044, %v3054
      %v3066 = vmul.f32 %v3045, %v3054
      %v3067 = vmul.f32 %v3046, %v3054
      %v3068 = vmul.f32 %v3047, %v3054
      %v3069 = vmul.f32 %v3048, %v3054
      %v3070 = vmul.f32 %v3049, %v3054
      %v3071 = vmul.f32 %v3050, %v3054
      %v3072 = vmul.f32 %v3051, %v3054
      %v3073 = vmul.f32 %v3052, %v3054
      %v3074 = vmul.f32 %v3053, %v3054
      %v3075 = vperm.slane %v1894, 0
      %v3076 = vadd.f32 %v3055, %v3075
      %v3077 = vadd.f32 %v3056, %v3075
      %v3078 = vadd.f32 %v3057, %v3075
      %v3079 = vadd.f32 %v3058, %v3075
      %v3080 = vadd.f32 %v3059, %v3075
      %v3081 = vadd.f32 %v3060, %v3075
      %v3082 = vadd.f32 %v3061, %v3075
      %v3083 = vadd.f32 %v3062, %v3075
      %v3084 = vadd.f32 %v3063, %v3075
      %v3085 = vadd.f32 %v3064, %v3075
      %v3086 = vadd.f32 %v3065, %v3075
      %v3087 = vadd.f32 %v3066, %v3075
      %v3088 = vadd.f32 %v3067, %v3075
      %v3089 = vadd.f32 %v3068, %v3075
      %v3090 = vadd.f32 %v3069, %v3075
      %v3091 = vadd.f32 %v3070, %v3075
      %v3092 = vadd.f32 %v3071, %v3075
      %v3093 = vadd.f32 %v3072, %v3075
      %v3094 = vadd.f32 %v3073, %v3075
      %v3095 = vadd.f32 %v3074, %v3075
      %v3096 = vmax.f32 %v3076, 0.0
      %v3097 = vmax.f32 %v3077, 0.0
      %v3098 = vmax.f32 %v3078, 0.0
      %v3099 = vmax.f32 %v3079, 0.0
      %v3100 = vmax.f32 %v3080, 0.0
      %v3101 = vmax.f32 %v3081, 0.0
      %v3102 = vmax.f32 %v3082, 0.0
      %v3103 = vmax.f32 %v3083, 0.0
      %v3104 = vmax.f32 %v3084, 0.0
      %v3105 = vmax.f32 %v3085, 0.0
      %v3106 = vmax.f32 %v3086, 0.0
      %v3107 = vmax.f32 %v3087, 0.0
      %v3108 = vmax.f32 %v3088, 0.0
      %v3109 = vmax.f32 %v3089, 0.0
      %v3110 = vmax.f32 %v3090, 0.0
      %v3111 = vmax.f32 %v3091, 0.0
      %v3112 = vmax.f32 %v3092, 0.0
      %v3113 = vmax.f32 %v3093, 0.0
      %v3114 = vmax.f32 %v3094, 0.0
      %v3115 = vmax.f32 %v3095, 0.0
      %s3116 = ssub.s32 %s340, 1
      %v3117 = vstv %s3116
      %v3118 = vadd.s32 %v3117, 1
      %v3119 = vadd.s32 %v3117, 2
      %v3120 = vadd.s32 %v3117, 3
      %v3121 = vadd.s32 %v3117, 4
      %v3122 = vadd.s32 %v3117, 5
      %v3123 = vadd.s32 %v3117, 6
      %v3124 = vadd.s32 %v3117, 7
      %v3125 = vadd.s32 %v3117, 8
      %v3126 = vadd.s32 %v3117, 9
      %vm3127 = vcmp.ge.s32.totalorder %v3117, 0
      %vm3128 = vcmp.ge.s32.totalorder %v3118, 0
      %vm3129 = vcmp.ge.s32.totalorder %v3119, 0
      %vm3130 = vcmp.ge.s32.totalorder %v3120, 0
      %vm3131 = vcmp.ge.s32.totalorder %v3121, 0
      %vm3132 = vcmp.ge.s32.totalorder %v3122, 0
      %vm3133 = vcmp.ge.s32.totalorder %v3123, 0
      %vm3134 = vcmp.ge.s32.totalorder %v3124, 0
      %vm3135 = vcmp.ge.s32.totalorder %v3125, 0
      %vm3136 = vcmp.ge.s32.totalorder %v3126, 0
      %vm3137 = vcmp.lt.s32.totalorder %v3117, 16
      %vm3138 = vcmp.lt.s32.totalorder %v3118, 16
      %vm3139 = vcmp.lt.s32.totalorder %v3119, 16
      %vm3140 = vcmp.lt.s32.totalorder %v3120, 16
      %vm3141 = vcmp.lt.s32.totalorder %v3121, 16
      %vm3142 = vcmp.lt.s32.totalorder %v3122, 16
      %vm3143 = vcmp.lt.s32.totalorder %v3123, 16
      %vm3144 = vcmp.lt.s32.totalorder %v3124, 16
      %vm3145 = vcmp.lt.s32.totalorder %v3125, 16
      %vm3146 = vcmp.lt.s32.totalorder %v3126, 16
      %vm3147 = vmand %vm3127, %vm3137
      %vm3148 = vmand %vm3128, %vm3138
      %vm3149 = vmand %vm3129, %vm3139
      %vm3150 = vmand %vm3130, %vm3140
      %vm3151 = vmand %vm3131, %vm3141
      %vm3152 = vmand %vm3132, %vm3142
      %vm3153 = vmand %vm3133, %vm3143
      %vm3154 = vmand %vm3134, %vm3144
      %vm3155 = vmand %vm3135, %vm3145
      %vm3156 = vmand %vm3136, %vm3146
      %v3157 = vsel %vm3147, 1, 0
      %v3158 = vsel %vm3148, 1, 0
      %v3159 = vsel %vm3149, 1, 0
      %v3160 = vsel %vm3150, 1, 0
      %v3161 = vsel %vm3151, 1, 0
      %v3162 = vsel %vm3152, 1, 0
      %v3163 = vsel %vm3153, 1, 0
      %v3164 = vsel %vm3154, 1, 0
      %v3165 = vsel %vm3155, 1, 0
      %v3166 = vsel %vm3156, 1, 0
      %vm3167 = vcmp.eq.s32.totalorder %v3157, 1
      %vm3168 = vcmp.eq.s32.totalorder %v3158, 1
      %vm3169 = vcmp.eq.s32.totalorder %v3159, 1
      %vm3170 = vcmp.eq.s32.totalorder %v3160, 1
      %vm3171 = vcmp.eq.s32.totalorder %v3161, 1
      %vm3172 = vcmp.eq.s32.totalorder %v3162, 1
      %vm3173 = vcmp.eq.s32.totalorder %v3163, 1
      %vm3174 = vcmp.eq.s32.totalorder %v3164, 1
      %vm3175 = vcmp.eq.s32.totalorder %v3165, 1
      %vm3176 = vcmp.eq.s32.totalorder %v3166, 1
      %v3177 = vsel %vm3167, %v3096, 0.0
      %v3178 = vsel %vm3167, %v3097, 0.0
      %v3179 = vsel %vm3168, %v3098, 0.0
      %v3180 = vsel %vm3168, %v3099, 0.0
      %v3181 = vsel %vm3169, %v3100, 0.0
      %v3182 = vsel %vm3169, %v3101, 0.0
      %v3183 = vsel %vm3170, %v3102, 0.0
      %v3184 = vsel %vm3170, %v3103, 0.0
      %v3185 = vsel %vm3171, %v3104, 0.0
      %v3186 = vsel %vm3171, %v3105, 0.0
      %v3187 = vsel %vm3172, %v3106, 0.0
      %v3188 = vsel %vm3172, %v3107, 0.0
      %v3189 = vsel %vm3173, %v3108, 0.0
      %v3190 = vsel %vm3173, %v3109, 0.0
      %v3191 = vsel %vm3174, %v3110, 0.0
      %v3192 = vsel %vm3174, %v3111, 0.0
      %v3193 = vsel %vm3175, %v3112, 0.0
      %v3194 = vsel %vm3175, %v3113, 0.0
      %v3195 = vsel %vm3176, %v3114, 0.0
      %v3196 = vsel %vm3176, %v3115, 0.0
      %3197 = vst [vmem:[#allocation3] sm:$0x1] 0.0
      %3198 = vst [vmem:[#allocation3 + $0x18] sm:$0x1] 0.0
      %3199 = vst [vmem:[#allocation3 + $0x30] sm:$0x1] 0.0
      %3200 = vst [vmem:[#allocation3 + $0x48] sm:$0x1] 0.0
      %3201 = vst [vmem:[#allocation3 + $0x60] sm:$0x1] 0.0
      %3202 = vst [vmem:[#allocation3 + $0x78] sm:$0x1] 0.0
      %3203 = vst [vmem:[#allocation3 + $0x90] sm:$0x1] 0.0
      %3204 = vst [vmem:[#allocation3 + $0xa8] sm:$0x1] 0.0
      %3205 = vst [vmem:[#allocation3 + $0xc0] sm:$0x1] 0.0
      %3206 = vst [vmem:[#allocation3 + $0xd8] sm:$0x1] 0.0
      %3207 = vst [vmem:[#allocation3 + $0x11] sm:$0x1] 0.0
      %3208 = vst [vmem:[#allocation3 + $0x29] sm:$0x1] 0.0
      %3209 = vst [vmem:[#allocation3 + $0x41] sm:$0x1] 0.0
      %3210 = vst [vmem:[#allocation3 + $0x59] sm:$0x1] 0.0
      %3211 = vst [vmem:[#allocation3 + $0x71] sm:$0x1] 0.0
      %3212 = vst [vmem:[#allocation3 + $0x89] sm:$0x1] 0.0
      %3213 = vst [vmem:[#allocation3 + $0xa1] sm:$0x1] 0.0
      %3214 = vst [vmem:[#allocation3 + $0xb9] sm:$0x1] 0.0
      %3215 = vst [vmem:[#allocation3 + $0xd1] sm:$0x1] 0.0
      %3216 = vst [vmem:[#allocation3 + $0xe9] sm:$0x1] 0.0
      %3217 = vst [vmem:[#allocation3 + $0x1] sm:$0xff] %v3177
      %3218 = vst [vmem:[#allocation3 + $0x9] sm:$0xff] %v3178
      %3219 = vst [vmem:[#allocation3 + $0x19] sm:$0xff] %v3179
      %3220 = vst [vmem:[#allocation3 + $0x21] sm:$0xff] %v3180
      %3221 = vst [vmem:[#allocation3 + $0x31] sm:$0xff] %v3181
      %3222 = vst [vmem:[#allocation3 + $0x39] sm:$0xff] %v3182
      %3223 = vst [vmem:[#allocation3 + $0x49] sm:$0xff] %v3183
      %3224 = vst [vmem:[#allocation3 + $0x51] sm:$0xff] %v3184
      %3225 = vst [vmem:[#allocation3 + $0x61] sm:$0xff] %v3185
      %3226 = vst [vmem:[#allocation3 + $0x69] sm:$0xff] %v3186
      %3227 = vst [vmem:[#allocation3 + $0x79] sm:$0xff] %v3187
      %3228 = vst [vmem:[#allocation3 + $0x81] sm:$0xff] %v3188
      %3229 = vst [vmem:[#allocation3 + $0x91] sm:$0xff] %v3189
      %3230 = vst [vmem:[#allocation3 + $0x99] sm:$0xff] %v3190
      %3231 = vst [vmem:[#allocation3 + $0xa9] sm:$0xff] %v3191
      %3232 = vst [vmem:[#allocation3 + $0xb1] sm:$0xff] %v3192
      %3233 = vst [vmem:[#allocation3 + $0xc1] sm:$0xff] %v3193
      %3234 = vst [vmem:[#allocation3 + $0xc9] sm:$0xff] %v3194
      %3235 = vst [vmem:[#allocation3 + $0xd9] sm:$0xff] %v3195
      %3236 = vst [vmem:[#allocation3 + $0xe1] sm:$0xff] %v3196
      %v3237 = vld [vmem:[%s4 + $0x2] sm:$0x1]
      %v3238 = vld [vmem:[%s5 + $0x2] sm:$0x1]
      %v3239 = vld [vmem:[#allocation3] sm:$0xff]
      %v3240 = vld [vmem:[#allocation3 + $0x8] sm:$0xff]
      %v3241 = vld [vmem:[#allocation3 + $0x18] sm:$0xff]
      %v3242 = vld [vmem:[#allocation3 + $0x20] sm:$0xff]
      %v3243 = vld [vmem:[#allocation3 + $0x30] sm:$0xff]
      %v3244 = vld [vmem:[#allocation3 + $0x38] sm:$0xff]
      %v3245 = vld [vmem:[#allocation3 + $0x48] sm:$0xff]
      %v3246 = vld [vmem:[#allocation3 + $0x50] sm:$0xff]
      %v3247 = vld [vmem:[#allocation3 + $0x60] sm:$0xff]
      %v3248 = vld [vmem:[#allocation3 + $0x68] sm:$0xff]
      %v3249 = vld [vmem:[#allocation3 + $0x78] sm:$0xff]
      %v3250 = vld [vmem:[#allocation3 + $0x80] sm:$0xff]
      %v3251 = vld [vmem:[#allocation3 + $0x90] sm:$0xff]
      %v3252 = vld [vmem:[#allocation3 + $0x98] sm:$0xff]
      %v3253 = vld [vmem:[#allocation3 + $0xa8] sm:$0xff]
      %v3254 = vld [vmem:[#allocation3 + $0xb0] sm:$0xff]
      %v3255 = vld [vmem:[%s3] sm:$0xff]
      %v3256 = vld [vmem:[%s3 + $0x8] sm:$0xff]
      %v3257 = vld [vmem:[%s3 + $0x10] sm:$0xff]
      %v3258 = vld [vmem:[%s3 + $0x18] sm:$0xff]
      %v3259 = vld [vmem:[%s3 + $0x20] sm:$0xff]
      %v3260 = vld [vmem:[%s3 + $0x28] sm:$0xff]
      %v3261 = vld [vmem:[%s3 + $0x30] sm:$0xff]
      %v3262 = vld [vmem:[%s3 + $0x38] sm:$0xff]
      %v3263 = vld [vmem:[%s3 + $0x40] sm:$0xff]
      %v3264 = vld [vmem:[%s3 + $0x48] sm:$0xff]
      %v3265 = vld [vmem:[%s3 + $0x50] sm:$0xff]
      %v3266 = vld [vmem:[%s3 + $0x58] sm:$0xff]
      %v3267 = vld [vmem:[%s3 + $0x60] sm:$0xff]
      %v3268 = vld [vmem:[%s3 + $0x68] sm:$0xff]
      %v3269 = vld [vmem:[%s3 + $0x70] sm:$0xff]
      %v3270 = vld [vmem:[%s3 + $0x78] sm:$0xff]
      %v3271 = vld [vmem:[#allocation3 + $0x1] sm:$0xff]
      %v3272 = vld [vmem:[#allocation3 + $0x9] sm:$0xff]
      %v3273 = vld [vmem:[#allocation3 + $0x19] sm:$0xff]
      %v3274 = vld [vmem:[#allocation3 + $0x21] sm:$0xff]
      %v3275 = vld [vmem:[#allocation3 + $0x31] sm:$0xff]
      %v3276 = vld [vmem:[#allocation3 + $0x39] sm:$0xff]
      %v3277 = vld [vmem:[#allocation3 + $0x49] sm:$0xff]
      %v3278 = vld [vmem:[#allocation3 + $0x51] sm:$0xff]
      %v3279 = vld [vmem:[#allocation3 + $0x61] sm:$0xff]
      %v3280 = vld [vmem:[#allocation3 + $0x69] sm:$0xff]
      %v3281 = vld [vmem:[#allocation3 + $0x79] sm:$0xff]
      %v3282 = vld [vmem:[#allocation3 + $0x81] sm:$0xff]
      %v3283 = vld [vmem:[#allocation3 + $0x91] sm:$0xff]
      %v3284 = vld [vmem:[#allocation3 + $0x99] sm:$0xff]
      %v3285 = vld [vmem:[#allocation3 + $0xa9] sm:$0xff]
      %v3286 = vld [vmem:[#allocation3 + $0xb1] sm:$0xff]
      %v3287 = vld [vmem:[%s3 + $0x80] sm:$0xff]
      %v3288 = vld [vmem:[%s3 + $0x88] sm:$0xff]
      %v3289 = vld [vmem:[%s3 + $0x90] sm:$0xff]
      %v3290 = vld [vmem:[%s3 + $0x98] sm:$0xff]
      %v3291 = vld [vmem:[%s3 + $0xa0] sm:$0xff]
      %v3292 = vld [vmem:[%s3 + $0xa8] sm:$0xff]
      %v3293 = vld [vmem:[%s3 + $0xb0] sm:$0xff]
      %v3294 = vld [vmem:[%s3 + $0xb8] sm:$0xff]
      %v3295 = vld [vmem:[%s3 + $0xc0] sm:$0xff]
      %v3296 = vld [vmem:[%s3 + $0xc8] sm:$0xff]
      %v3297 = vld [vmem:[%s3 + $0xd0] sm:$0xff]
      %v3298 = vld [vmem:[%s3 + $0xd8] sm:$0xff]
      %v3299 = vld [vmem:[%s3 + $0xe0] sm:$0xff]
      %v3300 = vld [vmem:[%s3 + $0xe8] sm:$0xff]
      %v3301 = vld [vmem:[%s3 + $0xf0] sm:$0xff]
      %v3302 = vld [vmem:[%s3 + $0xf8] sm:$0xff]
      %3303 = vmatpush.msra.mxu0 %v3302
      %3304 = vmatpush.msra.mxu0 %v3301
      %3305 = vmatpush.msra.mxu0 %v3300
      %3306 = vmatpush.msra.mxu0 %v3299
      %3307 = vmatpush.msra.mxu0 %v3298
      %3308 = vmatpush.msra.mxu0 %v3297
      %3309 = vmatpush.msra.mxu0 %v3296
      %3310 = vmatpush.msra.mxu0 %v3295
      %3311 = vmatpush.msra.mxu0 %v3294
      %3312 = vmatpush.msra.mxu0 %v3293
      %3313 = vmatpush.msra.mxu0 %v3292
      %3314 = vmatpush.msra.mxu0 %v3291
      %3315 = vmatpush.msra.mxu0 %v3290
      %3316 = vmatpush.msra.mxu0 %v3289
      %3317 = vmatpush.msra.mxu0 %v3288
      %3318 = vmatpush.msra.mxu0 %v3287
      %3319 = vmatmul.f32.gmra.mxu0 %v3271
      %v3320 = vpop.f32.mrf.mxu0
      %v3321 = vadd.f32 0.0, %v3320
      %3322 = vmatmul.f32.gmra.mxu0 %v3272
      %v3323 = vpop.f32.mrf.mxu0
      %v3324 = vadd.f32 0.0, %v3323
      %3325 = vmatmul.f32.gmra.mxu0 %v3273
      %v3326 = vpop.f32.mrf.mxu0
      %v3327 = vadd.f32 0.0, %v3326
      %3328 = vmatmul.f32.gmra.mxu0 %v3274
      %v3329 = vpop.f32.mrf.mxu0
      %v3330 = vadd.f32 0.0, %v3329
      %3331 = vmatmul.f32.gmra.mxu0 %v3275
      %v3332 = vpop.f32.mrf.mxu0
      %v3333 = vadd.f32 0.0, %v3332
      %3334 = vmatmul.f32.gmra.mxu0 %v3276
      %v3335 = vpop.f32.mrf.mxu0
      %v3336 = vadd.f32 0.0, %v3335
      %3337 = vmatmul.f32.gmra.mxu0 %v3277
      %v3338 = vpop.f32.mrf.mxu0
      %v3339 = vadd.f32 0.0, %v3338
      %3340 = vmatmul.f32.gmra.mxu0 %v3278
      %v3341 = vpop.f32.mrf.mxu0
      %v3342 = vadd.f32 0.0, %v3341
      %3343 = vmatmul.f32.gmra.mxu0 %v3279
      %v3344 = vpop.f32.mrf.mxu0
      %v3345 = vadd.f32 0.0, %v3344
      %3346 = vmatmul.f32.gmra.mxu0 %v3280
      %v3347 = vpop.f32.mrf.mxu0
      %v3348 = vadd.f32 0.0, %v3347
      %3349 = vmatmul.f32.gmra.mxu0 %v3281
      %v3350 = vpop.f32.mrf.mxu0
      %v3351 = vadd.f32 0.0, %v3350
      %3352 = vmatmul.f32.gmra.mxu0 %v3282
      %v3353 = vpop.f32.mrf.mxu0
      %v3354 = vadd.f32 0.0, %v3353
      %3355 = vmatmul.f32.gmra.mxu0 %v3283
      %v3356 = vpop.f32.mrf.mxu0
      %v3357 = vadd.f32 0.0, %v3356
      %3358 = vmatmul.f32.gmra.mxu0 %v3284
      %v3359 = vpop.f32.mrf.mxu0
      %v3360 = vadd.f32 0.0, %v3359
      %3361 = vmatmul.f32.gmra.mxu0 %v3285
      %v3362 = vpop.f32.mrf.mxu0
      %v3363 = vadd.f32 0.0, %v3362
      %3364 = vmatmul.f32.gmra.mxu0 %v3286
      %v3365 = vpop.f32.mrf.mxu0
      %v3366 = vadd.f32 0.0, %v3365
      %3367 = vdwg.mxu0
      %3368 = vmatpush.msra.mxu0 %v3270
      %3369 = vmatpush.msra.mxu0 %v3269
      %3370 = vmatpush.msra.mxu0 %v3268
      %3371 = vmatpush.msra.mxu0 %v3267
      %3372 = vmatpush.msra.mxu0 %v3266
      %3373 = vmatpush.msra.mxu0 %v3265
      %3374 = vmatpush.msra.mxu0 %v3264
      %3375 = vmatpush.msra.mxu0 %v3263
      %3376 = vmatpush.msra.mxu0 %v3262
      %3377 = vmatpush.msra.mxu0 %v3261
      %3378 = vmatpush.msra.mxu0 %v3260
      %3379 = vmatpush.msra.mxu0 %v3259
      %3380 = vmatpush.msra.mxu0 %v3258
      %3381 = vmatpush.msra.mxu0 %v3257
      %3382 = vmatpush.msra.mxu0 %v3256
      %3383 = vmatpush.msra.mxu0 %v3255
      %3384 = vmatmul.f32.gmra.mxu0 %v3239
      %v3385 = vpop.f32.mrf.mxu0
      %v3386 = vadd.f32 %v3321, %v3385
      %3387 = vmatmul.f32.gmra.mxu0 %v3240
      %v3388 = vpop.f32.mrf.mxu0
      %v3389 = vadd.f32 %v3324, %v3388
      %3390 = vmatmul.f32.gmra.mxu0 %v3241
      %v3391 = vpop.f32.mrf.mxu0
      %v3392 = vadd.f32 %v3327, %v3391
      %3393 = vmatmul.f32.gmra.mxu0 %v3242
      %v3394 = vpop.f32.mrf.mxu0
      %v3395 = vadd.f32 %v3330, %v3394
      %3396 = vmatmul.f32.gmra.mxu0 %v3243
      %v3397 = vpop.f32.mrf.mxu0
      %v3398 = vadd.f32 %v3333, %v3397
      %3399 = vmatmul.f32.gmra.mxu0 %v3244
      %v3400 = vpop.f32.mrf.mxu0
      %v3401 = vadd.f32 %v3336, %v3400
      %3402 = vmatmul.f32.gmra.mxu0 %v3245
      %v3403 = vpop.f32.mrf.mxu0
      %v3404 = vadd.f32 %v3339, %v3403
      %3405 = vmatmul.f32.gmra.mxu0 %v3246
      %v3406 = vpop.f32.mrf.mxu0
      %v3407 = vadd.f32 %v3342, %v3406
      %3408 = vmatmul.f32.gmra.mxu0 %v3247
      %v3409 = vpop.f32.mrf.mxu0
      %v3410 = vadd.f32 %v3345, %v3409
      %3411 = vmatmul.f32.gmra.mxu0 %v3248
      %v3412 = vpop.f32.mrf.mxu0
      %v3413 = vadd.f32 %v3348, %v3412
      %3414 = vmatmul.f32.gmra.mxu0 %v3249
      %v3415 = vpop.f32.mrf.mxu0
      %v3416 = vadd.f32 %v3351, %v3415
      %3417 = vmatmul.f32.gmra.mxu0 %v3250
      %v3418 = vpop.f32.mrf.mxu0
      %v3419 = vadd.f32 %v3354, %v3418
      %3420 = vmatmul.f32.gmra.mxu0 %v3251
      %v3421 = vpop.f32.mrf.mxu0
      %v3422 = vadd.f32 %v3357, %v3421
      %3423 = vmatmul.f32.gmra.mxu0 %v3252
      %v3424 = vpop.f32.mrf.mxu0
      %v3425 = vadd.f32 %v3360, %v3424
      %3426 = vmatmul.f32.gmra.mxu0 %v3253
      %v3427 = vpop.f32.mrf.mxu0
      %v3428 = vadd.f32 %v3363, %v3427
      %3429 = vmatmul.f32.gmra.mxu0 %v3254
      %v3430 = vpop.f32.mrf.mxu0
      %v3431 = vadd.f32 %v3366, %v3430
      %3432 = vdwg.mxu0
      %v3433 = vld [vmem:[#allocation3 + $0x2] sm:$0xff]
      %v3434 = vld [vmem:[#allocation3 + $0xa] sm:$0xff]
      %v3435 = vld [vmem:[#allocation3 + $0x1a] sm:$0xff]
      %v3436 = vld [vmem:[#allocation3 + $0x22] sm:$0xff]
      %v3437 = vld [vmem:[#allocation3 + $0x32] sm:$0xff]
      %v3438 = vld [vmem:[#allocation3 + $0x3a] sm:$0xff]
      %v3439 = vld [vmem:[#allocation3 + $0x4a] sm:$0xff]
      %v3440 = vld [vmem:[#allocation3 + $0x52] sm:$0xff]
      %v3441 = vld [vmem:[#allocation3 + $0x62] sm:$0xff]
      %v3442 = vld [vmem:[#allocation3 + $0x6a] sm:$0xff]
      %v3443 = vld [vmem:[#allocation3 + $0x7a] sm:$0xff]
      %v3444 = vld [vmem:[#allocation3 + $0x82] sm:$0xff]
      %v3445 = vld [vmem:[#allocation3 + $0x92] sm:$0xff]
      %v3446 = vld [vmem:[#allocation3 + $0x9a] sm:$0xff]
      %v3447 = vld [vmem:[#allocation3 + $0xaa] sm:$0xff]
      %v3448 = vld [vmem:[#allocation3 + $0xb2] sm:$0xff]
      %v3449 = vld [vmem:[%s3 + $0x100] sm:$0xff]
      %v3450 = vld [vmem:[%s3 + $0x108] sm:$0xff]
      %v3451 = vld [vmem:[%s3 + $0x110] sm:$0xff]
      %v3452 = vld [vmem:[%s3 + $0x118] sm:$0xff]
      %v3453 = vld [vmem:[%s3 + $0x120] sm:$0xff]
      %v3454 = vld [vmem:[%s3 + $0x128] sm:$0xff]
      %v3455 = vld [vmem:[%s3 + $0x130] sm:$0xff]
      %v3456 = vld [vmem:[%s3 + $0x138] sm:$0xff]
      %v3457 = vld [vmem:[%s3 + $0x140] sm:$0xff]
      %v3458 = vld [vmem:[%s3 + $0x148] sm:$0xff]
      %v3459 = vld [vmem:[%s3 + $0x150] sm:$0xff]
      %v3460 = vld [vmem:[%s3 + $0x158] sm:$0xff]
      %v3461 = vld [vmem:[%s3 + $0x160] sm:$0xff]
      %v3462 = vld [vmem:[%s3 + $0x168] sm:$0xff]
      %v3463 = vld [vmem:[%s3 + $0x170] sm:$0xff]
      %v3464 = vld [vmem:[%s3 + $0x178] sm:$0xff]
      %3465 = vmatpush.msra.mxu0 %v3464
      %3466 = vmatpush.msra.mxu0 %v3463
      %3467 = vmatpush.msra.mxu0 %v3462
      %3468 = vmatpush.msra.mxu0 %v3461
      %3469 = vmatpush.msra.mxu0 %v3460
      %3470 = vmatpush.msra.mxu0 %v3459
      %3471 = vmatpush.msra.mxu0 %v3458
      %3472 = vmatpush.msra.mxu0 %v3457
      %3473 = vmatpush.msra.mxu0 %v3456
      %3474 = vmatpush.msra.mxu0 %v3455
      %3475 = vmatpush.msra.mxu0 %v3454
      %3476 = vmatpush.msra.mxu0 %v3453
      %3477 = vmatpush.msra.mxu0 %v3452
      %3478 = vmatpush.msra.mxu0 %v3451
      %3479 = vmatpush.msra.mxu0 %v3450
      %3480 = vmatpush.msra.mxu0 %v3449
      %3481 = vmatmul.f32.gmra.mxu0 %v3433
      %v3482 = vpop.f32.mrf.mxu0
      %v3483 = vadd.f32 0.0, %v3482
      %3484 = vmatmul.f32.gmra.mxu0 %v3434
      %v3485 = vpop.f32.mrf.mxu0
      %v3486 = vadd.f32 0.0, %v3485
      %3487 = vmatmul.f32.gmra.mxu0 %v3435
      %v3488 = vpop.f32.mrf.mxu0
      %v3489 = vadd.f32 0.0, %v3488
      %3490 = vmatmul.f32.gmra.mxu0 %v3436
      %v3491 = vpop.f32.mrf.mxu0
      %v3492 = vadd.f32 0.0, %v3491
      %3493 = vmatmul.f32.gmra.mxu0 %v3437
      %v3494 = vpop.f32.mrf.mxu0
      %v3495 = vadd.f32 0.0, %v3494
      %3496 = vmatmul.f32.gmra.mxu0 %v3438
      %v3497 = vpop.f32.mrf.mxu0
      %v3498 = vadd.f32 0.0, %v3497
      %3499 = vmatmul.f32.gmra.mxu0 %v3439
      %v3500 = vpop.f32.mrf.mxu0
      %v3501 = vadd.f32 0.0, %v3500
      %3502 = vmatmul.f32.gmra.mxu0 %v3440
      %v3503 = vpop.f32.mrf.mxu0
      %v3504 = vadd.f32 0.0, %v3503
      %3505 = vmatmul.f32.gmra.mxu0 %v3441
      %v3506 = vpop.f32.mrf.mxu0
      %v3507 = vadd.f32 0.0, %v3506
      %3508 = vmatmul.f32.gmra.mxu0 %v3442
      %v3509 = vpop.f32.mrf.mxu0
      %v3510 = vadd.f32 0.0, %v3509
      %3511 = vmatmul.f32.gmra.mxu0 %v3443
      %v3512 = vpop.f32.mrf.mxu0
      %v3513 = vadd.f32 0.0, %v3512
      %3514 = vmatmul.f32.gmra.mxu0 %v3444
      %v3515 = vpop.f32.mrf.mxu0
      %v3516 = vadd.f32 0.0, %v3515
      %3517 = vmatmul.f32.gmra.mxu0 %v3445
      %v3518 = vpop.f32.mrf.mxu0
      %v3519 = vadd.f32 0.0, %v3518
      %3520 = vmatmul.f32.gmra.mxu0 %v3446
      %v3521 = vpop.f32.mrf.mxu0
      %v3522 = vadd.f32 0.0, %v3521
      %3523 = vmatmul.f32.gmra.mxu0 %v3447
      %v3524 = vpop.f32.mrf.mxu0
      %v3525 = vadd.f32 0.0, %v3524
      %3526 = vmatmul.f32.gmra.mxu0 %v3448
      %v3527 = vpop.f32.mrf.mxu0
      %v3528 = vadd.f32 0.0, %v3527
      %3529 = vdwg.mxu0
      %v3530 = vadd.f32 %v3386, %v3483
      %v3531 = vadd.f32 %v3389, %v3486
      %v3532 = vadd.f32 %v3392, %v3489
      %v3533 = vadd.f32 %v3395, %v3492
      %v3534 = vadd.f32 %v3398, %v3495
      %v3535 = vadd.f32 %v3401, %v3498
      %v3536 = vadd.f32 %v3404, %v3501
      %v3537 = vadd.f32 %v3407, %v3504
      %v3538 = vadd.f32 %v3410, %v3507
      %v3539 = vadd.f32 %v3413, %v3510
      %v3540 = vadd.f32 %v3416, %v3513
      %v3541 = vadd.f32 %v3419, %v3516
      %v3542 = vadd.f32 %v3422, %v3519
      %v3543 = vadd.f32 %v3425, %v3522
      %v3544 = vadd.f32 %v3428, %v3525
      %v3545 = vadd.f32 %v3431, %v3528
      %s3546 = scalar_lea.vmem [#allocation3], 24
      %v3547 = vld [vmem:[%s3546] sm:$0xff]
      %v3548 = vld [vmem:[%s3546 + $0x8] sm:$0xff]
      %v3549 = vld [vmem:[%s3546 + $0x18] sm:$0xff]
      %v3550 = vld [vmem:[%s3546 + $0x20] sm:$0xff]
      %v3551 = vld [vmem:[%s3546 + $0x30] sm:$0xff]
      %v3552 = vld [vmem:[%s3546 + $0x38] sm:$0xff]
      %v3553 = vld [vmem:[%s3546 + $0x48] sm:$0xff]
      %v3554 = vld [vmem:[%s3546 + $0x50] sm:$0xff]
      %v3555 = vld [vmem:[%s3546 + $0x60] sm:$0xff]
      %v3556 = vld [vmem:[%s3546 + $0x68] sm:$0xff]
      %v3557 = vld [vmem:[%s3546 + $0x78] sm:$0xff]
      %v3558 = vld [vmem:[%s3546 + $0x80] sm:$0xff]
      %v3559 = vld [vmem:[%s3546 + $0x90] sm:$0xff]
      %v3560 = vld [vmem:[%s3546 + $0x98] sm:$0xff]
      %v3561 = vld [vmem:[%s3546 + $0xa8] sm:$0xff]
      %v3562 = vld [vmem:[%s3546 + $0xb0] sm:$0xff]
      %v3563 = vld [vmem:[%s3 + $0x180] sm:$0xff]
      %v3564 = vld [vmem:[%s3 + $0x188] sm:$0xff]
      %v3565 = vld [vmem:[%s3 + $0x190] sm:$0xff]
      %v3566 = vld [vmem:[%s3 + $0x198] sm:$0xff]
      %v3567 = vld [vmem:[%s3 + $0x1a0] sm:$0xff]
      %v3568 = vld [vmem:[%s3 + $0x1a8] sm:$0xff]
      %v3569 = vld [vmem:[%s3 + $0x1b0] sm:$0xff]
      %v3570 = vld [vmem:[%s3 + $0x1b8] sm:$0xff]
      %v3571 = vld [vmem:[%s3 + $0x1c0] sm:$0xff]
      %v3572 = vld [vmem:[%s3 + $0x1c8] sm:$0xff]
      %v3573 = vld [vmem:[%s3 + $0x1d0] sm:$0xff]
      %v3574 = vld [vmem:[%s3 + $0x1d8] sm:$0xff]
      %v3575 = vld [vmem:[%s3 + $0x1e0] sm:$0xff]
      %v3576 = vld [vmem:[%s3 + $0x1e8] sm:$0xff]
      %v3577 = vld [vmem:[%s3 + $0x1f0] sm:$0xff]
      %v3578 = vld [vmem:[%s3 + $0x1f8] sm:$0xff]
      %3579 = vmatpush.msra.mxu0 %v3578
      %3580 = vmatpush.msra.mxu0 %v3577
      %3581 = vmatpush.msra.mxu0 %v3576
      %3582 = vmatpush.msra.mxu0 %v3575
      %3583 = vmatpush.msra.mxu0 %v3574
      %3584 = vmatpush.msra.mxu0 %v3573
      %3585 = vmatpush.msra.mxu0 %v3572
      %3586 = vmatpush.msra.mxu0 %v3571
      %3587 = vmatpush.msra.mxu0 %v3570
      %3588 = vmatpush.msra.mxu0 %v3569
      %3589 = vmatpush.msra.mxu0 %v3568
      %3590 = vmatpush.msra.mxu0 %v3567
      %3591 = vmatpush.msra.mxu0 %v3566
      %3592 = vmatpush.msra.mxu0 %v3565
      %3593 = vmatpush.msra.mxu0 %v3564
      %3594 = vmatpush.msra.mxu0 %v3563
      %3595 = vmatmul.f32.gmra.mxu0 %v3547
      %v3596 = vpop.f32.mrf.mxu0
      %v3597 = vadd.f32 0.0, %v3596
      %3598 = vmatmul.f32.gmra.mxu0 %v3548
      %v3599 = vpop.f32.mrf.mxu0
      %v3600 = vadd.f32 0.0, %v3599
      %3601 = vmatmul.f32.gmra.mxu0 %v3549
      %v3602 = vpop.f32.mrf.mxu0
      %v3603 = vadd.f32 0.0, %v3602
      %3604 = vmatmul.f32.gmra.mxu0 %v3550
      %v3605 = vpop.f32.mrf.mxu0
      %v3606 = vadd.f32 0.0, %v3605
      %3607 = vmatmul.f32.gmra.mxu0 %v3551
      %v3608 = vpop.f32.mrf.mxu0
      %v3609 = vadd.f32 0.0, %v3608
      %3610 = vmatmul.f32.gmra.mxu0 %v3552
      %v3611 = vpop.f32.mrf.mxu0
      %v3612 = vadd.f32 0.0, %v3611
      %3613 = vmatmul.f32.gmra.mxu0 %v3553
      %v3614 = vpop.f32.mrf.mxu0
      %v3615 = vadd.f32 0.0, %v3614
      %3616 = vmatmul.f32.gmra.mxu0 %v3554
      %v3617 = vpop.f32.mrf.mxu0
      %v3618 = vadd.f32 0.0, %v3617
      %3619 = vmatmul.f32.gmra.mxu0 %v3555
      %v3620 = vpop.f32.mrf.mxu0
      %v3621 = vadd.f32 0.0, %v3620
      %3622 = vmatmul.f32.gmra.mxu0 %v3556
      %v3623 = vpop.f32.mrf.mxu0
      %v3624 = vadd.f32 0.0, %v3623
      %3625 = vmatmul.f32.gmra.mxu0 %v3557
      %v3626 = vpop.f32.mrf.mxu0
      %v3627 = vadd.f32 0.0, %v3626
      %3628 = vmatmul.f32.gmra.mxu0 %v3558
      %v3629 = vpop.f32.mrf.mxu0
      %v3630 = vadd.f32 0.0, %v3629
      %3631 = vmatmul.f32.gmra.mxu0 %v3559
      %v3632 = vpop.f32.mrf.mxu0
      %v3633 = vadd.f32 0.0, %v3632
      %3634 = vmatmul.f32.gmra.mxu0 %v3560
      %v3635 = vpop.f32.mrf.mxu0
      %v3636 = vadd.f32 0.0, %v3635
      %3637 = vmatmul.f32.gmra.mxu0 %v3561
      %v3638 = vpop.f32.mrf.mxu0
      %v3639 = vadd.f32 0.0, %v3638
      %3640 = vmatmul.f32.gmra.mxu0 %v3562
      %v3641 = vpop.f32.mrf.mxu0
      %v3642 = vadd.f32 0.0, %v3641
      %3643 = vdwg.mxu0
      %v3644 = vadd.f32 %v3530, %v3597
      %v3645 = vadd.f32 %v3531, %v3600
      %v3646 = vadd.f32 %v3532, %v3603
      %v3647 = vadd.f32 %v3533, %v3606
      %v3648 = vadd.f32 %v3534, %v3609
      %v3649 = vadd.f32 %v3535, %v3612
      %v3650 = vadd.f32 %v3536, %v3615
      %v3651 = vadd.f32 %v3537, %v3618
      %v3652 = vadd.f32 %v3538, %v3621
      %v3653 = vadd.f32 %v3539, %v3624
      %v3654 = vadd.f32 %v3540, %v3627
      %v3655 = vadd.f32 %v3541, %v3630
      %v3656 = vadd.f32 %v3542, %v3633
      %v3657 = vadd.f32 %v3543, %v3636
      %v3658 = vadd.f32 %v3544, %v3639
      %v3659 = vadd.f32 %v3545, %v3642
      %v3660 = vld [vmem:[%s3546 + $0x1] sm:$0xff]
      %v3661 = vld [vmem:[%s3546 + $0x9] sm:$0xff]
      %v3662 = vld [vmem:[%s3546 + $0x19] sm:$0xff]
      %v3663 = vld [vmem:[%s3546 + $0x21] sm:$0xff]
      %v3664 = vld [vmem:[%s3546 + $0x31] sm:$0xff]
      %v3665 = vld [vmem:[%s3546 + $0x39] sm:$0xff]
      %v3666 = vld [vmem:[%s3546 + $0x49] sm:$0xff]
      %v3667 = vld [vmem:[%s3546 + $0x51] sm:$0xff]
      %v3668 = vld [vmem:[%s3546 + $0x61] sm:$0xff]
      %v3669 = vld [vmem:[%s3546 + $0x69] sm:$0xff]
      %v3670 = vld [vmem:[%s3546 + $0x79] sm:$0xff]
      %v3671 = vld [vmem:[%s3546 + $0x81] sm:$0xff]
      %v3672 = vld [vmem:[%s3546 + $0x91] sm:$0xff]
      %v3673 = vld [vmem:[%s3546 + $0x99] sm:$0xff]
      %v3674 = vld [vmem:[%s3546 + $0xa9] sm:$0xff]
      %v3675 = vld [vmem:[%s3546 + $0xb1] sm:$0xff]
      %v3676 = vld [vmem:[%s3 + $0x200] sm:$0xff]
      %v3677 = vld [vmem:[%s3 + $0x208] sm:$0xff]
      %v3678 = vld [vmem:[%s3 + $0x210] sm:$0xff]
      %v3679 = vld [vmem:[%s3 + $0x218] sm:$0xff]
      %v3680 = vld [vmem:[%s3 + $0x220] sm:$0xff]
      %v3681 = vld [vmem:[%s3 + $0x228] sm:$0xff]
      %v3682 = vld [vmem:[%s3 + $0x230] sm:$0xff]
      %v3683 = vld [vmem:[%s3 + $0x238] sm:$0xff]
      %v3684 = vld [vmem:[%s3 + $0x240] sm:$0xff]
      %v3685 = vld [vmem:[%s3 + $0x248] sm:$0xff]
      %v3686 = vld [vmem:[%s3 + $0x250] sm:$0xff]
      %v3687 = vld [vmem:[%s3 + $0x258] sm:$0xff]
      %v3688 = vld [vmem:[%s3 + $0x260] sm:$0xff]
      %v3689 = vld [vmem:[%s3 + $0x268] sm:$0xff]
      %v3690 = vld [vmem:[%s3 + $0x270] sm:$0xff]
      %v3691 = vld [vmem:[%s3 + $0x278] sm:$0xff]
      %3692 = vmatpush.msra.mxu0 %v3691
      %3693 = vmatpush.msra.mxu0 %v3690
      %3694 = vmatpush.msra.mxu0 %v3689
      %3695 = vmatpush.msra.mxu0 %v3688
      %3696 = vmatpush.msra.mxu0 %v3687
      %3697 = vmatpush.msra.mxu0 %v3686
      %3698 = vmatpush.msra.mxu0 %v3685
      %3699 = vmatpush.msra.mxu0 %v3684
      %3700 = vmatpush.msra.mxu0 %v3683
      %3701 = vmatpush.msra.mxu0 %v3682
      %3702 = vmatpush.msra.mxu0 %v3681
      %3703 = vmatpush.msra.mxu0 %v3680
      %3704 = vmatpush.msra.mxu0 %v3679
      %3705 = vmatpush.msra.mxu0 %v3678
      %3706 = vmatpush.msra.mxu0 %v3677
      %3707 = vmatpush.msra.mxu0 %v3676
      %3708 = vmatmul.f32.gmra.mxu0 %v3660
      %v3709 = vpop.f32.mrf.mxu0
      %v3710 = vadd.f32 0.0, %v3709
      %3711 = vmatmul.f32.gmra.mxu0 %v3661
      %v3712 = vpop.f32.mrf.mxu0
      %v3713 = vadd.f32 0.0, %v3712
      %3714 = vmatmul.f32.gmra.mxu0 %v3662
      %v3715 = vpop.f32.mrf.mxu0
      %v3716 = vadd.f32 0.0, %v3715
      %3717 = vmatmul.f32.gmra.mxu0 %v3663
      %v3718 = vpop.f32.mrf.mxu0
      %v3719 = vadd.f32 0.0, %v3718
      %3720 = vmatmul.f32.gmra.mxu0 %v3664
      %v3721 = vpop.f32.mrf.mxu0
      %v3722 = vadd.f32 0.0, %v3721
      %3723 = vmatmul.f32.gmra.mxu0 %v3665
      %v3724 = vpop.f32.mrf.mxu0
      %v3725 = vadd.f32 0.0, %v3724
      %3726 = vmatmul.f32.gmra.mxu0 %v3666
      %v3727 = vpop.f32.mrf.mxu0
      %v3728 = vadd.f32 0.0, %v3727
      %3729 = vmatmul.f32.gmra.mxu0 %v3667
      %v3730 = vpop.f32.mrf.mxu0
      %v3731 = vadd.f32 0.0, %v3730
      %3732 = vmatmul.f32.gmra.mxu0 %v3668
      %v3733 = vpop.f32.mrf.mxu0
      %v3734 = vadd.f32 0.0, %v3733
      %3735 = vmatmul.f32.gmra.mxu0 %v3669
      %v3736 = vpop.f32.mrf.mxu0
      %v3737 = vadd.f32 0.0, %v3736
      %3738 = vmatmul.f32.gmra.mxu0 %v3670
      %v3739 = vpop.f32.mrf.mxu0
      %v3740 = vadd.f32 0.0, %v3739
      %3741 = vmatmul.f32.gmra.mxu0 %v3671
      %v3742 = vpop.f32.mrf.mxu0
      %v3743 = vadd.f32 0.0, %v3742
      %3744 = vmatmul.f32.gmra.mxu0 %v3672
      %v3745 = vpop.f32.mrf.mxu0
      %v3746 = vadd.f32 0.0, %v3745
      %3747 = vmatmul.f32.gmra.mxu0 %v3673
      %v3748 = vpop.f32.mrf.mxu0
      %v3749 = vadd.f32 0.0, %v3748
      %3750 = vmatmul.f32.gmra.mxu0 %v3674
      %v3751 = vpop.f32.mrf.mxu0
      %v3752 = vadd.f32 0.0, %v3751
      %3753 = vmatmul.f32.gmra.mxu0 %v3675
      %v3754 = vpop.f32.mrf.mxu0
      %v3755 = vadd.f32 0.0, %v3754
      %3756 = vdwg.mxu0
      %v3757 = vadd.f32 %v3644, %v3710
      %v3758 = vadd.f32 %v3645, %v3713
      %v3759 = vadd.f32 %v3646, %v3716
      %v3760 = vadd.f32 %v3647, %v3719
      %v3761 = vadd.f32 %v3648, %v3722
      %v3762 = vadd.f32 %v3649, %v3725
      %v3763 = vadd.f32 %v3650, %v3728
      %v3764 = vadd.f32 %v3651, %v3731
      %v3765 = vadd.f32 %v3652, %v3734
      %v3766 = vadd.f32 %v3653, %v3737
      %v3767 = vadd.f32 %v3654, %v3740
      %v3768 = vadd.f32 %v3655, %v3743
      %v3769 = vadd.f32 %v3656, %v3746
      %v3770 = vadd.f32 %v3657, %v3749
      %v3771 = vadd.f32 %v3658, %v3752
      %v3772 = vadd.f32 %v3659, %v3755
      %v3773 = vld [vmem:[%s3546 + $0x2] sm:$0xff]
      %v3774 = vld [vmem:[%s3546 + $0xa] sm:$0xff]
      %v3775 = vld [vmem:[%s3546 + $0x1a] sm:$0xff]
      %v3776 = vld [vmem:[%s3546 + $0x22] sm:$0xff]
      %v3777 = vld [vmem:[%s3546 + $0x32] sm:$0xff]
      %v3778 = vld [vmem:[%s3546 + $0x3a] sm:$0xff]
      %v3779 = vld [vmem:[%s3546 + $0x4a] sm:$0xff]
      %v3780 = vld [vmem:[%s3546 + $0x52] sm:$0xff]
      %v3781 = vld [vmem:[%s3546 + $0x62] sm:$0xff]
      %v3782 = vld [vmem:[%s3546 + $0x6a] sm:$0xff]
      %v3783 = vld [vmem:[%s3546 + $0x7a] sm:$0xff]
      %v3784 = vld [vmem:[%s3546 + $0x82] sm:$0xff]
      %v3785 = vld [vmem:[%s3546 + $0x92] sm:$0xff]
      %v3786 = vld [vmem:[%s3546 + $0x9a] sm:$0xff]
      %v3787 = vld [vmem:[%s3546 + $0xaa] sm:$0xff]
      %v3788 = vld [vmem:[%s3546 + $0xb2] sm:$0xff]
      %v3789 = vld [vmem:[%s3 + $0x280] sm:$0xff]
      %v3790 = vld [vmem:[%s3 + $0x288] sm:$0xff]
      %v3791 = vld [vmem:[%s3 + $0x290] sm:$0xff]
      %v3792 = vld [vmem:[%s3 + $0x298] sm:$0xff]
      %v3793 = vld [vmem:[%s3 + $0x2a0] sm:$0xff]
      %v3794 = vld [vmem:[%s3 + $0x2a8] sm:$0xff]
      %v3795 = vld [vmem:[%s3 + $0x2b0] sm:$0xff]
      %v3796 = vld [vmem:[%s3 + $0x2b8] sm:$0xff]
      %v3797 = vld [vmem:[%s3 + $0x2c0] sm:$0xff]
      %v3798 = vld [vmem:[%s3 + $0x2c8] sm:$0xff]
      %v3799 = vld [vmem:[%s3 + $0x2d0] sm:$0xff]
      %v3800 = vld [vmem:[%s3 + $0x2d8] sm:$0xff]
      %v3801 = vld [vmem:[%s3 + $0x2e0] sm:$0xff]
      %v3802 = vld [vmem:[%s3 + $0x2e8] sm:$0xff]
      %v3803 = vld [vmem:[%s3 + $0x2f0] sm:$0xff]
      %v3804 = vld [vmem:[%s3 + $0x2f8] sm:$0xff]
      %3805 = vmatpush.msra.mxu0 %v3804
      %3806 = vmatpush.msra.mxu0 %v3803
      %3807 = vmatpush.msra.mxu0 %v3802
      %3808 = vmatpush.msra.mxu0 %v3801
      %3809 = vmatpush.msra.mxu0 %v3800
      %3810 = vmatpush.msra.mxu0 %v3799
      %3811 = vmatpush.msra.mxu0 %v3798
      %3812 = vmatpush.msra.mxu0 %v3797
      %3813 = vmatpush.msra.mxu0 %v3796
      %3814 = vmatpush.msra.mxu0 %v3795
      %3815 = vmatpush.msra.mxu0 %v3794
      %3816 = vmatpush.msra.mxu0 %v3793
      %3817 = vmatpush.msra.mxu0 %v3792
      %3818 = vmatpush.msra.mxu0 %v3791
      %3819 = vmatpush.msra.mxu0 %v3790
      %3820 = vmatpush.msra.mxu0 %v3789
      %3821 = vmatmul.f32.gmra.mxu0 %v3773
      %v3822 = vpop.f32.mrf.mxu0
      %v3823 = vadd.f32 0.0, %v3822
      %3824 = vmatmul.f32.gmra.mxu0 %v3774
      %v3825 = vpop.f32.mrf.mxu0
      %v3826 = vadd.f32 0.0, %v3825
      %3827 = vmatmul.f32.gmra.mxu0 %v3775
      %v3828 = vpop.f32.mrf.mxu0
      %v3829 = vadd.f32 0.0, %v3828
      %3830 = vmatmul.f32.gmra.mxu0 %v3776
      %v3831 = vpop.f32.mrf.mxu0
      %v3832 = vadd.f32 0.0, %v3831
      %3833 = vmatmul.f32.gmra.mxu0 %v3777
      %v3834 = vpop.f32.mrf.mxu0
      %v3835 = vadd.f32 0.0, %v3834
      %3836 = vmatmul.f32.gmra.mxu0 %v3778
      %v3837 = vpop.f32.mrf.mxu0
      %v3838 = vadd.f32 0.0, %v3837
      %3839 = vmatmul.f32.gmra.mxu0 %v3779
      %v3840 = vpop.f32.mrf.mxu0
      %v3841 = vadd.f32 0.0, %v3840
      %3842 = vmatmul.f32.gmra.mxu0 %v3780
      %v3843 = vpop.f32.mrf.mxu0
      %v3844 = vadd.f32 0.0, %v3843
      %3845 = vmatmul.f32.gmra.mxu0 %v3781
      %v3846 = vpop.f32.mrf.mxu0
      %v3847 = vadd.f32 0.0, %v3846
      %3848 = vmatmul.f32.gmra.mxu0 %v3782
      %v3849 = vpop.f32.mrf.mxu0
      %v3850 = vadd.f32 0.0, %v3849
      %3851 = vmatmul.f32.gmra.mxu0 %v3783
      %v3852 = vpop.f32.mrf.mxu0
      %v3853 = vadd.f32 0.0, %v3852
      %3854 = vmatmul.f32.gmra.mxu0 %v3784
      %v3855 = vpop.f32.mrf.mxu0
      %v3856 = vadd.f32 0.0, %v3855
      %3857 = vmatmul.f32.gmra.mxu0 %v3785
      %v3858 = vpop.f32.mrf.mxu0
      %v3859 = vadd.f32 0.0, %v3858
      %3860 = vmatmul.f32.gmra.mxu0 %v3786
      %v3861 = vpop.f32.mrf.mxu0
      %v3862 = vadd.f32 0.0, %v3861
      %3863 = vmatmul.f32.gmra.mxu0 %v3787
      %v3864 = vpop.f32.mrf.mxu0
      %v3865 = vadd.f32 0.0, %v3864
      %3866 = vmatmul.f32.gmra.mxu0 %v3788
      %v3867 = vpop.f32.mrf.mxu0
      %v3868 = vadd.f32 0.0, %v3867
      %3869 = vdwg.mxu0
      %v3870 = vadd.f32 %v3757, %v3823
      %v3871 = vadd.f32 %v3758, %v3826
      %v3872 = vadd.f32 %v3759, %v3829
      %v3873 = vadd.f32 %v3760, %v3832
      %v3874 = vadd.f32 %v3761, %v3835
      %v3875 = vadd.f32 %v3762, %v3838
      %v3876 = vadd.f32 %v3763, %v3841
      %v3877 = vadd.f32 %v3764, %v3844
      %v3878 = vadd.f32 %v3765, %v3847
      %v3879 = vadd.f32 %v3766, %v3850
      %v3880 = vadd.f32 %v3767, %v3853
      %v3881 = vadd.f32 %v3768, %v3856
      %v3882 = vadd.f32 %v3769, %v3859
      %v3883 = vadd.f32 %v3770, %v3862
      %v3884 = vadd.f32 %v3771, %v3865
      %v3885 = vadd.f32 %v3772, %v3868
      %s3886 = scalar_lea.vmem [#allocation3], 48
      %v3887 = vld [vmem:[%s3886] sm:$0xff]
      %v3888 = vld [vmem:[%s3886 + $0x8] sm:$0xff]
      %v3889 = vld [vmem:[%s3886 + $0x18] sm:$0xff]
      %v3890 = vld [vmem:[%s3886 + $0x20] sm:$0xff]
      %v3891 = vld [vmem:[%s3886 + $0x30] sm:$0xff]
      %v3892 = vld [vmem:[%s3886 + $0x38] sm:$0xff]
      %v3893 = vld [vmem:[%s3886 + $0x48] sm:$0xff]
      %v3894 = vld [vmem:[%s3886 + $0x50] sm:$0xff]
      %v3895 = vld [vmem:[%s3886 + $0x60] sm:$0xff]
      %v3896 = vld [vmem:[%s3886 + $0x68] sm:$0xff]
      %v3897 = vld [vmem:[%s3886 + $0x78] sm:$0xff]
      %v3898 = vld [vmem:[%s3886 + $0x80] sm:$0xff]
      %v3899 = vld [vmem:[%s3886 + $0x90] sm:$0xff]
      %v3900 = vld [vmem:[%s3886 + $0x98] sm:$0xff]
      %v3901 = vld [vmem:[%s3886 + $0xa8] sm:$0xff]
      %v3902 = vld [vmem:[%s3886 + $0xb0] sm:$0xff]
      %v3903 = vld [vmem:[%s3 + $0x300] sm:$0xff]
      %v3904 = vld [vmem:[%s3 + $0x308] sm:$0xff]
      %v3905 = vld [vmem:[%s3 + $0x310] sm:$0xff]
      %v3906 = vld [vmem:[%s3 + $0x318] sm:$0xff]
      %v3907 = vld [vmem:[%s3 + $0x320] sm:$0xff]
      %v3908 = vld [vmem:[%s3 + $0x328] sm:$0xff]
      %v3909 = vld [vmem:[%s3 + $0x330] sm:$0xff]
      %v3910 = vld [vmem:[%s3 + $0x338] sm:$0xff]
      %v3911 = vld [vmem:[%s3 + $0x340] sm:$0xff]
      %v3912 = vld [vmem:[%s3 + $0x348] sm:$0xff]
      %v3913 = vld [vmem:[%s3 + $0x350] sm:$0xff]
      %v3914 = vld [vmem:[%s3 + $0x358] sm:$0xff]
      %v3915 = vld [vmem:[%s3 + $0x360] sm:$0xff]
      %v3916 = vld [vmem:[%s3 + $0x368] sm:$0xff]
      %v3917 = vld [vmem:[%s3 + $0x370] sm:$0xff]
      %v3918 = vld [vmem:[%s3 + $0x378] sm:$0xff]
      %3919 = vmatpush.msra.mxu0 %v3918
      %3920 = vmatpush.msra.mxu0 %v3917
      %3921 = vmatpush.msra.mxu0 %v3916
      %3922 = vmatpush.msra.mxu0 %v3915
      %3923 = vmatpush.msra.mxu0 %v3914
      %3924 = vmatpush.msra.mxu0 %v3913
      %3925 = vmatpush.msra.mxu0 %v3912
      %3926 = vmatpush.msra.mxu0 %v3911
      %3927 = vmatpush.msra.mxu0 %v3910
      %3928 = vmatpush.msra.mxu0 %v3909
      %3929 = vmatpush.msra.mxu0 %v3908
      %3930 = vmatpush.msra.mxu0 %v3907
      %3931 = vmatpush.msra.mxu0 %v3906
      %3932 = vmatpush.msra.mxu0 %v3905
      %3933 = vmatpush.msra.mxu0 %v3904
      %3934 = vmatpush.msra.mxu0 %v3903
      %3935 = vmatmul.f32.gmra.mxu0 %v3887
      %v3936 = vpop.f32.mrf.mxu0
      %v3937 = vadd.f32 0.0, %v3936
      %3938 = vmatmul.f32.gmra.mxu0 %v3888
      %v3939 = vpop.f32.mrf.mxu0
      %v3940 = vadd.f32 0.0, %v3939
      %3941 = vmatmul.f32.gmra.mxu0 %v3889
      %v3942 = vpop.f32.mrf.mxu0
      %v3943 = vadd.f32 0.0, %v3942
      %3944 = vmatmul.f32.gmra.mxu0 %v3890
      %v3945 = vpop.f32.mrf.mxu0
      %v3946 = vadd.f32 0.0, %v3945
      %3947 = vmatmul.f32.gmra.mxu0 %v3891
      %v3948 = vpop.f32.mrf.mxu0
      %v3949 = vadd.f32 0.0, %v3948
      %3950 = vmatmul.f32.gmra.mxu0 %v3892
      %v3951 = vpop.f32.mrf.mxu0
      %v3952 = vadd.f32 0.0, %v3951
      %3953 = vmatmul.f32.gmra.mxu0 %v3893
      %v3954 = vpop.f32.mrf.mxu0
      %v3955 = vadd.f32 0.0, %v3954
      %3956 = vmatmul.f32.gmra.mxu0 %v3894
      %v3957 = vpop.f32.mrf.mxu0
      %v3958 = vadd.f32 0.0, %v3957
      %3959 = vmatmul.f32.gmra.mxu0 %v3895
      %v3960 = vpop.f32.mrf.mxu0
      %v3961 = vadd.f32 0.0, %v3960
      %3962 = vmatmul.f32.gmra.mxu0 %v3896
      %v3963 = vpop.f32.mrf.mxu0
      %v3964 = vadd.f32 0.0, %v3963
      %3965 = vmatmul.f32.gmra.mxu0 %v3897
      %v3966 = vpop.f32.mrf.mxu0
      %v3967 = vadd.f32 0.0, %v3966
      %3968 = vmatmul.f32.gmra.mxu0 %v3898
      %v3969 = vpop.f32.mrf.mxu0
      %v3970 = vadd.f32 0.0, %v3969
      %3971 = vmatmul.f32.gmra.mxu0 %v3899
      %v3972 = vpop.f32.mrf.mxu0
      %v3973 = vadd.f32 0.0, %v3972
      %3974 = vmatmul.f32.gmra.mxu0 %v3900
      %v3975 = vpop.f32.mrf.mxu0
      %v3976 = vadd.f32 0.0, %v3975
      %3977 = vmatmul.f32.gmra.mxu0 %v3901
      %v3978 = vpop.f32.mrf.mxu0
      %v3979 = vadd.f32 0.0, %v3978
      %3980 = vmatmul.f32.gmra.mxu0 %v3902
      %v3981 = vpop.f32.mrf.mxu0
      %v3982 = vadd.f32 0.0, %v3981
      %3983 = vdwg.mxu0
      %v3984 = vadd.f32 %v3870, %v3937
      %v3985 = vadd.f32 %v3871, %v3940
      %v3986 = vadd.f32 %v3872, %v3943
      %v3987 = vadd.f32 %v3873, %v3946
      %v3988 = vadd.f32 %v3874, %v3949
      %v3989 = vadd.f32 %v3875, %v3952
      %v3990 = vadd.f32 %v3876, %v3955
      %v3991 = vadd.f32 %v3877, %v3958
      %v3992 = vadd.f32 %v3878, %v3961
      %v3993 = vadd.f32 %v3879, %v3964
      %v3994 = vadd.f32 %v3880, %v3967
      %v3995 = vadd.f32 %v3881, %v3970
      %v3996 = vadd.f32 %v3882, %v3973
      %v3997 = vadd.f32 %v3883, %v3976
      %v3998 = vadd.f32 %v3884, %v3979
      %v3999 = vadd.f32 %v3885, %v3982
      %v4000 = vld [vmem:[%s3886 + $0x1] sm:$0xff]
      %v4001 = vld [vmem:[%s3886 + $0x9] sm:$0xff]
      %v4002 = vld [vmem:[%s3886 + $0x19] sm:$0xff]
      %v4003 = vld [vmem:[%s3886 + $0x21] sm:$0xff]
      %v4004 = vld [vmem:[%s3886 + $0x31] sm:$0xff]
      %v4005 = vld [vmem:[%s3886 + $0x39] sm:$0xff]
      %v4006 = vld [vmem:[%s3886 + $0x49] sm:$0xff]
      %v4007 = vld [vmem:[%s3886 + $0x51] sm:$0xff]
      %v4008 = vld [vmem:[%s3886 + $0x61] sm:$0xff]
      %v4009 = vld [vmem:[%s3886 + $0x69] sm:$0xff]
      %v4010 = vld [vmem:[%s3886 + $0x79] sm:$0xff]
      %v4011 = vld [vmem:[%s3886 + $0x81] sm:$0xff]
      %v4012 = vld [vmem:[%s3886 + $0x91] sm:$0xff]
      %v4013 = vld [vmem:[%s3886 + $0x99] sm:$0xff]
      %v4014 = vld [vmem:[%s3886 + $0xa9] sm:$0xff]
      %v4015 = vld [vmem:[%s3886 + $0xb1] sm:$0xff]
      %v4016 = vld [vmem:[%s3 + $0x380] sm:$0xff]
      %v4017 = vld [vmem:[%s3 + $0x388] sm:$0xff]
      %v4018 = vld [vmem:[%s3 + $0x390] sm:$0xff]
      %v4019 = vld [vmem:[%s3 + $0x398] sm:$0xff]
      %v4020 = vld [vmem:[%s3 + $0x3a0] sm:$0xff]
      %v4021 = vld [vmem:[%s3 + $0x3a8] sm:$0xff]
      %v4022 = vld [vmem:[%s3 + $0x3b0] sm:$0xff]
      %v4023 = vld [vmem:[%s3 + $0x3b8] sm:$0xff]
      %v4024 = vld [vmem:[%s3 + $0x3c0] sm:$0xff]
      %v4025 = vld [vmem:[%s3 + $0x3c8] sm:$0xff]
      %v4026 = vld [vmem:[%s3 + $0x3d0] sm:$0xff]
      %v4027 = vld [vmem:[%s3 + $0x3d8] sm:$0xff]
      %v4028 = vld [vmem:[%s3 + $0x3e0] sm:$0xff]
      %v4029 = vld [vmem:[%s3 + $0x3e8] sm:$0xff]
      %v4030 = vld [vmem:[%s3 + $0x3f0] sm:$0xff]
      %v4031 = vld [vmem:[%s3 + $0x3f8] sm:$0xff]
      %4032 = vmatpush.msra.mxu0 %v4031
      %4033 = vmatpush.msra.mxu0 %v4030
      %4034 = vmatpush.msra.mxu0 %v4029
      %4035 = vmatpush.msra.mxu0 %v4028
      %4036 = vmatpush.msra.mxu0 %v4027
      %4037 = vmatpush.msra.mxu0 %v4026
      %4038 = vmatpush.msra.mxu0 %v4025
      %4039 = vmatpush.msra.mxu0 %v4024
      %4040 = vmatpush.msra.mxu0 %v4023
      %4041 = vmatpush.msra.mxu0 %v4022
      %4042 = vmatpush.msra.mxu0 %v4021
      %4043 = vmatpush.msra.mxu0 %v4020
      %4044 = vmatpush.msra.mxu0 %v4019
      %4045 = vmatpush.msra.mxu0 %v4018
      %4046 = vmatpush.msra.mxu0 %v4017
      %4047 = vmatpush.msra.mxu0 %v4016
      %4048 = vmatmul.f32.gmra.mxu0 %v4000
      %v4049 = vpop.f32.mrf.mxu0
      %v4050 = vadd.f32 0.0, %v4049
      %4051 = vmatmul.f32.gmra.mxu0 %v4001
      %v4052 = vpop.f32.mrf.mxu0
      %v4053 = vadd.f32 0.0, %v4052
      %4054 = vmatmul.f32.gmra.mxu0 %v4002
      %v4055 = vpop.f32.mrf.mxu0
      %v4056 = vadd.f32 0.0, %v4055
      %4057 = vmatmul.f32.gmra.mxu0 %v4003
      %v4058 = vpop.f32.mrf.mxu0
      %v4059 = vadd.f32 0.0, %v4058
      %4060 = vmatmul.f32.gmra.mxu0 %v4004
      %v4061 = vpop.f32.mrf.mxu0
      %v4062 = vadd.f32 0.0, %v4061
      %4063 = vmatmul.f32.gmra.mxu0 %v4005
      %v4064 = vpop.f32.mrf.mxu0
      %v4065 = vadd.f32 0.0, %v4064
      %4066 = vmatmul.f32.gmra.mxu0 %v4006
      %v4067 = vpop.f32.mrf.mxu0
      %v4068 = vadd.f32 0.0, %v4067
      %4069 = vmatmul.f32.gmra.mxu0 %v4007
      %v4070 = vpop.f32.mrf.mxu0
      %v4071 = vadd.f32 0.0, %v4070
      %4072 = vmatmul.f32.gmra.mxu0 %v4008
      %v4073 = vpop.f32.mrf.mxu0
      %v4074 = vadd.f32 0.0, %v4073
      %4075 = vmatmul.f32.gmra.mxu0 %v4009
      %v4076 = vpop.f32.mrf.mxu0
      %v4077 = vadd.f32 0.0, %v4076
      %4078 = vmatmul.f32.gmra.mxu0 %v4010
      %v4079 = vpop.f32.mrf.mxu0
      %v4080 = vadd.f32 0.0, %v4079
      %4081 = vmatmul.f32.gmra.mxu0 %v4011
      %v4082 = vpop.f32.mrf.mxu0
      %v4083 = vadd.f32 0.0, %v4082
      %4084 = vmatmul.f32.gmra.mxu0 %v4012
      %v4085 = vpop.f32.mrf.mxu0
      %v4086 = vadd.f32 0.0, %v4085
      %4087 = vmatmul.f32.gmra.mxu0 %v4013
      %v4088 = vpop.f32.mrf.mxu0
      %v4089 = vadd.f32 0.0, %v4088
      %4090 = vmatmul.f32.gmra.mxu0 %v4014
      %v4091 = vpop.f32.mrf.mxu0
      %v4092 = vadd.f32 0.0, %v4091
      %4093 = vmatmul.f32.gmra.mxu0 %v4015
      %v4094 = vpop.f32.mrf.mxu0
      %v4095 = vadd.f32 0.0, %v4094
      %4096 = vdwg.mxu0
      %v4097 = vadd.f32 %v3984, %v4050
      %v4098 = vadd.f32 %v3985, %v4053
      %v4099 = vadd.f32 %v3986, %v4056
      %v4100 = vadd.f32 %v3987, %v4059
      %v4101 = vadd.f32 %v3988, %v4062
      %v4102 = vadd.f32 %v3989, %v4065
      %v4103 = vadd.f32 %v3990, %v4068
      %v4104 = vadd.f32 %v3991, %v4071
      %v4105 = vadd.f32 %v3992, %v4074
      %v4106 = vadd.f32 %v3993, %v4077
      %v4107 = vadd.f32 %v3994, %v4080
      %v4108 = vadd.f32 %v3995, %v4083
      %v4109 = vadd.f32 %v3996, %v4086
      %v4110 = vadd.f32 %v3997, %v4089
      %v4111 = vadd.f32 %v3998, %v4092
      %v4112 = vadd.f32 %v3999, %v4095
      %v4113 = vld [vmem:[%s3886 + $0x2] sm:$0xff]
      %v4114 = vld [vmem:[%s3886 + $0xa] sm:$0xff]
      %v4115 = vld [vmem:[%s3886 + $0x1a] sm:$0xff]
      %v4116 = vld [vmem:[%s3886 + $0x22] sm:$0xff]
      %v4117 = vld [vmem:[%s3886 + $0x32] sm:$0xff]
      %v4118 = vld [vmem:[%s3886 + $0x3a] sm:$0xff]
      %v4119 = vld [vmem:[%s3886 + $0x4a] sm:$0xff]
      %v4120 = vld [vmem:[%s3886 + $0x52] sm:$0xff]
      %v4121 = vld [vmem:[%s3886 + $0x62] sm:$0xff]
      %v4122 = vld [vmem:[%s3886 + $0x6a] sm:$0xff]
      %v4123 = vld [vmem:[%s3886 + $0x7a] sm:$0xff]
      %v4124 = vld [vmem:[%s3886 + $0x82] sm:$0xff]
      %v4125 = vld [vmem:[%s3886 + $0x92] sm:$0xff]
      %v4126 = vld [vmem:[%s3886 + $0x9a] sm:$0xff]
      %v4127 = vld [vmem:[%s3886 + $0xaa] sm:$0xff]
      %v4128 = vld [vmem:[%s3886 + $0xb2] sm:$0xff]
      %v4129 = vld [vmem:[%s3 + $0x400] sm:$0xff]
      %v4130 = vld [vmem:[%s3 + $0x408] sm:$0xff]
      %v4131 = vld [vmem:[%s3 + $0x410] sm:$0xff]
      %v4132 = vld [vmem:[%s3 + $0x418] sm:$0xff]
      %v4133 = vld [vmem:[%s3 + $0x420] sm:$0xff]
      %v4134 = vld [vmem:[%s3 + $0x428] sm:$0xff]
      %v4135 = vld [vmem:[%s3 + $0x430] sm:$0xff]
      %v4136 = vld [vmem:[%s3 + $0x438] sm:$0xff]
      %v4137 = vld [vmem:[%s3 + $0x440] sm:$0xff]
      %v4138 = vld [vmem:[%s3 + $0x448] sm:$0xff]
      %v4139 = vld [vmem:[%s3 + $0x450] sm:$0xff]
      %v4140 = vld [vmem:[%s3 + $0x458] sm:$0xff]
      %v4141 = vld [vmem:[%s3 + $0x460] sm:$0xff]
      %v4142 = vld [vmem:[%s3 + $0x468] sm:$0xff]
      %v4143 = vld [vmem:[%s3 + $0x470] sm:$0xff]
      %v4144 = vld [vmem:[%s3 + $0x478] sm:$0xff]
      %4145 = vmatpush.msra.mxu0 %v4144
      %4146 = vmatpush.msra.mxu0 %v4143
      %4147 = vmatpush.msra.mxu0 %v4142
      %4148 = vmatpush.msra.mxu0 %v4141
      %4149 = vmatpush.msra.mxu0 %v4140
      %4150 = vmatpush.msra.mxu0 %v4139
      %4151 = vmatpush.msra.mxu0 %v4138
      %4152 = vmatpush.msra.mxu0 %v4137
      %4153 = vmatpush.msra.mxu0 %v4136
      %4154 = vmatpush.msra.mxu0 %v4135
      %4155 = vmatpush.msra.mxu0 %v4134
      %4156 = vmatpush.msra.mxu0 %v4133
      %4157 = vmatpush.msra.mxu0 %v4132
      %4158 = vmatpush.msra.mxu0 %v4131
      %4159 = vmatpush.msra.mxu0 %v4130
      %4160 = vmatpush.msra.mxu0 %v4129
      %4161 = vmatmul.f32.gmra.mxu0 %v4113
      %v4162 = vpop.f32.mrf.mxu0
      %v4163 = vadd.f32 0.0, %v4162
      %4164 = vmatmul.f32.gmra.mxu0 %v4114
      %v4165 = vpop.f32.mrf.mxu0
      %v4166 = vadd.f32 0.0, %v4165
      %4167 = vmatmul.f32.gmra.mxu0 %v4115
      %v4168 = vpop.f32.mrf.mxu0
      %v4169 = vadd.f32 0.0, %v4168
      %4170 = vmatmul.f32.gmra.mxu0 %v4116
      %v4171 = vpop.f32.mrf.mxu0
      %v4172 = vadd.f32 0.0, %v4171
      %4173 = vmatmul.f32.gmra.mxu0 %v4117
      %v4174 = vpop.f32.mrf.mxu0
      %v4175 = vadd.f32 0.0, %v4174
      %4176 = vmatmul.f32.gmra.mxu0 %v4118
      %v4177 = vpop.f32.mrf.mxu0
      %v4178 = vadd.f32 0.0, %v4177
      %4179 = vmatmul.f32.gmra.mxu0 %v4119
      %v4180 = vpop.f32.mrf.mxu0
      %v4181 = vadd.f32 0.0, %v4180
      %4182 = vmatmul.f32.gmra.mxu0 %v4120
      %v4183 = vpop.f32.mrf.mxu0
      %v4184 = vadd.f32 0.0, %v4183
      %4185 = vmatmul.f32.gmra.mxu0 %v4121
      %v4186 = vpop.f32.mrf.mxu0
      %v4187 = vadd.f32 0.0, %v4186
      %4188 = vmatmul.f32.gmra.mxu0 %v4122
      %v4189 = vpop.f32.mrf.mxu0
      %v4190 = vadd.f32 0.0, %v4189
      %4191 = vmatmul.f32.gmra.mxu0 %v4123
      %v4192 = vpop.f32.mrf.mxu0
      %v4193 = vadd.f32 0.0, %v4192
      %4194 = vmatmul.f32.gmra.mxu0 %v4124
      %v4195 = vpop.f32.mrf.mxu0
      %v4196 = vadd.f32 0.0, %v4195
      %4197 = vmatmul.f32.gmra.mxu0 %v4125
      %v4198 = vpop.f32.mrf.mxu0
      %v4199 = vadd.f32 0.0, %v4198
      %4200 = vmatmul.f32.gmra.mxu0 %v4126
      %v4201 = vpop.f32.mrf.mxu0
      %v4202 = vadd.f32 0.0, %v4201
      %4203 = vmatmul.f32.gmra.mxu0 %v4127
      %v4204 = vpop.f32.mrf.mxu0
      %v4205 = vadd.f32 0.0, %v4204
      %4206 = vmatmul.f32.gmra.mxu0 %v4128
      %v4207 = vpop.f32.mrf.mxu0
      %v4208 = vadd.f32 0.0, %v4207
      %4209 = vdwg.mxu0
      %v4210 = vadd.f32 %v4097, %v4163
      %v4211 = vadd.f32 %v4098, %v4166
      %v4212 = vadd.f32 %v4099, %v4169
      %v4213 = vadd.f32 %v4100, %v4172
      %v4214 = vadd.f32 %v4101, %v4175
      %v4215 = vadd.f32 %v4102, %v4178
      %v4216 = vadd.f32 %v4103, %v4181
      %v4217 = vadd.f32 %v4104, %v4184
      %v4218 = vadd.f32 %v4105, %v4187
      %v4219 = vadd.f32 %v4106, %v4190
      %v4220 = vadd.f32 %v4107, %v4193
      %v4221 = vadd.f32 %v4108, %v4196
      %v4222 = vadd.f32 %v4109, %v4199
      %v4223 = vadd.f32 %v4110, %v4202
      %v4224 = vadd.f32 %v4111, %v4205
      %v4225 = vadd.f32 %v4112, %v4208
      %v4226 = vperm.slane %v3237, 0
      %v4227 = vmul.f32 %v4210, %v4226
      %v4228 = vmul.f32 %v4211, %v4226
      %v4229 = vmul.f32 %v4212, %v4226
      %v4230 = vmul.f32 %v4213, %v4226
      %v4231 = vmul.f32 %v4214, %v4226
      %v4232 = vmul.f32 %v4215, %v4226
      %v4233 = vmul.f32 %v4216, %v4226
      %v4234 = vmul.f32 %v4217, %v4226
      %v4235 = vmul.f32 %v4218, %v4226
      %v4236 = vmul.f32 %v4219, %v4226
      %v4237 = vmul.f32 %v4220, %v4226
      %v4238 = vmul.f32 %v4221, %v4226
      %v4239 = vmul.f32 %v4222, %v4226
      %v4240 = vmul.f32 %v4223, %v4226
      %v4241 = vmul.f32 %v4224, %v4226
      %v4242 = vmul.f32 %v4225, %v4226
      %v4243 = vperm.slane %v3238, 0
      %v4244 = vadd.f32 %v4227, %v4243
      %v4245 = vadd.f32 %v4228, %v4243
      %v4246 = vadd.f32 %v4229, %v4243
      %v4247 = vadd.f32 %v4230, %v4243
      %v4248 = vadd.f32 %v4231, %v4243
      %v4249 = vadd.f32 %v4232, %v4243
      %v4250 = vadd.f32 %v4233, %v4243
      %v4251 = vadd.f32 %v4234, %v4243
      %v4252 = vadd.f32 %v4235, %v4243
      %v4253 = vadd.f32 %v4236, %v4243
      %v4254 = vadd.f32 %v4237, %v4243
      %v4255 = vadd.f32 %v4238, %v4243
      %v4256 = vadd.f32 %v4239, %v4243
      %v4257 = vadd.f32 %v4240, %v4243
      %v4258 = vadd.f32 %v4241, %v4243
      %v4259 = vadd.f32 %v4242, %v4243
      %v4260 = vmax.f32 %v4244, 0.0
      %v4261 = vmax.f32 %v4245, 0.0
      %v4262 = vmax.f32 %v4246, 0.0
      %v4263 = vmax.f32 %v4247, 0.0
      %v4264 = vmax.f32 %v4248, 0.0
      %v4265 = vmax.f32 %v4249, 0.0
      %v4266 = vmax.f32 %v4250, 0.0
      %v4267 = vmax.f32 %v4251, 0.0
      %v4268 = vmax.f32 %v4252, 0.0
      %v4269 = vmax.f32 %v4253, 0.0
      %v4270 = vmax.f32 %v4254, 0.0
      %v4271 = vmax.f32 %v4255, 0.0
      %v4272 = vmax.f32 %v4256, 0.0
      %v4273 = vmax.f32 %v4257, 0.0
      %v4274 = vmax.f32 %v4258, 0.0
      %v4275 = vmax.f32 %v4259, 0.0
      %v4292 = vrot.slane %v4260, 2
      %v4293 = vrot.slane %v4260, 4
      %v4294 = vrot.slane %v4260, 6
      %v4295 = vrot.slane %v4261, 2
      %v4296 = vrot.slane %v4261, 4
      %v4297 = vrot.slane %v4261, 6
      %v4298 = vrot.slane %v4262, 2
      %v4299 = vrot.slane %v4262, 4
      %v4300 = vrot.slane %v4262, 6
      %v4301 = vrot.slane %v4263, 2
      %v4302 = vrot.slane %v4263, 4
      %v4303 = vrot.slane %v4263, 6
      %v4304 = vrot.slane %v4264, 2
      %v4305 = vrot.slane %v4264, 4
      %v4306 = vrot.slane %v4264, 6
      %v4307 = vrot.slane %v4265, 2
      %v4308 = vrot.slane %v4265, 4
      %v4309 = vrot.slane %v4265, 6
      %v4310 = vrot.slane %v4266, 2
      %v4311 = vrot.slane %v4266, 4
      %v4312 = vrot.slane %v4266, 6
      %v4313 = vrot.slane %v4267, 2
      %v4314 = vrot.slane %v4267, 4
      %v4315 = vrot.slane %v4267, 6
      %v4316 = vrot.slane %v4268, 2
      %v4317 = vrot.slane %v4268, 4
      %v4318 = vrot.slane %v4268, 6
      %v4319 = vrot.slane %v4269, 2
      %v4320 = vrot.slane %v4269, 4
      %v4321 = vrot.slane %v4269, 6
      %v4322 = vrot.slane %v4270, 2
      %v4323 = vrot.slane %v4270, 4
      %v4324 = vrot.slane %v4270, 6
      %v4325 = vrot.slane %v4271, 2
      %v4326 = vrot.slane %v4271, 4
      %v4327 = vrot.slane %v4271, 6
      %v4328 = vrot.slane %v4272, 2
      %v4329 = vrot.slane %v4272, 4
      %v4330 = vrot.slane %v4272, 6
      %v4331 = vrot.slane %v4273, 2
      %v4332 = vrot.slane %v4273, 4
      %v4333 = vrot.slane %v4273, 6
      %v4334 = vrot.slane %v4274, 2
      %v4335 = vrot.slane %v4274, 4
      %v4336 = vrot.slane %v4274, 6
      %v4337 = vrot.slane %v4275, 2
      %v4338 = vrot.slane %v4275, 4
      %v4339 = vrot.slane %v4275, 6
      %v4388 = vrot.slane %v4260, 7
      %v4389 = vrot.slane %v4292, 7
      %v4390 = vrot.slane %v4293, 7
      %v4391 = vrot.slane %v4294, 7
      %v4392 = vrot.slane %v4261, 7
      %v4393 = vrot.slane %v4295, 7
      %v4394 = vrot.slane %v4296, 7
      %v4395 = vrot.slane %v4297, 7
      %v4396 = vrot.slane %v4262, 7
      %v4397 = vrot.slane %v4298, 7
      %v4398 = vrot.slane %v4299, 7
      %v4399 = vrot.slane %v4300, 7
      %v4400 = vrot.slane %v4263, 7
      %v4401 = vrot.slane %v4301, 7
      %v4402 = vrot.slane %v4302, 7
      %v4403 = vrot.slane %v4303, 7
      %v4404 = vrot.slane %v4264, 7
      %v4405 = vrot.slane %v4304, 7
      %v4406 = vrot.slane %v4305, 7
      %v4407 = vrot.slane %v4306, 7
      %v4408 = vrot.slane %v4265, 7
      %v4409 = vrot.slane %v4307, 7
      %v4410 = vrot.slane %v4308, 7
      %v4411 = vrot.slane %v4309, 7
      %v4412 = vrot.slane %v4266, 7
      %v4413 = vrot.slane %v4310, 7
      %v4414 = vrot.slane %v4311, 7
      %v4415 = vrot.slane %v4312, 7
      %v4416 = vrot.slane %v4267, 7
      %v4417 = vrot.slane %v4313, 7
      %v4418 = vrot.slane %v4314, 7
      %v4419 = vrot.slane %v4315, 7
      %v4420 = vrot.slane %v4268, 7
      %v4421 = vrot.slane %v4316, 7
      %v4422 = vrot.slane %v4317, 7
      %v4423 = vrot.slane %v4318, 7
      %v4424 = vrot.slane %v4269, 7
      %v4425 = vrot.slane %v4319, 7
      %v4426 = vrot.slane %v4320, 7
      %v4427 = vrot.slane %v4321, 7
      %v4428 = vrot.slane %v4270, 7
      %v4429 = vrot.slane %v4322, 7
      %v4430 = vrot.slane %v4323, 7
      %v4431 = vrot.slane %v4324, 7
      %v4432 = vrot.slane %v4271, 7
      %v4433 = vrot.slane %v4325, 7
      %v4434 = vrot.slane %v4326, 7
      %v4435 = vrot.slane %v4327, 7
      %v4436 = vrot.slane %v4272, 7
      %v4437 = vrot.slane %v4328, 7
      %v4438 = vrot.slane %v4329, 7
      %v4439 = vrot.slane %v4330, 7
      %v4440 = vrot.slane %v4273, 7
      %v4441 = vrot.slane %v4331, 7
      %v4442 = vrot.slane %v4332, 7
      %v4443 = vrot.slane %v4333, 7
      %v4444 = vrot.slane %v4274, 7
      %v4445 = vrot.slane %v4334, 7
      %v4446 = vrot.slane %v4335, 7
      %v4447 = vrot.slane %v4336, 7
      %v4448 = vrot.slane %v4275, 7
      %v4449 = vrot.slane %v4337, 7
      %v4450 = vrot.slane %v4338, 7
      %v4451 = vrot.slane %v4339, 7
      %vm4516 = vcmp.gt.f32.partialorder %v4260, %v4388
      %vm4517 = vcmp.gt.f32.partialorder %v4292, %v4389
      %vm4518 = vcmp.gt.f32.partialorder %v4293, %v4390
      %vm4519 = vcmp.gt.f32.partialorder %v4294, %v4391
      %vm4520 = vcmp.gt.f32.partialorder %v4261, %v4392
      %vm4521 = vcmp.gt.f32.partialorder %v4295, %v4393
      %vm4522 = vcmp.gt.f32.partialorder %v4296, %v4394
      %vm4523 = vcmp.gt.f32.partialorder %v4297, %v4395
      %vm4524 = vcmp.gt.f32.partialorder %v4262, %v4396
      %vm4525 = vcmp.gt.f32.partialorder %v4298, %v4397
      %vm4526 = vcmp.gt.f32.partialorder %v4299, %v4398
      %vm4527 = vcmp.gt.f32.partialorder %v4300, %v4399
      %vm4528 = vcmp.gt.f32.partialorder %v4263, %v4400
      %vm4529 = vcmp.gt.f32.partialorder %v4301, %v4401
      %vm4530 = vcmp.gt.f32.partialorder %v4302, %v4402
      %vm4531 = vcmp.gt.f32.partialorder %v4303, %v4403
      %vm4532 = vcmp.gt.f32.partialorder %v4264, %v4404
      %vm4533 = vcmp.gt.f32.partialorder %v4304, %v4405
      %vm4534 = vcmp.gt.f32.partialorder %v4305, %v4406
      %vm4535 = vcmp.gt.f32.partialorder %v4306, %v4407
      %vm4536 = vcmp.gt.f32.partialorder %v4265, %v4408
      %vm4537 = vcmp.gt.f32.partialorder %v4307, %v4409
      %vm4538 = vcmp.gt.f32.partialorder %v4308, %v4410
      %vm4539 = vcmp.gt.f32.partialorder %v4309, %v4411
      %vm4540 = vcmp.gt.f32.partialorder %v4266, %v4412
      %vm4541 = vcmp.gt.f32.partialorder %v4310, %v4413
      %vm4542 = vcmp.gt.f32.partialorder %v4311, %v4414
      %vm4543 = vcmp.gt.f32.partialorder %v4312, %v4415
      %vm4544 = vcmp.gt.f32.partialorder %v4267, %v4416
      %vm4545 = vcmp.gt.f32.partialorder %v4313, %v4417
      %vm4546 = vcmp.gt.f32.partialorder %v4314, %v4418
      %vm4547 = vcmp.gt.f32.partialorder %v4315, %v4419
      %vm4548 = vcmp.gt.f32.partialorder %v4268, %v4420
      %vm4549 = vcmp.gt.f32.partialorder %v4316, %v4421
      %vm4550 = vcmp.gt.f32.partialorder %v4317, %v4422
      %vm4551 = vcmp.gt.f32.partialorder %v4318, %v4423
      %vm4552 = vcmp.gt.f32.partialorder %v4269, %v4424
      %vm4553 = vcmp.gt.f32.partialorder %v4319, %v4425
      %vm4554 = vcmp.gt.f32.partialorder %v4320, %v4426
      %vm4555 = vcmp.gt.f32.partialorder %v4321, %v4427
      %vm4556 = vcmp.gt.f32.partialorder %v4270, %v4428
      %vm4557 = vcmp.gt.f32.partialorder %v4322, %v4429
      %vm4558 = vcmp.gt.f32.partialorder %v4323, %v4430
      %vm4559 = vcmp.gt.f32.partialorder %v4324, %v4431
      %vm4560 = vcmp.gt.f32.partialorder %v4271, %v4432
      %vm4561 = vcmp.gt.f32.partialorder %v4325, %v4433
      %vm4562 = vcmp.gt.f32.partialorder %v4326, %v4434
      %vm4563 = vcmp.gt.f32.partialorder %v4327, %v4435
      %vm4564 = vcmp.gt.f32.partialorder %v4272, %v4436
      %vm4565 = vcmp.gt.f32.partialorder %v4328, %v4437
      %vm4566 = vcmp.gt.f32.partialorder %v4329, %v4438
      %vm4567 = vcmp.gt.f32.partialorder %v4330, %v4439
      %vm4568 = vcmp.gt.f32.partialorder %v4273, %v4440
      %vm4569 = vcmp.gt.f32.partialorder %v4331, %v4441
      %vm4570 = vcmp.gt.f32.partialorder %v4332, %v4442
      %vm4571 = vcmp.gt.f32.partialorder %v4333, %v4443
      %vm4572 = vcmp.gt.f32.partialorder %v4274, %v4444
      %vm4573 = vcmp.gt.f32.partialorder %v4334, %v4445
      %vm4574 = vcmp.gt.f32.partialorder %v4335, %v4446
      %vm4575 = vcmp.gt.f32.partialorder %v4336, %v4447
      %vm4576 = vcmp.gt.f32.partialorder %v4275, %v4448
      %vm4577 = vcmp.gt.f32.partialorder %v4337, %v4449
      %vm4578 = vcmp.gt.f32.partialorder %v4338, %v4450
      %vm4579 = vcmp.gt.f32.partialorder %v4339, %v4451
      %v4580 = vsel %vm4516, %v4260, %v4388
      %v4581 = vsel %vm4517, %v4292, %v4389
      %v4582 = vsel %vm4518, %v4293, %v4390
      %v4583 = vsel %vm4519, %v4294, %v4391
      %v4584 = vsel %vm4520, %v4261, %v4392
      %v4585 = vsel %vm4521, %v4295, %v4393
      %v4586 = vsel %vm4522, %v4296, %v4394
      %v4587 = vsel %vm4523, %v4297, %v4395
      %v4588 = vsel %vm4524, %v4262, %v4396
      %v4589 = vsel %vm4525, %v4298, %v4397
      %v4590 = vsel %vm4526, %v4299, %v4398
      %v4591 = vsel %vm4527, %v4300, %v4399
      %v4592 = vsel %vm4528, %v4263, %v4400
      %v4593 = vsel %vm4529, %v4301, %v4401
      %v4594 = vsel %vm4530, %v4302, %v4402
      %v4595 = vsel %vm4531, %v4303, %v4403
      %v4596 = vsel %vm4532, %v4264, %v4404
      %v4597 = vsel %vm4533, %v4304, %v4405
      %v4598 = vsel %vm4534, %v4305, %v4406
      %v4599 = vsel %vm4535, %v4306, %v4407
      %v4600 = vsel %vm4536, %v4265, %v4408
      %v4601 = vsel %vm4537, %v4307, %v4409
      %v4602 = vsel %vm4538, %v4308, %v4410
      %v4603 = vsel %vm4539, %v4309, %v4411
      %v4604 = vsel %vm4540, %v4266, %v4412
      %v4605 = vsel %vm4541, %v4310, %v4413
      %v4606 = vsel %vm4542, %v4311, %v4414
      %v4607 = vsel %vm4543, %v4312, %v4415
      %v4608 = vsel %vm4544, %v4267, %v4416
      %v4609 = vsel %vm4545, %v4313, %v4417
      %v4610 = vsel %vm4546, %v4314, %v4418
      %v4611 = vsel %vm4547, %v4315, %v4419
      %v4612 = vsel %vm4548, %v4268, %v4420
      %v4613 = vsel %vm4549, %v4316, %v4421
      %v4614 = vsel %vm4550, %v4317, %v4422
      %v4615 = vsel %vm4551, %v4318, %v4423
      %v4616 = vsel %vm4552, %v4269, %v4424
      %v4617 = vsel %vm4553, %v4319, %v4425
      %v4618 = vsel %vm4554, %v4320, %v4426
      %v4619 = vsel %vm4555, %v4321, %v4427
      %v4620 = vsel %vm4556, %v4270, %v4428
      %v4621 = vsel %vm4557, %v4322, %v4429
      %v4622 = vsel %vm4558, %v4323, %v4430
      %v4623 = vsel %vm4559, %v4324, %v4431
      %v4624 = vsel %vm4560, %v4271, %v4432
      %v4625 = vsel %vm4561, %v4325, %v4433
      %v4626 = vsel %vm4562, %v4326, %v4434
      %v4627 = vsel %vm4563, %v4327, %v4435
      %v4628 = vsel %vm4564, %v4272, %v4436
      %v4629 = vsel %vm4565, %v4328, %v4437
      %v4630 = vsel %vm4566, %v4329, %v4438
      %v4631 = vsel %vm4567, %v4330, %v4439
      %v4632 = vsel %vm4568, %v4273, %v4440
      %v4633 = vsel %vm4569, %v4331, %v4441
      %v4634 = vsel %vm4570, %v4332, %v4442
      %v4635 = vsel %vm4571, %v4333, %v4443
      %v4636 = vsel %vm4572, %v4274, %v4444
      %v4637 = vsel %vm4573, %v4334, %v4445
      %v4638 = vsel %vm4574, %v4335, %v4446
      %v4639 = vsel %vm4575, %v4336, %v4447
      %v4640 = vsel %vm4576, %v4275, %v4448
      %v4641 = vsel %vm4577, %v4337, %v4449
      %v4642 = vsel %vm4578, %v4338, %v4450
      %v4643 = vsel %vm4579, %v4339, %v4451
      %v4644 = vsel %vm4516, 1, 0
      %v4645 = vsel %vm4517, 1, 0
      %v4646 = vsel %vm4518, 1, 0
      %v4647 = vsel %vm4519, 1, 0
      %v4648 = vsel %vm4520, 1, 0
      %v4649 = vsel %vm4521, 1, 0
      %v4650 = vsel %vm4522, 1, 0
      %v4651 = vsel %vm4523, 1, 0
      %v4652 = vsel %vm4524, 1, 0
      %v4653 = vsel %vm4525, 1, 0
      %v4654 = vsel %vm4526, 1, 0
      %v4655 = vsel %vm4527, 1, 0
      %v4656 = vsel %vm4528, 1, 0
      %v4657 = vsel %vm4529, 1, 0
      %v4658 = vsel %vm4530, 1, 0
      %v4659 = vsel %vm4531, 1, 0
      %v4660 = vsel %vm4532, 1, 0
      %v4661 = vsel %vm4533, 1, 0
      %v4662 = vsel %vm4534, 1, 0
      %v4663 = vsel %vm4535, 1, 0
      %v4664 = vsel %vm4536, 1, 0
      %v4665 = vsel %vm4537, 1, 0
      %v4666 = vsel %vm4538, 1, 0
      %v4667 = vsel %vm4539, 1, 0
      %v4668 = vsel %vm4540, 1, 0
      %v4669 = vsel %vm4541, 1, 0
      %v4670 = vsel %vm4542, 1, 0
      %v4671 = vsel %vm4543, 1, 0
      %v4672 = vsel %vm4544, 1, 0
      %v4673 = vsel %vm4545, 1, 0
      %v4674 = vsel %vm4546, 1, 0
      %v4675 = vsel %vm4547, 1, 0
      %v4676 = vsel %vm4548, 1, 0
      %v4677 = vsel %vm4549, 1, 0
      %v4678 = vsel %vm4550, 1, 0
      %v4679 = vsel %vm4551, 1, 0
      %v4680 = vsel %vm4552, 1, 0
      %v4681 = vsel %vm4553, 1, 0
      %v4682 = vsel %vm4554, 1, 0
      %v4683 = vsel %vm4555, 1, 0
      %v4684 = vsel %vm4556, 1, 0
      %v4685 = vsel %vm4557, 1, 0
      %v4686 = vsel %vm4558, 1, 0
      %v4687 = vsel %vm4559, 1, 0
      %v4688 = vsel %vm4560, 1, 0
      %v4689 = vsel %vm4561, 1, 0
      %v4690 = vsel %vm4562, 1, 0
      %v4691 = vsel %vm4563, 1, 0
      %v4692 = vsel %vm4564, 1, 0
      %v4693 = vsel %vm4565, 1, 0
      %v4694 = vsel %vm4566, 1, 0
      %v4695 = vsel %vm4567, 1, 0
      %v4696 = vsel %vm4568, 1, 0
      %v4697 = vsel %vm4569, 1, 0
      %v4698 = vsel %vm4570, 1, 0
      %v4699 = vsel %vm4571, 1, 0
      %v4700 = vsel %vm4572, 1, 0
      %v4701 = vsel %vm4573, 1, 0
      %v4702 = vsel %vm4574, 1, 0
      %v4703 = vsel %vm4575, 1, 0
      %v4704 = vsel %vm4576, 1, 0
      %v4705 = vsel %vm4577, 1, 0
      %v4706 = vsel %vm4578, 1, 0
      %v4707 = vsel %vm4579, 1, 0
      %vm4708 = vcmp.gt.f32.partialorder %v4588, %v4580
      %vm4709 = vcmp.gt.f32.partialorder %v4589, %v4581
      %vm4710 = vcmp.gt.f32.partialorder %v4590, %v4582
      %vm4711 = vcmp.gt.f32.partialorder %v4591, %v4583
      %vm4712 = vcmp.gt.f32.partialorder %v4592, %v4584
      %vm4713 = vcmp.gt.f32.partialorder %v4593, %v4585
      %vm4714 = vcmp.gt.f32.partialorder %v4594, %v4586
      %vm4715 = vcmp.gt.f32.partialorder %v4595, %v4587
      %vm4716 = vcmp.gt.f32.partialorder %v4604, %v4596
      %vm4717 = vcmp.gt.f32.partialorder %v4605, %v4597
      %vm4718 = vcmp.gt.f32.partialorder %v4606, %v4598
      %vm4719 = vcmp.gt.f32.partialorder %v4607, %v4599
      %vm4720 = vcmp.gt.f32.partialorder %v4608, %v4600
      %vm4721 = vcmp.gt.f32.partialorder %v4609, %v4601
      %vm4722 = vcmp.gt.f32.partialorder %v4610, %v4602
      %vm4723 = vcmp.gt.f32.partialorder %v4611, %v4603
      %vm4724 = vcmp.gt.f32.partialorder %v4620, %v4612
      %vm4725 = vcmp.gt.f32.partialorder %v4621, %v4613
      %vm4726 = vcmp.gt.f32.partialorder %v4622, %v4614
      %vm4727 = vcmp.gt.f32.partialorder %v4623, %v4615
      %vm4728 = vcmp.gt.f32.partialorder %v4624, %v4616
      %vm4729 = vcmp.gt.f32.partialorder %v4625, %v4617
      %vm4730 = vcmp.gt.f32.partialorder %v4626, %v4618
      %vm4731 = vcmp.gt.f32.partialorder %v4627, %v4619
      %vm4732 = vcmp.gt.f32.partialorder %v4636, %v4628
      %vm4733 = vcmp.gt.f32.partialorder %v4637, %v4629
      %vm4734 = vcmp.gt.f32.partialorder %v4638, %v4630
      %vm4735 = vcmp.gt.f32.partialorder %v4639, %v4631
      %vm4736 = vcmp.gt.f32.partialorder %v4640, %v4632
      %vm4737 = vcmp.gt.f32.partialorder %v4641, %v4633
      %vm4738 = vcmp.gt.f32.partialorder %v4642, %v4634
      %vm4739 = vcmp.gt.f32.partialorder %v4643, %v4635
      %v4740 = vsel %vm4708, %v4588, %v4580
      %v4741 = vsel %vm4709, %v4589, %v4581
      %v4742 = vsel %vm4710, %v4590, %v4582
      %v4743 = vsel %vm4711, %v4591, %v4583
      %v4744 = vsel %vm4712, %v4592, %v4584
      %v4745 = vsel %vm4713, %v4593, %v4585
      %v4746 = vsel %vm4714, %v4594, %v4586
      %v4747 = vsel %vm4715, %v4595, %v4587
      %v4748 = vsel %vm4716, %v4604, %v4596
      %v4749 = vsel %vm4717, %v4605, %v4597
      %v4750 = vsel %vm4718, %v4606, %v4598
      %v4751 = vsel %vm4719, %v4607, %v4599
      %v4752 = vsel %vm4720, %v4608, %v4600
      %v4753 = vsel %vm4721, %v4609, %v4601
      %v4754 = vsel %vm4722, %v4610, %v4602
      %v4755 = vsel %vm4723, %v4611, %v4603
      %v4756 = vsel %vm4724, %v4620, %v4612
      %v4757 = vsel %vm4725, %v4621, %v4613
      %v4758 = vsel %vm4726, %v4622, %v4614
      %v4759 = vsel %vm4727, %v4623, %v4615
      %v4760 = vsel %vm4728, %v4624, %v4616
      %v4761 = vsel %vm4729, %v4625, %v4617
      %v4762 = vsel %vm4730, %v4626, %v4618
      %v4763 = vsel %vm4731, %v4627, %v4619
      %v4764 = vsel %vm4732, %v4636, %v4628
      %v4765 = vsel %vm4733, %v4637, %v4629
      %v4766 = vsel %vm4734, %v4638, %v4630
      %v4767 = vsel %vm4735, %v4639, %v4631
      %v4768 = vsel %vm4736, %v4640, %v4632
      %v4769 = vsel %vm4737, %v4641, %v4633
      %v4770 = vsel %vm4738, %v4642, %v4634
      %v4771 = vsel %vm4739, %v4643, %v4635
      %v4772 = vsel %vm4708, 1, 0
      %v4773 = vsel %vm4709, 1, 0
      %v4774 = vsel %vm4710, 1, 0
      %v4775 = vsel %vm4711, 1, 0
      %v4776 = vsel %vm4712, 1, 0
      %v4777 = vsel %vm4713, 1, 0
      %v4778 = vsel %vm4714, 1, 0
      %v4779 = vsel %vm4715, 1, 0
      %v4780 = vsel %vm4716, 1, 0
      %v4781 = vsel %vm4717, 1, 0
      %v4782 = vsel %vm4718, 1, 0
      %v4783 = vsel %vm4719, 1, 0
      %v4784 = vsel %vm4720, 1, 0
      %v4785 = vsel %vm4721, 1, 0
      %v4786 = vsel %vm4722, 1, 0
      %v4787 = vsel %vm4723, 1, 0
      %v4788 = vsel %vm4724, 1, 0
      %v4789 = vsel %vm4725, 1, 0
      %v4790 = vsel %vm4726, 1, 0
      %v4791 = vsel %vm4727, 1, 0
      %v4792 = vsel %vm4728, 1, 0
      %v4793 = vsel %vm4729, 1, 0
      %v4794 = vsel %vm4730, 1, 0
      %v4795 = vsel %vm4731, 1, 0
      %v4796 = vsel %vm4732, 1, 0
      %v4797 = vsel %vm4733, 1, 0
      %v4798 = vsel %vm4734, 1, 0
      %v4799 = vsel %vm4735, 1, 0
      %v4800 = vsel %vm4736, 1, 0
      %v4801 = vsel %vm4737, 1, 0
      %v4802 = vsel %vm4738, 1, 0
      %v4803 = vsel %vm4739, 1, 0
      %v4804 = vsel %vm4708, %v4652, %v4644
      %v4805 = vsel %vm4709, %v4653, %v4645
      %v4806 = vsel %vm4710, %v4654, %v4646
      %v4807 = vsel %vm4711, %v4655, %v4647
      %v4808 = vsel %vm4712, %v4656, %v4648
      %v4809 = vsel %vm4713, %v4657, %v4649
      %v4810 = vsel %vm4714, %v4658, %v4650
      %v4811 = vsel %vm4715, %v4659, %v4651
      %v4812 = vsel %vm4716, %v4668, %v4660
      %v4813 = vsel %vm4717, %v4669, %v4661
      %v4814 = vsel %vm4718, %v4670, %v4662
      %v4815 = vsel %vm4719, %v4671, %v4663
      %v4816 = vsel %vm4720, %v4672, %v4664
      %v4817 = vsel %vm4721, %v4673, %v4665
      %v4818 = vsel %vm4722, %v4674, %v4666
      %v4819 = vsel %vm4723, %v4675, %v4667
      %v4820 = vsel %vm4724, %v4684, %v4676
      %v4821 = vsel %vm4725, %v4685, %v4677
      %v4822 = vsel %vm4726, %v4686, %v4678
      %v4823 = vsel %vm4727, %v4687, %v4679
      %v4824 = vsel %vm4728, %v4688, %v4680
      %v4825 = vsel %vm4729, %v4689, %v4681
      %v4826 = vsel %vm4730, %v4690, %v4682
      %v4827 = vsel %vm4731, %v4691, %v4683
      %v4828 = vsel %vm4732, %v4700, %v4692
      %v4829 = vsel %vm4733, %v4701, %v4693
      %v4830 = vsel %vm4734, %v4702, %v4694
      %v4831 = vsel %vm4735, %v4703, %v4695
      %v4832 = vsel %vm4736, %v4704, %v4696
      %v4833 = vsel %vm4737, %v4705, %v4697
      %v4834 = vsel %vm4738, %v4706, %v4698
      %v4835 = vsel %vm4739, %v4707, %v4699
      %v4836 = vlaneseq
      %v4837 = vshrl.u32 %v4836, 7
      %v4838 = vstv %s340
      %v4839 = vadd.s32 %v4838, 2
      %v4840 = vadd.s32 %v4838, 4
      %v4841 = vadd.s32 %v4838, 6
      %v4842 = vadd.s32 %v4838, %v4772
      %v4843 = vadd.s32 %v4838, %v4773
      %v4844 = vadd.s32 %v4838, %v4774
      %v4845 = vadd.s32 %v4838, %v4775
      %v4846 = vadd.s32 %v4838, %v4776
      %v4847 = vadd.s32 %v4838, %v4777
      %v4848 = vadd.s32 %v4838, %v4778
      %v4849 = vadd.s32 %v4838, %v4779
      %v4850 = vadd.s32 %v4839, %v4780
      %v4851 = vadd.s32 %v4839, %v4781
      %v4852 = vadd.s32 %v4839, %v4782
      %v4853 = vadd.s32 %v4839, %v4783
      %v4854 = vadd.s32 %v4839, %v4784
      %v4855 = vadd.s32 %v4839, %v4785
      %v4856 = vadd.s32 %v4839, %v4786
      %v4857 = vadd.s32 %v4839, %v4787
      %v4858 = vadd.s32 %v4840, %v4788
      %v4859 = vadd.s32 %v4840, %v4789
      %v4860 = vadd.s32 %v4840, %v4790
      %v4861 = vadd.s32 %v4840, %v4791
      %v4862 = vadd.s32 %v4840, %v4792
      %v4863 = vadd.s32 %v4840, %v4793
      %v4864 = vadd.s32 %v4840, %v4794
      %v4865 = vadd.s32 %v4840, %v4795
      %v4866 = vadd.s32 %v4841, %v4796
      %v4867 = vadd.s32 %v4841, %v4797
      %v4868 = vadd.s32 %v4841, %v4798
      %v4869 = vadd.s32 %v4841, %v4799
      %v4870 = vadd.s32 %v4841, %v4800
      %v4871 = vadd.s32 %v4841, %v4801
      %v4872 = vadd.s32 %v4841, %v4802
      %v4873 = vadd.s32 %v4841, %v4803
      %v4874 = vmul.u32 %v4842, 16
      %v4875 = vmul.u32 %v4843, 16
      %v4876 = vmul.u32 %v4844, 16
      %v4877 = vmul.u32 %v4845, 16
      %v4878 = vmul.u32 %v4846, 16
      %v4879 = vmul.u32 %v4847, 16
      %v4880 = vmul.u32 %v4848, 16
      %v4881 = vmul.u32 %v4849, 16
      %v4882 = vmul.u32 %v4850, 16
      %v4883 = vmul.u32 %v4851, 16
      %v4884 = vmul.u32 %v4852, 16
      %v4885 = vmul.u32 %v4853, 16
      %v4886 = vmul.u32 %v4854, 16
      %v4887 = vmul.u32 %v4855, 16
      %v4888 = vmul.u32 %v4856, 16
      %v4889 = vmul.u32 %v4857, 16
      %v4890 = vmul.u32 %v4858, 16
      %v4891 = vmul.u32 %v4859, 16
      %v4892 = vmul.u32 %v4860, 16
      %v4893 = vmul.u32 %v4861, 16
      %v4894 = vmul.u32 %v4862, 16
      %v4895 = vmul.u32 %v4863, 16
      %v4896 = vmul.u32 %v4864, 16
      %v4897 = vmul.u32 %v4865, 16
      %v4898 = vmul.u32 %v4866, 16
      %v4899 = vmul.u32 %v4867, 16
      %v4900 = vmul.u32 %v4868, 16
      %v4901 = vmul.u32 %v4869, 16
      %v4902 = vmul.u32 %v4870, 16
      %v4903 = vmul.u32 %v4871, 16
      %v4904 = vmul.u32 %v4872, 16
      %v4905 = vmul.u32 %v4873, 16
      %v4906 = vmul.u32 %v4837, 2
      %v4907 = vperm.slane %v4804, 1
      %v4908 = vperm.slane %v4805, 1
      %v4909 = vperm.slane %v4806, 1
      %v4910 = vperm.slane %v4807, 1
      %v4911 = vperm.slane %v4808, 1
      %v4912 = vperm.slane %v4809, 1
      %v4913 = vperm.slane %v4810, 1
      %v4914 = vperm.slane %v4811, 1
      %v4915 = vperm.slane %v4812, 1
      %v4916 = vperm.slane %v4813, 1
      %v4917 = vperm.slane %v4814, 1
      %v4918 = vperm.slane %v4815, 1
      %v4919 = vperm.slane %v4816, 1
      %v4920 = vperm.slane %v4817, 1
      %v4921 = vperm.slane %v4818, 1
      %v4922 = vperm.slane %v4819, 1
      %v4923 = vperm.slane %v4820, 1
      %v4924 = vperm.slane %v4821, 1
      %v4925 = vperm.slane %v4822, 1
      %v4926 = vperm.slane %v4823, 1
      %v4927 = vperm.slane %v4824, 1
      %v4928 = vperm.slane %v4825, 1
      %v4929 = vperm.slane %v4826, 1
      %v4930 = vperm.slane %v4827, 1
      %v4931 = vperm.slane %v4828, 1
      %v4932 = vperm.slane %v4829, 1
      %v4933 = vperm.slane %v4830, 1
      %v4934 = vperm.slane %v4831, 1
      %v4935 = vperm.slane %v4832, 1
      %v4936 = vperm.slane %v4833, 1
      %v4937 = vperm.slane %v4834, 1
      %v4938 = vperm.slane %v4835, 1
      %vm4939 = vcmask 1041409
      %v4940 = vsel %vm4939, %v4908, %v4907
      %vm4941 = vcmask 1042434
      %v4942 = vsel %vm4941, %v4909, %v4940
      %vm4943 = vcmask 1043459
      %v4944 = vsel %vm4943, %v4910, %v4942
      %vm4945 = vcmask 1044484
      %v4946 = vsel %vm4945, %v4911, %v4944
      %vm4947 = vcmask 1045509
      %v4948 = vsel %vm4947, %v4912, %v4946
      %vm4949 = vcmask 1046534
      %v4950 = vsel %vm4949, %v4913, %v4948
      %vm4951 = vcmask 1047559
      %v4952 = vsel %vm4951, %v4914, %v4950
      %v4953 = vsel %vm4939, %v4916, %v4915
      %v4954 = vsel %vm4941, %v4917, %v4953
      %v4955 = vsel %vm4943, %v4918, %v4954
      %v4956 = vsel %vm4945, %v4919, %v4955
      %v4957 = vsel %vm4947, %v4920, %v4956
      %v4958 = vsel %vm4949, %v4921, %v4957
      %v4959 = vsel %vm4951, %v4922, %v4958
      %v4960 = vsel %vm4939, %v4924, %v4923
      %v4961 = vsel %vm4941, %v4925, %v4960
      %v4962 = vsel %vm4943, %v4926, %v4961
      %v4963 = vsel %vm4945, %v4927, %v4962
      %v4964 = vsel %vm4947, %v4928, %v4963
      %v4965 = vsel %vm4949, %v4929, %v4964
      %v4966 = vsel %vm4951, %v4930, %v4965
      %v4967 = vsel %vm4939, %v4932, %v4931
      %v4968 = vsel %vm4941, %v4933, %v4967
      %v4969 = vsel %vm4943, %v4934, %v4968
      %v4970 = vsel %vm4945, %v4935, %v4969
      %v4971 = vsel %vm4947, %v4936, %v4970
      %v4972 = vsel %vm4949, %v4937, %v4971
      %v4973 = vsel %vm4951, %v4938, %v4972
      %v4974 = vadd.s32 %v4906, %v4952
      %v4975 = vadd.s32 %v4906, %v4959
      %v4976 = vadd.s32 %v4906, %v4966
      %v4977 = vadd.s32 %v4906, %v4973
      %v4978 = vrot.slane %v4974, 2
      %v4979 = vrot.slane %v4974, 4
      %v4980 = vrot.slane %v4974, 6
      %v4981 = vrot.slane %v4975, 2
      %v4982 = vrot.slane %v4975, 4
      %v4983 = vrot.slane %v4975, 6
      %v4984 = vrot.slane %v4976, 2
      %v4985 = vrot.slane %v4976, 4
      %v4986 = vrot.slane %v4976, 6
      %v4987 = vrot.slane %v4977, 2
      %v4988 = vrot.slane %v4977, 4
      %v4989 = vrot.slane %v4977, 6
      %v4990 = vrot.slane %v4974, 7
      %v4991 = vrot.slane %v4978, 7
      %v4992 = vrot.slane %v4979, 7
      %v4993 = vrot.slane %v4980, 7
      %v4994 = vrot.slane %v4975, 7
      %v4995 = vrot.slane %v4981, 7
      %v4996 = vrot.slane %v4982, 7
      %v4997 = vrot.slane %v4983, 7
      %v4998 = vrot.slane %v4976, 7
      %v4999 = vrot.slane %v4984, 7
      %v5000 = vrot.slane %v4985, 7
      %v5001 = vrot.slane %v4986, 7
      %v5002 = vrot.slane %v4977, 7
      %v5003 = vrot.slane %v4987, 7
      %v5004 = vrot.slane %v4988, 7
      %v5005 = vrot.slane %v4989, 7
      %v5006 = vadd.s32 %v4874, %v4990
      %v5007 = vadd.s32 %v4875, %v4974
      %v5008 = vadd.s32 %v4876, %v4991
      %v5009 = vadd.s32 %v4877, %v4978
      %v5010 = vadd.s32 %v4878, %v4992
      %v5011 = vadd.s32 %v4879, %v4979
      %v5012 = vadd.s32 %v4880, %v4993
      %v5013 = vadd.s32 %v4881, %v4980
      %v5014 = vadd.s32 %v4882, %v4994
      %v5015 = vadd.s32 %v4883, %v4975
      %v5016 = vadd.s32 %v4884, %v4995
      %v5017 = vadd.s32 %v4885, %v4981
      %v5018 = vadd.s32 %v4886, %v4996
      %v5019 = vadd.s32 %v4887, %v4982
      %v5020 = vadd.s32 %v4888, %v4997
      %v5021 = vadd.s32 %v4889, %v4983
      %v5022 = vadd.s32 %v4890, %v4998
      %v5023 = vadd.s32 %v4891, %v4976
      %v5024 = vadd.s32 %v4892, %v4999
      %v5025 = vadd.s32 %v4893, %v4984
      %v5026 = vadd.s32 %v4894, %v5000
      %v5027 = vadd.s32 %v4895, %v4985
      %v5028 = vadd.s32 %v4896, %v5001
      %v5029 = vadd.s32 %v4897, %v4986
      %v5030 = vadd.s32 %v4898, %v5002
      %v5031 = vadd.s32 %v4899, %v4977
      %v5032 = vadd.s32 %v4900, %v5003
      %v5033 = vadd.s32 %v4901, %v4987
      %v5034 = vadd.s32 %v4902, %v5004
      %v5035 = vadd.s32 %v4903, %v4988
      %v5036 = vadd.s32 %v4904, %v5005
      %v5037 = vadd.s32 %v4905, %v4989
      %v5070 = vperm.slane %v4740, 1
      %v5071 = vperm.slane %v4741, 1
      %v5072 = vperm.slane %v4742, 1
      %v5073 = vperm.slane %v4743, 1
      %v5074 = vperm.slane %v4744, 1
      %v5075 = vperm.slane %v4745, 1
      %v5076 = vperm.slane %v4746, 1
      %v5077 = vperm.slane %v4747, 1
      %v5078 = vperm.slane %v4748, 1
      %v5079 = vperm.slane %v4749, 1
      %v5080 = vperm.slane %v4750, 1
      %v5081 = vperm.slane %v4751, 1
      %v5082 = vperm.slane %v4752, 1
      %v5083 = vperm.slane %v4753, 1
      %v5084 = vperm.slane %v4754, 1
      %v5085 = vperm.slane %v4755, 1
      %v5086 = vperm.slane %v4756, 1
      %v5087 = vperm.slane %v4757, 1
      %v5088 = vperm.slane %v4758, 1
      %v5089 = vperm.slane %v4759, 1
      %v5090 = vperm.slane %v4760, 1
      %v5091 = vperm.slane %v4761, 1
      %v5092 = vperm.slane %v4762, 1
      %v5093 = vperm.slane %v4763, 1
      %v5094 = vperm.slane %v4764, 1
      %v5095 = vperm.slane %v4765, 1
      %v5096 = vperm.slane %v4766, 1
      %v5097 = vperm.slane %v4767, 1
      %v5098 = vperm.slane %v4768, 1
      %v5099 = vperm.slane %v4769, 1
      %v5100 = vperm.slane %v4770, 1
      %v5101 = vperm.slane %v4771, 1
      %v5102 = vsel %vm4941, %v5071, %v5070
      %v5103 = vsel %vm4943, %v5072, %v5102
      %v5104 = vsel %vm4945, %v5073, %v5103
      %v5105 = vsel %vm4947, %v5074, %v5104
      %v5106 = vsel %vm4949, %v5075, %v5105
      %v5107 = vsel %vm4951, %v5076, %v5106
      %v5108 = vsel %vm4941, %v5079, %v5078
      %v5109 = vsel %vm4943, %v5080, %v5108
      %v5110 = vsel %vm4945, %v5081, %v5109
      %v5111 = vsel %vm4947, %v5082, %v5110
      %v5112 = vsel %vm4949, %v5083, %v5111
      %v5113 = vsel %vm4951, %v5084, %v5112
      %v5114 = vsel %vm4941, %v5087, %v5086
      %v5115 = vsel %vm4943, %v5088, %v5114
      %v5116 = vsel %vm4945, %v5089, %v5115
      %v5117 = vsel %vm4947, %v5090, %v5116
      %v5118 = vsel %vm4949, %v5091, %v5117
      %v5119 = vsel %vm4951, %v5092, %v5118
      %v5120 = vsel %vm4941, %v5095, %v5094
      %v5121 = vsel %vm4943, %v5096, %v5120
      %v5122 = vsel %vm4945, %v5097, %v5121
      %v5123 = vsel %vm4947, %v5098, %v5122
      %v5124 = vsel %vm4949, %v5099, %v5123
      %v5125 = vsel %vm4951, %v5100, %v5124
      %5134 = vst [vmem:[%s328 - $0x1] sm:$0xfe] %v5107
      %5135 = vst [vmem:[%s328 + $0x7] sm:$0x1] %v5077
      %5136 = vst [vmem:[%s328 + $0x7] sm:$0xfe] %v5113
      %5137 = vst [vmem:[%s328 + $0xf] sm:$0x1] %v5085
      %5138 = vst [vmem:[%s328 + $0xf] sm:$0xfe] %v5119
      %5139 = vst [vmem:[%s328 + $0x17] sm:$0x1] %v5093
      %5140 = vst [vmem:[%s328 + $0x17] sm:$0xfe] %v5125
      %5141 = vst [vmem:[%s328 + $0x1f] sm:$0x1] %v5101
      %v5142 = vperm.slane %v5006, 1
      %v5143 = vperm.slane %v5007, 1
      %v5144 = vperm.slane %v5008, 1
      %v5145 = vperm.slane %v5009, 1
      %v5146 = vperm.slane %v5010, 1
      %v5147 = vperm.slane %v5011, 1
      %v5148 = vperm.slane %v5012, 1
      %v5149 = vperm.slane %v5013, 1
      %v5150 = vperm.slane %v5014, 1
      %v5151 = vperm.slane %v5015, 1
      %v5152 = vperm.slane %v5016, 1
      %v5153 = vperm.slane %v5017, 1
      %v5154 = vperm.slane %v5018, 1
      %v5155 = vperm.slane %v5019, 1
      %v5156 = vperm.slane %v5020, 1
      %v5157 = vperm.slane %v5021, 1
      %v5158 = vperm.slane %v5022, 1
      %v5159 = vperm.slane %v5023, 1
      %v5160 = vperm.slane %v5024, 1
      %v5161 = vperm.slane %v5025, 1
      %v5162 = vperm.slane %v5026, 1
      %v5163 = vperm.slane %v5027, 1
      %v5164 = vperm.slane %v5028, 1
      %v5165 = vperm.slane %v5029, 1
      %v5166 = vperm.slane %v5030, 1
      %v5167 = vperm.slane %v5031, 1
      %v5168 = vperm.slane %v5032, 1
      %v5169 = vperm.slane %v5033, 1
      %v5170 = vperm.slane %v5034, 1
      %v5171 = vperm.slane %v5035, 1
      %v5172 = vperm.slane %v5036, 1
      %v5173 = vperm.slane %v5037, 1
      %v5174 = vsel %vm4941, %v5143, %v5142
      %v5175 = vsel %vm4943, %v5144, %v5174
      %v5176 = vsel %vm4945, %v5145, %v5175
      %v5177 = vsel %vm4947, %v5146, %v5176
      %v5178 = vsel %vm4949, %v5147, %v5177
      %v5179 = vsel %vm4951, %v5148, %v5178
      %v5180 = vsel %vm4941, %v5151, %v5150
      %v5181 = vsel %vm4943, %v5152, %v5180
      %v5182 = vsel %vm4945, %v5153, %v5181
      %v5183 = vsel %vm4947, %v5154, %v5182
      %v5184 = vsel %vm4949, %v5155, %v5183
      %v5185 = vsel %vm4951, %v5156, %v5184
      %v5186 = vsel %vm4941, %v5159, %v5158
      %v5187 = vsel %vm4943, %v5160, %v5186
      %v5188 = vsel %vm4945, %v5161, %v5187
      %v5189 = vsel %vm4947, %v5162, %v5188
      %v5190 = vsel %vm4949, %v5163, %v5189
      %v5191 = vsel %vm4951, %v5164, %v5190
      %v5192 = vsel %vm4941, %v5167, %v5166
      %v5193 = vsel %vm4943, %v5168, %v5192
      %v5194 = vsel %vm4945, %v5169, %v5193
      %v5195 = vsel %vm4947, %v5170, %v5194
      %v5196 = vsel %vm4949, %v5171, %v5195
      %v5197 = vsel %vm4951, %v5172, %v5196
      %5198 = vst [vmem:[%s338 - $0x1] sm:$0xfe] %v5179
      %5199 = vst [vmem:[%s338 + $0x7] sm:$0x1] %v5149
      %5200 = vst [vmem:[%s338 + $0x7] sm:$0xfe] %v5185
      %5201 = vst [vmem:[%s338 + $0xf] sm:$0x1] %v5157
      %5202 = vst [vmem:[%s338 + $0xf] sm:$0xfe] %v5191
      %5203 = vst [vmem:[%s338 + $0x17] sm:$0x1] %v5165
      %5204 = vst [vmem:[%s338 + $0x17] sm:$0xfe] %v5197
      %5205 = vst [vmem:[%s338 + $0x1f] sm:$0x1] %v5173
      %s5206 = smul.u32 4, %s24
      %p5207 = scmp.lt.s32.totalorder %s23, 1
      %s5208 = scalar_select %p5207, %s23, 1
      %p5209 = scmp.lt.s32.totalorder %s5206, 7
      %s5210 = scalar_select %p5209, %s5206, 7
      %s5211 = smul.addr %s5208, 8
      %s5212 = sadd.s32 %s5210, %s5211
      %s5213 = smul.addr %s5212, 8
      %s5214 = scalar_lea.vmem %s6, %s5213
      %s5215 = smul.u32 4, %s24
      %p5216 = scmp.lt.s32.totalorder %s23, 1
      %s5217 = scalar_select %p5216, %s23, 1
      %p5218 = scmp.lt.s32.totalorder %s5215, 7
      %s5219 = scalar_select %p5218, %s5215, 7
      %s5220 = smul.addr %s5217, 8
      %s5221 = sadd.s32 %s5219, %s5220
      %s5222 = smul.addr %s5221, 8
      %s5223 = scalar_lea.vmem %s7, %s5222
      // Predicated region
      $region45: #{_forward_jit.1} parent=43 // pred_check
        %p5224 = pneg %p184
      $region46: #{_forward_jit.1} parent=43 // pred_check_branch
        %5226 = sbr.rel (%p5224) target = $region48
      $region47: #{_forward_jit.1} parent=43 // pred_region
        %s5227 = smul.u32 4, %s24
      $region48: #{_forward_jit.1} parent=43 // pred_fallthru
        _
      // Predicated region
      $region49: #{_forward_jit.1} parent=43 // pred_check
        %p5228 = pneg %p212
      $region50: #{_forward_jit.1} parent=43 // pred_check_branch
        %5230 = sbr.rel (%p5228) target = $region52
      $region51: #{_forward_jit.1} parent=43 // pred_region
        %s5231 = smul.u32 4, %s24
      $region52: #{_forward_jit.1} parent=43 // pred_fallthru
        _
    $region44: #{_forward_jit.1} parent=5 // pred_fallthru
      _
    %p5232 = scmp.le.s32.totalorder 2, %s14
    // Predicated region
    $region53: #{_forward_jit.1} parent=5 // pred_check
      %p5233 = pneg %p5232
    $region54: #{_forward_jit.1} parent=5 // pred_check_branch
      %5235 = sbr.rel (%p5233) target = $region56
    $region55: #{_forward_jit.1} parent=5 // pred_region
      %s5236 = ssub.s32 %s14, 2
      // Predicated region
      $region57: #{_forward_jit.1} parent=55 // pred_check
        %p5237 = pneg %p190
      $region58: #{_forward_jit.1} parent=55 // pred_check_branch
        %5239 = sbr.rel (%p5237) target = $region60
      $region59: #{_forward_jit.1} parent=55 // pred_region
        %s5240 = smul.u32 4, %s26
        %p5241 = scmp.lt.s32.totalorder %s25, 1
        %s5242 = scalar_select %p5241, %s25, 1
        %p5243 = scmp.lt.s32.totalorder %s5240, 7
        %s5244 = scalar_select %p5243, %s5240, 7
        %s5245 = smul.addr %s5242, 8
        %s5246 = sadd.s32 %s5244, %s5245
        %s5247 = smul.addr %s5246, 8
        %s5248 = scalar_lea.vmem %s6, %s5247
      $region60: #{_forward_jit.1} parent=55 // pred_fallthru
        _
      // Predicated region
      $region61: #{_forward_jit.1} parent=55 // pred_check
        %p5249 = pneg %p218
      $region62: #{_forward_jit.1} parent=55 // pred_check_branch
        %5251 = sbr.rel (%p5249) target = $region64
      $region63: #{_forward_jit.1} parent=55 // pred_region
        %s5252 = smul.u32 4, %s26
        %p5253 = scmp.lt.s32.totalorder %s25, 1
        %s5254 = scalar_select %p5253, %s25, 1
        %p5255 = scmp.lt.s32.totalorder %s5252, 7
        %s5256 = scalar_select %p5255, %s5252, 7
        %s5257 = smul.addr %s5254, 8
        %s5258 = sadd.s32 %s5256, %s5257
        %s5259 = smul.addr %s5258, 8
        %s5260 = scalar_lea.vmem %s7, %s5259
      $region64: #{_forward_jit.1} parent=55 // pred_fallthru
        _
    $region56: #{_forward_jit.1} parent=5 // pred_fallthru
      _
  $region6: #{_forward_jit.1} parent=0 // loop_footer
    %s18 = sadd.s32 1, %s14
  $region7: #{_forward_jit.1} parent=0 // loop_footer_branch
    %13 = sbr.rel target = $region3
  $region8: #{_forward_jit.1} parent=0 // loop_exit
    _

</llo_original>
